<compile_context>
chip_gen: v7x
topology: tpu7x:2x2x1
jax: 0.10.0
libtpu: 0.0.40
codegen_flags: <defaults>
</compile_context>

<pallas_src>
import functools

import jax
import jax.numpy as jnp
from jax.experimental import pallas as pl
from jax.experimental.pallas import tpu as pltpu


# ----------------------------------------------------------------------------
# Pallas kernel
# ----------------------------------------------------------------------------
def _bidir_layer_steps(gx_f, gx_b, whh_cat, *, S, B, H):
    """Fused fwd+bwd recurrence for one bidirectional LSTM layer.

    gx_f: (S*B, 8H) hoisted input projection; only forward-direction columns
          are nonzero and the full combined bias (both directions) is folded in.
    gx_b: (S*B, 8H) hoisted input projection; only backward-direction columns
          are nonzero (no bias).
    whh_cat: (2H, 8H) block-diagonal recurrent weights.

    Returns the list of fused hidden states, hs[s] = [h_fwd(s) | h_bwd(S-1-s)].
    """
    G = 2 * H  # width of one gate block (fwd half | bwd half)
    h = jnp.zeros((B, 2 * H), jnp.float32)
    c = jnp.zeros((B, 2 * H), jnp.float32)
    hs = []
    for s in range(S):  # unrolled: S is small, recurrence is inherently serial
        # fwd lanes come from time s, bwd lanes from time S-1-s (disjoint
        # column support -> a plain add realizes the selection).
        gates_x = gx_f[s * B:(s + 1) * B] + gx_b[(S - 1 - s) * B:(S - s) * B]
        gates = gates_x + jnp.dot(h, whh_cat, preferred_element_type=jnp.float32)
        i = jax.nn.sigmoid(gates[:, 0 * G:1 * G])
        f = jax.nn.sigmoid(gates[:, 1 * G:2 * G])
        g = jnp.tanh(gates[:, 2 * G:3 * G])
        o = jax.nn.sigmoid(gates[:, 3 * G:4 * G])
        c = f * c + i * g
        h = o * jnp.tanh(c)
        hs.append(h)
    return hs


def _lstm_fused_kernel(x_ref,
                       wih0f_ref, wih0b_ref, b0_ref, whh0_ref,
                       wih1f_ref, wih1b_ref, b1_ref, whh1_ref,
                       w1_ref, bh1_ref, w2_ref, bh2_ref,
                       out_ref, out0_sc, *, S, B, H):
    # ---------------- Layer 0 ----------------
    x = x_ref[...]  # (S*B, F)
    gx0_f = jnp.dot(x, wih0f_ref[...], preferred_element_type=jnp.float32) + b0_ref[...]
    gx0_b = jnp.dot(x, wih0b_ref[...], preferred_element_type=jnp.float32)
    hs0 = _bidir_layer_steps(gx0_f, gx0_b, whh0_ref[...], S=S, B=B, H=H)

    # Re-align the backward outputs in time while writing to VMEM scratch:
    # rows [t*B:(t+1)*B] hold [h0_fwd(t) | h0_bwd(t)] (PyTorch concat order).
    for s in range(S):
        hcat = hs0[s]
        out0_sc[s * B:(s + 1) * B, 0:H] = hcat[:, 0:H]
        out0_sc[(S - 1 - s) * B:(S - s) * B, H:2 * H] = hcat[:, H:2 * H]

    # ---------------- Layer 1 ----------------
    x1 = out0_sc[...]  # (S*B, 2H)
    gx1_f = jnp.dot(x1, wih1f_ref[...], preferred_element_type=jnp.float32) + b1_ref[...]
    gx1_b = jnp.dot(x1, wih1b_ref[...], preferred_element_type=jnp.float32)
    hs1 = _bidir_layer_steps(gx1_f, gx1_b, whh1_ref[...], S=S, B=B, H=H)

    # output[-1] == [h1_fwd(S-1) | h1_bwd(S-1)].  The backward state at time
    # S-1 is produced at fused step 0.
    h_last = jnp.concatenate([hs1[S - 1][:, 0:H], hs1[0][:, H:2 * H]], axis=-1)

    # ---------------- Head: fc2(relu(fc1(h_last))) ----------------
    z = jnp.dot(h_last, w1_ref[...], preferred_element_type=jnp.float32) + bh1_ref[...]
    z = jnp.maximum(z, 0.0)
    y = jnp.dot(z, w2_ref[...], preferred_element_type=jnp.float32) + bh2_ref[...]
    out_ref[...] = y.astype(out_ref.dtype)


# ----------------------------------------------------------------------------
# Wrapper / weight preparation
# ----------------------------------------------------------------------------
def fuse_lstm_layer(p_fwd, p_bwd, H):
    """Build direction-fused weights for one bidirectional layer.

    Column layout (8H total, gate-major):
        [i_f, i_b | f_f, f_b | g_f, g_b | o_f, o_b], each block H wide.
    Returns (wih_fcols, wih_bcols, b_cat, whh_cat).
    """
    wih_f, whh_f, b_f = p_fwd
    wih_b, whh_b, b_b = p_bwd
    in_dim = wih_f.shape[0]
    G = 2 * H
    zero_w = jnp.zeros((in_dim, H), jnp.float32)
    wf_cols, wb_cols, b_cols = [], [], []
    for k in range(4):
        wf_cols += [wih_f[:, k * H:(k + 1) * H], zero_w]
        wb_cols += [zero_w, wih_b[:, k * H:(k + 1) * H]]
        b_cols += [b_f[:, k * H:(k + 1) * H], b_b[:, k * H:(k + 1) * H]]
    wih_fcat = jnp.concatenate(wf_cols, axis=1)   # (in_dim, 8H), fwd cols only
    wih_bcat = jnp.concatenate(wb_cols, axis=1)   # (in_dim, 8H), bwd cols only
    b_cat = jnp.concatenate(b_cols, axis=1)       # (1, 8H) combined bias, both dirs

    whh_cat = jnp.zeros((2 * H, 8 * H), jnp.float32)  # block-diagonal per direction
    for k in range(4):
        whh_cat = whh_cat.at[0:H, k * G:k * G + H].set(whh_f[:, k * H:(k + 1) * H])
        whh_cat = whh_cat.at[H:2 * H, k * G + H:(k + 1) * G].set(whh_b[:, k * H:(k + 1) * H])
    return wih_fcat, wih_bcat, b_cat, whh_cat


def fuse_params(params, H):
    wih0_f, wih0_b, b0, whh0 = fuse_lstm_layer(params["l0_fwd"], params["l0_bwd"], H)
    wih1_f, wih1_b, b1, whh1 = fuse_lstm_layer(params["l1_fwd"], params["l1_bwd"], H)
    return dict(wih0_f=wih0_f, wih0_b=wih0_b, b0=b0, whh0=whh0,
                wih1_f=wih1_f, wih1_b=wih1_b, b1=b1, whh1=whh1,
                w1T=params["w1T"], b1h=params["b1"],
                w2T=params["w2T"], b2h=params["b2"])


def lstm_module_forward_pallas(X, fused, *, H):
    """Full LstmModule forward in a single fused Pallas kernel. X: (S,B,F) -> (B,1)."""
    S, B, F = X.shape
    X2d = X.reshape(S * B, F)
    kernel = functools.partial(_lstm_fused_kernel, S=S, B=B, H=H)
    return pl.pallas_call(
        kernel,
        out_shape=jax.ShapeDtypeStruct((B, 1), jnp.float32),
        scratch_shapes=[pltpu.VMEM((S * B, 2 * H), jnp.float32)],  # layer-0 output
    )(X2d,
      fused["wih0_f"], fused["wih0_b"], fused["b0"], fused["whh0"],
      fused["wih1_f"], fused["wih1_b"], fused["b1"], fused["whh1"],
      fused["w1T"], fused["b1h"], fused["w2T"], fused["b2h"])


# ----------------------------------------------------------------------------
# Pure-JAX reference (PyTorch-equivalent math) for the correctness check
# ----------------------------------------------------------------------------
def lstm_direction_ref(x, w_ihT, w_hhT, b):
    S, B, F = x.shape
    H = w_hhT.shape[0]

    def step(carry, xt):
        h, c = carry
        gates = xt @ w_ihT + h @ w_hhT + b
        i = jax.nn.sigmoid(gates[:, 0 * H:1 * H])
        f = jax.nn.sigmoid(gates[:, 1 * H:2 * H])
        g = jnp.tanh(gates[:, 2 * H:3 * H])
        o = jax.nn.sigmoid(gates[:, 3 * H:4 * H])
        c = f * c + i * g
        h = o * jnp.tanh(c)
        return (h, c), h

    init = (jnp.zeros((B, H), jnp.float32), jnp.zeros((B, H), jnp.float32))
    _, hs = jax.lax.scan(step, init, x)
    return hs


def lstm_module_forward_ref(X, params):
    def bidir(x, pf, pb):
        out_f = lstm_direction_ref(x, *pf)
        out_b = lstm_direction_ref(x[::-1], *pb)[::-1]
        return jnp.concatenate([out_f, out_b], axis=-1)

    out0 = bidir(X, params["l0_fwd"], params["l0_bwd"])
    out1 = bidir(out0, params["l1_fwd"], params["l1_bwd"])
    h_last = out1[-1]  # == output[-1, :] in the PyTorch module
    x = jnp.maximum(h_last @ params["w1T"] + params["b1"], 0.0)
    return x @ params["w2T"] + params["b2"]


# ----------------------------------------------------------------------------
# Parameter init (deterministic, PyTorch-style uniform(-1/sqrt(H), 1/sqrt(H)))
# ----------------------------------------------------------------------------
def init_params(key, n_features, hidden_size):
    H = hidden_size
    k = 1.0 / jnp.sqrt(jnp.float32(H))

    def uni(key, shape):
        return jax.random.uniform(key, shape, jnp.float32, -k, k)

    keys = iter(jax.random.split(key, 32))

    def lstm_dir_params(in_dim):
        w_ihT = uni(next(keys), (in_dim, 4 * H))   # PyTorch gate order [i,f,g,o]
        w_hhT = uni(next(keys), (H, 4 * H))
        b = uni(next(keys), (1, 4 * H)) + uni(next(keys), (1, 4 * H))  # b_ih + b_hh
        return (w_ihT, w_hhT, b)

    return {
        "l0_fwd": lstm_dir_params(n_features),
        "l0_bwd": lstm_dir_params(n_features),
        "l1_fwd": lstm_dir_params(2 * H),
        "l1_bwd": lstm_dir_params(2 * H),
        "w1T": uni(next(keys), (2 * H, H)),
        "b1": uni(next(keys), (1, H)),
        "w2T": uni(next(keys), (H, 1)),
        "b2": uni(next(keys), (1, 1)),
    }


# ----------------------------------------------------------------------------
if __name__ == "__main__":
    seq_len, batch, n_features, hidden = 8, 4, 8, 32

    key = jax.random.PRNGKey(0)
    k_x, k_p = jax.random.split(key)
    X = jax.random.normal(k_x, (seq_len, batch, n_features), jnp.float32)
    params = init_params(k_p, n_features, hidden)
    fused = fuse_params(params, hidden)

    fwd_pallas = jax.jit(functools.partial(lstm_module_forward_pallas, H=hidden))
    fwd_ref = jax.jit(lstm_module_forward_ref)

    out = fwd_pallas(X, fused)
    jax.block_until_ready(out)

    ref = fwd_ref(X, params)
    jax.block_until_ready(ref)

    assert out.shape == (batch, 1), out.shape
    assert jnp.allclose(out, ref, atol=5e-4, rtol=5e-4), (out, ref)

    print("KERNEL_OK")
</pallas_src>

<mosaic_0001>
module attributes {stable_mosaic.version = 11 : i64} {
  func.func @_lstm_fused_kernel(%arg0: memref<32x8xf32, #tpu.memory_space<vmem>>, %arg1: memref<8x256xf32, #tpu.memory_space<vmem>>, %arg2: memref<8x256xf32, #tpu.memory_space<vmem>>, %arg3: memref<1x256xf32, #tpu.memory_space<vmem>>, %arg4: memref<64x256xf32, #tpu.memory_space<vmem>>, %arg5: memref<64x256xf32, #tpu.memory_space<vmem>>, %arg6: memref<64x256xf32, #tpu.memory_space<vmem>>, %arg7: memref<1x256xf32, #tpu.memory_space<vmem>>, %arg8: memref<64x256xf32, #tpu.memory_space<vmem>>, %arg9: memref<64x32xf32, #tpu.memory_space<vmem>>, %arg10: memref<1x32xf32, #tpu.memory_space<vmem>>, %arg11: memref<32x1xf32, #tpu.memory_space<vmem>>, %arg12: memref<1x1xf32, #tpu.memory_space<vmem>>, %arg13: memref<4x1xf32, #tpu.memory_space<vmem>>, %arg14: memref<32x64xf32, #tpu.memory_space<vmem>>) attributes {dimension_semantics = [], scalar_prefetch = 0 : i64, scratch_operands = 1 : i64, tpu.core_type = #tpu.core_type<tc>} {
    %c0 = arith.constant 0 : index
    %c0_0 = arith.constant 0 : index
    %0 = vector.load %arg0[%c0, %c0_0] : memref<32x8xf32, #tpu.memory_space<vmem>>, vector<32x8xf32>
    %c0_1 = arith.constant 0 : index
    %c0_2 = arith.constant 0 : index
    %1 = vector.load %arg1[%c0_1, %c0_2] : memref<8x256xf32, #tpu.memory_space<vmem>>, vector<8x256xf32>
    %cst = arith.constant dense<0.000000e+00> : vector<32x256xf32>
    %2 = tpu.matmul %0, %1, %cst {dimension_numbers = #tpu.dot_dimension_numbers<[1], [0], [0], [1], [0, 0, 1, 1], [], []>} : vector<32x8xf32>, vector<8x256xf32>, vector<32x256xf32> -> vector<32x256xf32>
    %c0_3 = arith.constant 0 : index
    %c0_4 = arith.constant 0 : index
    %3 = vector.load %arg3[%c0_3, %c0_4] : memref<1x256xf32, #tpu.memory_space<vmem>>, vector<1x256xf32>
    %4 = vector.broadcast %3 : vector<1x256xf32> to vector<32x256xf32>
    %5 = arith.addf %2, %4 : vector<32x256xf32>
    %c0_5 = arith.constant 0 : index
    %c0_6 = arith.constant 0 : index
    %6 = vector.load %arg2[%c0_5, %c0_6] : memref<8x256xf32, #tpu.memory_space<vmem>>, vector<8x256xf32>
    %cst_7 = arith.constant dense<0.000000e+00> : vector<32x256xf32>
    %7 = tpu.matmul %0, %6, %cst_7 {dimension_numbers = #tpu.dot_dimension_numbers<[1], [0], [0], [1], [0, 0, 1, 1], [], []>} : vector<32x8xf32>, vector<8x256xf32>, vector<32x256xf32> -> vector<32x256xf32>
    %c0_8 = arith.constant 0 : index
    %c0_9 = arith.constant 0 : index
    %8 = vector.load %arg4[%c0_8, %c0_9] : memref<64x256xf32, #tpu.memory_space<vmem>>, vector<64x256xf32>
    %cst_10 = arith.constant 0.000000e+00 : f32
    %9 = vector.broadcast %cst_10 : f32 to vector<4x64xf32>
    %cst_11 = arith.constant 0.000000e+00 : f32
    %10 = vector.broadcast %cst_11 : f32 to vector<4x64xf32>
    %11 = vector.extract_strided_slice %5 {offsets = [0, 0], sizes = [4, 256], strides = [1, 1]} : vector<32x256xf32> to vector<4x256xf32>
    %12 = vector.extract_strided_slice %7 {offsets = [28, 0], sizes = [4, 256], strides = [1, 1]} : vector<32x256xf32> to vector<4x256xf32>
    %13 = arith.addf %11, %12 : vector<4x256xf32>
    %cst_12 = arith.constant dense<0.000000e+00> : vector<4x256xf32>
    %14 = tpu.matmul %9, %8, %cst_12 {dimension_numbers = #tpu.dot_dimension_numbers<[1], [0], [0], [1], [0, 0, 1, 1], [], []>} : vector<4x64xf32>, vector<64x256xf32>, vector<4x256xf32> -> vector<4x256xf32>
    %15 = arith.addf %13, %14 : vector<4x256xf32>
    %16 = vector.extract_strided_slice %15 {offsets = [0, 0], sizes = [4, 64], strides = [1, 1]} : vector<4x256xf32> to vector<4x64xf32>
    %17 = arith.negf %16 : vector<4x64xf32>
    %18 = math.exp %17 : vector<4x64xf32>
    %cst_13 = arith.constant 1.000000e+00 : f32
    %19 = vector.broadcast %cst_13 : f32 to vector<4x64xf32>
    %20 = arith.addf %19, %18 : vector<4x64xf32>
    %21 = arith.divf %19, %20 : vector<4x64xf32>
    %22 = vector.extract_strided_slice %15 {offsets = [0, 64], sizes = [4, 64], strides = [1, 1]} : vector<4x256xf32> to vector<4x64xf32>
    %23 = arith.negf %22 : vector<4x64xf32>
    %24 = math.exp %23 : vector<4x64xf32>
    %cst_14 = arith.constant 1.000000e+00 : f32
    %25 = vector.broadcast %cst_14 : f32 to vector<4x64xf32>
    %26 = arith.addf %25, %24 : vector<4x64xf32>
    %27 = arith.divf %25, %26 : vector<4x64xf32>
    %28 = vector.extract_strided_slice %15 {offsets = [0, 128], sizes = [4, 64], strides = [1, 1]} : vector<4x256xf32> to vector<4x64xf32>
    %29 = math.tanh %28 : vector<4x64xf32>
    %30 = vector.extract_strided_slice %15 {offsets = [0, 192], sizes = [4, 64], strides = [1, 1]} : vector<4x256xf32> to vector<4x64xf32>
    %31 = arith.negf %30 : vector<4x64xf32>
    %32 = math.exp %31 : vector<4x64xf32>
    %cst_15 = arith.constant 1.000000e+00 : f32
    %33 = vector.broadcast %cst_15 : f32 to vector<4x64xf32>
    %34 = arith.addf %33, %32 : vector<4x64xf32>
    %35 = arith.divf %33, %34 : vector<4x64xf32>
    %36 = arith.mulf %27, %10 : vector<4x64xf32>
    %37 = arith.mulf %21, %29 : vector<4x64xf32>
    %38 = arith.addf %36, %37 : vector<4x64xf32>
    %39 = math.tanh %38 : vector<4x64xf32>
    %40 = arith.mulf %35, %39 : vector<4x64xf32>
    %41 = vector.extract_strided_slice %5 {offsets = [4, 0], sizes = [4, 256], strides = [1, 1]} : vector<32x256xf32> to vector<4x256xf32>
    %42 = vector.extract_strided_slice %7 {offsets = [24, 0], sizes = [4, 256], strides = [1, 1]} : vector<32x256xf32> to vector<4x256xf32>
    %43 = arith.addf %41, %42 : vector<4x256xf32>
    %cst_16 = arith.constant dense<0.000000e+00> : vector<4x256xf32>
    %44 = tpu.matmul %40, %8, %cst_16 {dimension_numbers = #tpu.dot_dimension_numbers<[1], [0], [0], [1], [0, 0, 1, 1], [], []>} : vector<4x64xf32>, vector<64x256xf32>, vector<4x256xf32> -> vector<4x256xf32>
    %45 = arith.addf %43, %44 : vector<4x256xf32>
    %46 = vector.extract_strided_slice %45 {offsets = [0, 0], sizes = [4, 64], strides = [1, 1]} : vector<4x256xf32> to vector<4x64xf32>
    %47 = arith.negf %46 : vector<4x64xf32>
    %48 = math.exp %47 : vector<4x64xf32>
    %cst_17 = arith.constant 1.000000e+00 : f32
    %49 = vector.broadcast %cst_17 : f32 to vector<4x64xf32>
    %50 = arith.addf %49, %48 : vector<4x64xf32>
    %51 = arith.divf %49, %50 : vector<4x64xf32>
    %52 = vector.extract_strided_slice %45 {offsets = [0, 64], sizes = [4, 64], strides = [1, 1]} : vector<4x256xf32> to vector<4x64xf32>
    %53 = arith.negf %52 : vector<4x64xf32>
    %54 = math.exp %53 : vector<4x64xf32>
    %cst_18 = arith.constant 1.000000e+00 : f32
    %55 = vector.broadcast %cst_18 : f32 to vector<4x64xf32>
    %56 = arith.addf %55, %54 : vector<4x64xf32>
    %57 = arith.divf %55, %56 : vector<4x64xf32>
    %58 = vector.extract_strided_slice %45 {offsets = [0, 128], sizes = [4, 64], strides = [1, 1]} : vector<4x256xf32> to vector<4x64xf32>
    %59 = math.tanh %58 : vector<4x64xf32>
    %60 = vector.extract_strided_slice %45 {offsets = [0, 192], sizes = [4, 64], strides = [1, 1]} : vector<4x256xf32> to vector<4x64xf32>
    %61 = arith.negf %60 : vector<4x64xf32>
    %62 = math.exp %61 : vector<4x64xf32>
    %cst_19 = arith.constant 1.000000e+00 : f32
    %63 = vector.broadcast %cst_19 : f32 to vector<4x64xf32>
    %64 = arith.addf %63, %62 : vector<4x64xf32>
    %65 = arith.divf %63, %64 : vector<4x64xf32>
    %66 = arith.mulf %57, %38 : vector<4x64xf32>
    %67 = arith.mulf %51, %59 : vector<4x64xf32>
    %68 = arith.addf %66, %67 : vector<4x64xf32>
    %69 = math.tanh %68 : vector<4x64xf32>
    %70 = arith.mulf %65, %69 : vector<4x64xf32>
    %71 = vector.extract_strided_slice %5 {offsets = [8, 0], sizes = [4, 256], strides = [1, 1]} : vector<32x256xf32> to vector<4x256xf32>
    %72 = vector.extract_strided_slice %7 {offsets = [20, 0], sizes = [4, 256], strides = [1, 1]} : vector<32x256xf32> to vector<4x256xf32>
    %73 = arith.addf %71, %72 : vector<4x256xf32>
    %cst_20 = arith.constant dense<0.000000e+00> : vector<4x256xf32>
    %74 = tpu.matmul %70, %8, %cst_20 {dimension_numbers = #tpu.dot_dimension_numbers<[1], [0], [0], [1], [0, 0, 1, 1], [], []>} : vector<4x64xf32>, vector<64x256xf32>, vector<4x256xf32> -> vector<4x256xf32>
    %75 = arith.addf %73, %74 : vector<4x256xf32>
    %76 = vector.extract_strided_slice %75 {offsets = [0, 0], sizes = [4, 64], strides = [1, 1]} : vector<4x256xf32> to vector<4x64xf32>
    %77 = arith.negf %76 : vector<4x64xf32>
    %78 = math.exp %77 : vector<4x64xf32>
    %cst_21 = arith.constant 1.000000e+00 : f32
    %79 = vector.broadcast %cst_21 : f32 to vector<4x64xf32>
    %80 = arith.addf %79, %78 : vector<4x64xf32>
    %81 = arith.divf %79, %80 : vector<4x64xf32>
    %82 = vector.extract_strided_slice %75 {offsets = [0, 64], sizes = [4, 64], strides = [1, 1]} : vector<4x256xf32> to vector<4x64xf32>
    %83 = arith.negf %82 : vector<4x64xf32>
    %84 = math.exp %83 : vector<4x64xf32>
    %cst_22 = arith.constant 1.000000e+00 : f32
    %85 = vector.broadcast %cst_22 : f32 to vector<4x64xf32>
    %86 = arith.addf %85, %84 : vector<4x64xf32>
    %87 = arith.divf %85, %86 : vector<4x64xf32>
    %88 = vector.extract_strided_slice %75 {offsets = [0, 128], sizes = [4, 64], strides = [1, 1]} : vector<4x256xf32> to vector<4x64xf32>
    %89 = math.tanh %88 : vector<4x64xf32>
    %90 = vector.extract_strided_slice %75 {offsets = [0, 192], sizes = [4, 64], strides = [1, 1]} : vector<4x256xf32> to vector<4x64xf32>
    %91 = arith.negf %90 : vector<4x64xf32>
    %92 = math.exp %91 : vector<4x64xf32>
    %cst_23 = arith.constant 1.000000e+00 : f32
    %93 = vector.broadcast %cst_23 : f32 to vector<4x64xf32>
    %94 = arith.addf %93, %92 : vector<4x64xf32>
    %95 = arith.divf %93, %94 : vector<4x64xf32>
    %96 = arith.mulf %87, %68 : vector<4x64xf32>
    %97 = arith.mulf %81, %89 : vector<4x64xf32>
    %98 = arith.addf %96, %97 : vector<4x64xf32>
    %99 = math.tanh %98 : vector<4x64xf32>
    %100 = arith.mulf %95, %99 : vector<4x64xf32>
    %101 = vector.extract_strided_slice %5 {offsets = [12, 0], sizes = [4, 256], strides = [1, 1]} : vector<32x256xf32> to vector<4x256xf32>
    %102 = vector.extract_strided_slice %7 {offsets = [16, 0], sizes = [4, 256], strides = [1, 1]} : vector<32x256xf32> to vector<4x256xf32>
    %103 = arith.addf %101, %102 : vector<4x256xf32>
    %cst_24 = arith.constant dense<0.000000e+00> : vector<4x256xf32>
    %104 = tpu.matmul %100, %8, %cst_24 {dimension_numbers = #tpu.dot_dimension_numbers<[1], [0], [0], [1], [0, 0, 1, 1], [], []>} : vector<4x64xf32>, vector<64x256xf32>, vector<4x256xf32> -> vector<4x256xf32>
    %105 = arith.addf %103, %104 : vector<4x256xf32>
    %106 = vector.extract_strided_slice %105 {offsets = [0, 0], sizes = [4, 64], strides = [1, 1]} : vector<4x256xf32> to vector<4x64xf32>
    %107 = arith.negf %106 : vector<4x64xf32>
    %108 = math.exp %107 : vector<4x64xf32>
    %cst_25 = arith.constant 1.000000e+00 : f32
    %109 = vector.broadcast %cst_25 : f32 to vector<4x64xf32>
    %110 = arith.addf %109, %108 : vector<4x64xf32>
    %111 = arith.divf %109, %110 : vector<4x64xf32>
    %112 = vector.extract_strided_slice %105 {offsets = [0, 64], sizes = [4, 64], strides = [1, 1]} : vector<4x256xf32> to vector<4x64xf32>
    %113 = arith.negf %112 : vector<4x64xf32>
    %114 = math.exp %113 : vector<4x64xf32>
    %cst_26 = arith.constant 1.000000e+00 : f32
    %115 = vector.broadcast %cst_26 : f32 to vector<4x64xf32>
    %116 = arith.addf %115, %114 : vector<4x64xf32>
    %117 = arith.divf %115, %116 : vector<4x64xf32>
    %118 = vector.extract_strided_slice %105 {offsets = [0, 128], sizes = [4, 64], strides = [1, 1]} : vector<4x256xf32> to vector<4x64xf32>
    %119 = math.tanh %118 : vector<4x64xf32>
    %120 = vector.extract_strided_slice %105 {offsets = [0, 192], sizes = [4, 64], strides = [1, 1]} : vector<4x256xf32> to vector<4x64xf32>
    %121 = arith.negf %120 : vector<4x64xf32>
    %122 = math.exp %121 : vector<4x64xf32>
    %cst_27 = arith.constant 1.000000e+00 : f32
    %123 = vector.broadcast %cst_27 : f32 to vector<4x64xf32>
    %124 = arith.addf %123, %122 : vector<4x64xf32>
    %125 = arith.divf %123, %124 : vector<4x64xf32>
    %126 = arith.mulf %117, %98 : vector<4x64xf32>
    %127 = arith.mulf %111, %119 : vector<4x64xf32>
    %128 = arith.addf %126, %127 : vector<4x64xf32>
    %129 = math.tanh %128 : vector<4x64xf32>
    %130 = arith.mulf %125, %129 : vector<4x64xf32>
    %131 = vector.extract_strided_slice %5 {offsets = [16, 0], sizes = [4, 256], strides = [1, 1]} : vector<32x256xf32> to vector<4x256xf32>
    %132 = vector.extract_strided_slice %7 {offsets = [12, 0], sizes = [4, 256], strides = [1, 1]} : vector<32x256xf32> to vector<4x256xf32>
    %133 = arith.addf %131, %132 : vector<4x256xf32>
    %cst_28 = arith.constant dense<0.000000e+00> : vector<4x256xf32>
    %134 = tpu.matmul %130, %8, %cst_28 {dimension_numbers = #tpu.dot_dimension_numbers<[1], [0], [0], [1], [0, 0, 1, 1], [], []>} : vector<4x64xf32>, vector<64x256xf32>, vector<4x256xf32> -> vector<4x256xf32>
    %135 = arith.addf %133, %134 : vector<4x256xf32>
    %136 = vector.extract_strided_slice %135 {offsets = [0, 0], sizes = [4, 64], strides = [1, 1]} : vector<4x256xf32> to vector<4x64xf32>
    %137 = arith.negf %136 : vector<4x64xf32>
    %138 = math.exp %137 : vector<4x64xf32>
    %cst_29 = arith.constant 1.000000e+00 : f32
    %139 = vector.broadcast %cst_29 : f32 to vector<4x64xf32>
    %140 = arith.addf %139, %138 : vector<4x64xf32>
    %141 = arith.divf %139, %140 : vector<4x64xf32>
    %142 = vector.extract_strided_slice %135 {offsets = [0, 64], sizes = [4, 64], strides = [1, 1]} : vector<4x256xf32> to vector<4x64xf32>
    %143 = arith.negf %142 : vector<4x64xf32>
    %144 = math.exp %143 : vector<4x64xf32>
    %cst_30 = arith.constant 1.000000e+00 : f32
    %145 = vector.broadcast %cst_30 : f32 to vector<4x64xf32>
    %146 = arith.addf %145, %144 : vector<4x64xf32>
    %147 = arith.divf %145, %146 : vector<4x64xf32>
    %148 = vector.extract_strided_slice %135 {offsets = [0, 128], sizes = [4, 64], strides = [1, 1]} : vector<4x256xf32> to vector<4x64xf32>
    %149 = math.tanh %148 : vector<4x64xf32>
    %150 = vector.extract_strided_slice %135 {offsets = [0, 192], sizes = [4, 64], strides = [1, 1]} : vector<4x256xf32> to vector<4x64xf32>
    %151 = arith.negf %150 : vector<4x64xf32>
    %152 = math.exp %151 : vector<4x64xf32>
    %cst_31 = arith.constant 1.000000e+00 : f32
    %153 = vector.broadcast %cst_31 : f32 to vector<4x64xf32>
    %154 = arith.addf %153, %152 : vector<4x64xf32>
    %155 = arith.divf %153, %154 : vector<4x64xf32>
    %156 = arith.mulf %147, %128 : vector<4x64xf32>
    %157 = arith.mulf %141, %149 : vector<4x64xf32>
    %158 = arith.addf %156, %157 : vector<4x64xf32>
    %159 = math.tanh %158 : vector<4x64xf32>
    %160 = arith.mulf %155, %159 : vector<4x64xf32>
    %161 = vector.extract_strided_slice %5 {offsets = [20, 0], sizes = [4, 256], strides = [1, 1]} : vector<32x256xf32> to vector<4x256xf32>
    %162 = vector.extract_strided_slice %7 {offsets = [8, 0], sizes = [4, 256], strides = [1, 1]} : vector<32x256xf32> to vector<4x256xf32>
    %163 = arith.addf %161, %162 : vector<4x256xf32>
    %cst_32 = arith.constant dense<0.000000e+00> : vector<4x256xf32>
    %164 = tpu.matmul %160, %8, %cst_32 {dimension_numbers = #tpu.dot_dimension_numbers<[1], [0], [0], [1], [0, 0, 1, 1], [], []>} : vector<4x64xf32>, vector<64x256xf32>, vector<4x256xf32> -> vector<4x256xf32>
    %165 = arith.addf %163, %164 : vector<4x256xf32>
    %166 = vector.extract_strided_slice %165 {offsets = [0, 0], sizes = [4, 64], strides = [1, 1]} : vector<4x256xf32> to vector<4x64xf32>
    %167 = arith.negf %166 : vector<4x64xf32>
    %168 = math.exp %167 : vector<4x64xf32>
    %cst_33 = arith.constant 1.000000e+00 : f32
    %169 = vector.broadcast %cst_33 : f32 to vector<4x64xf32>
    %170 = arith.addf %169, %168 : vector<4x64xf32>
    %171 = arith.divf %169, %170 : vector<4x64xf32>
    %172 = vector.extract_strided_slice %165 {offsets = [0, 64], sizes = [4, 64], strides = [1, 1]} : vector<4x256xf32> to vector<4x64xf32>
    %173 = arith.negf %172 : vector<4x64xf32>
    %174 = math.exp %173 : vector<4x64xf32>
    %cst_34 = arith.constant 1.000000e+00 : f32
    %175 = vector.broadcast %cst_34 : f32 to vector<4x64xf32>
    %176 = arith.addf %175, %174 : vector<4x64xf32>
    %177 = arith.divf %175, %176 : vector<4x64xf32>
    %178 = vector.extract_strided_slice %165 {offsets = [0, 128], sizes = [4, 64], strides = [1, 1]} : vector<4x256xf32> to vector<4x64xf32>
    %179 = math.tanh %178 : vector<4x64xf32>
    %180 = vector.extract_strided_slice %165 {offsets = [0, 192], sizes = [4, 64], strides = [1, 1]} : vector<4x256xf32> to vector<4x64xf32>
    %181 = arith.negf %180 : vector<4x64xf32>
    %182 = math.exp %181 : vector<4x64xf32>
    %cst_35 = arith.constant 1.000000e+00 : f32
    %183 = vector.broadcast %cst_35 : f32 to vector<4x64xf32>
    %184 = arith.addf %183, %182 : vector<4x64xf32>
    %185 = arith.divf %183, %184 : vector<4x64xf32>
    %186 = arith.mulf %177, %158 : vector<4x64xf32>
    %187 = arith.mulf %171, %179 : vector<4x64xf32>
    %188 = arith.addf %186, %187 : vector<4x64xf32>
    %189 = math.tanh %188 : vector<4x64xf32>
    %190 = arith.mulf %185, %189 : vector<4x64xf32>
    %191 = vector.extract_strided_slice %5 {offsets = [24, 0], sizes = [4, 256], strides = [1, 1]} : vector<32x256xf32> to vector<4x256xf32>
    %192 = vector.extract_strided_slice %7 {offsets = [4, 0], sizes = [4, 256], strides = [1, 1]} : vector<32x256xf32> to vector<4x256xf32>
    %193 = arith.addf %191, %192 : vector<4x256xf32>
    %cst_36 = arith.constant dense<0.000000e+00> : vector<4x256xf32>
    %194 = tpu.matmul %190, %8, %cst_36 {dimension_numbers = #tpu.dot_dimension_numbers<[1], [0], [0], [1], [0, 0, 1, 1], [], []>} : vector<4x64xf32>, vector<64x256xf32>, vector<4x256xf32> -> vector<4x256xf32>
    %195 = arith.addf %193, %194 : vector<4x256xf32>
    %196 = vector.extract_strided_slice %195 {offsets = [0, 0], sizes = [4, 64], strides = [1, 1]} : vector<4x256xf32> to vector<4x64xf32>
    %197 = arith.negf %196 : vector<4x64xf32>
    %198 = math.exp %197 : vector<4x64xf32>
    %cst_37 = arith.constant 1.000000e+00 : f32
    %199 = vector.broadcast %cst_37 : f32 to vector<4x64xf32>
    %200 = arith.addf %199, %198 : vector<4x64xf32>
    %201 = arith.divf %199, %200 : vector<4x64xf32>
    %202 = vector.extract_strided_slice %195 {offsets = [0, 64], sizes = [4, 64], strides = [1, 1]} : vector<4x256xf32> to vector<4x64xf32>
    %203 = arith.negf %202 : vector<4x64xf32>
    %204 = math.exp %203 : vector<4x64xf32>
    %cst_38 = arith.constant 1.000000e+00 : f32
    %205 = vector.broadcast %cst_38 : f32 to vector<4x64xf32>
    %206 = arith.addf %205, %204 : vector<4x64xf32>
    %207 = arith.divf %205, %206 : vector<4x64xf32>
    %208 = vector.extract_strided_slice %195 {offsets = [0, 128], sizes = [4, 64], strides = [1, 1]} : vector<4x256xf32> to vector<4x64xf32>
    %209 = math.tanh %208 : vector<4x64xf32>
    %210 = vector.extract_strided_slice %195 {offsets = [0, 192], sizes = [4, 64], strides = [1, 1]} : vector<4x256xf32> to vector<4x64xf32>
    %211 = arith.negf %210 : vector<4x64xf32>
    %212 = math.exp %211 : vector<4x64xf32>
    %cst_39 = arith.constant 1.000000e+00 : f32
    %213 = vector.broadcast %cst_39 : f32 to vector<4x64xf32>
    %214 = arith.addf %213, %212 : vector<4x64xf32>
    %215 = arith.divf %213, %214 : vector<4x64xf32>
    %216 = arith.mulf %207, %188 : vector<4x64xf32>
    %217 = arith.mulf %201, %209 : vector<4x64xf32>
    %218 = arith.addf %216, %217 : vector<4x64xf32>
    %219 = math.tanh %218 : vector<4x64xf32>
    %220 = arith.mulf %215, %219 : vector<4x64xf32>
    %221 = vector.extract_strided_slice %5 {offsets = [28, 0], sizes = [4, 256], strides = [1, 1]} : vector<32x256xf32> to vector<4x256xf32>
    %222 = vector.extract_strided_slice %7 {offsets = [0, 0], sizes = [4, 256], strides = [1, 1]} : vector<32x256xf32> to vector<4x256xf32>
    %223 = arith.addf %221, %222 : vector<4x256xf32>
    %cst_40 = arith.constant dense<0.000000e+00> : vector<4x256xf32>
    %224 = tpu.matmul %220, %8, %cst_40 {dimension_numbers = #tpu.dot_dimension_numbers<[1], [0], [0], [1], [0, 0, 1, 1], [], []>} : vector<4x64xf32>, vector<64x256xf32>, vector<4x256xf32> -> vector<4x256xf32>
    %225 = arith.addf %223, %224 : vector<4x256xf32>
    %226 = vector.extract_strided_slice %225 {offsets = [0, 0], sizes = [4, 64], strides = [1, 1]} : vector<4x256xf32> to vector<4x64xf32>
    %227 = arith.negf %226 : vector<4x64xf32>
    %228 = math.exp %227 : vector<4x64xf32>
    %cst_41 = arith.constant 1.000000e+00 : f32
    %229 = vector.broadcast %cst_41 : f32 to vector<4x64xf32>
    %230 = arith.addf %229, %228 : vector<4x64xf32>
    %231 = arith.divf %229, %230 : vector<4x64xf32>
    %232 = vector.extract_strided_slice %225 {offsets = [0, 64], sizes = [4, 64], strides = [1, 1]} : vector<4x256xf32> to vector<4x64xf32>
    %233 = arith.negf %232 : vector<4x64xf32>
    %234 = math.exp %233 : vector<4x64xf32>
    %cst_42 = arith.constant 1.000000e+00 : f32
    %235 = vector.broadcast %cst_42 : f32 to vector<4x64xf32>
    %236 = arith.addf %235, %234 : vector<4x64xf32>
    %237 = arith.divf %235, %236 : vector<4x64xf32>
    %238 = vector.extract_strided_slice %225 {offsets = [0, 128], sizes = [4, 64], strides = [1, 1]} : vector<4x256xf32> to vector<4x64xf32>
    %239 = math.tanh %238 : vector<4x64xf32>
    %240 = vector.extract_strided_slice %225 {offsets = [0, 192], sizes = [4, 64], strides = [1, 1]} : vector<4x256xf32> to vector<4x64xf32>
    %241 = arith.negf %240 : vector<4x64xf32>
    %242 = math.exp %241 : vector<4x64xf32>
    %cst_43 = arith.constant 1.000000e+00 : f32
    %243 = vector.broadcast %cst_43 : f32 to vector<4x64xf32>
    %244 = arith.addf %243, %242 : vector<4x64xf32>
    %245 = arith.divf %243, %244 : vector<4x64xf32>
    %246 = arith.mulf %237, %218 : vector<4x64xf32>
    %247 = arith.mulf %231, %239 : vector<4x64xf32>
    %248 = arith.addf %246, %247 : vector<4x64xf32>
    %249 = math.tanh %248 : vector<4x64xf32>
    %250 = arith.mulf %245, %249 : vector<4x64xf32>
    %251 = vector.extract_strided_slice %40 {offsets = [0, 0], sizes = [4, 32], strides = [1, 1]} : vector<4x64xf32> to vector<4x32xf32>
    %c0_44 = arith.constant 0 : index
    %c0_45 = arith.constant 0 : index
    %252 = vector.load %arg14[%c0_44, %c0_45] : memref<32x64xf32, #tpu.memory_space<vmem>>, vector<4x32xf32>
    tpu.vector_store %arg14[%c0_44, %c0_45], %251 {strides = array<i32>} : memref<32x64xf32, #tpu.memory_space<vmem>>, vector<4x32xf32>,
    %253 = vector.extract_strided_slice %40 {offsets = [0, 32], sizes = [4, 32], strides = [1, 1]} : vector<4x64xf32> to vector<4x32xf32>
    %c28 = arith.constant 28 : index
    %c32 = arith.constant 32 : index
    %254 = vector.load %arg14[%c28, %c32] : memref<32x64xf32, #tpu.memory_space<vmem>>, vector<4x32xf32>
    tpu.vector_store %arg14[%c28, %c32], %253 {strides = array<i32>} : memref<32x64xf32, #tpu.memory_space<vmem>>, vector<4x32xf32>,
    %255 = vector.extract_strided_slice %70 {offsets = [0, 0], sizes = [4, 32], strides = [1, 1]} : vector<4x64xf32> to vector<4x32xf32>
    %c4 = arith.constant 4 : index
    %c0_46 = arith.constant 0 : index
    %256 = vector.load %arg14[%c4, %c0_46] : memref<32x64xf32, #tpu.memory_space<vmem>>, vector<4x32xf32>
    tpu.vector_store %arg14[%c4, %c0_46], %255 {strides = array<i32>} : memref<32x64xf32, #tpu.memory_space<vmem>>, vector<4x32xf32>,
    %257 = vector.extract_strided_slice %70 {offsets = [0, 32], sizes = [4, 32], strides = [1, 1]} : vector<4x64xf32> to vector<4x32xf32>
    %c24 = arith.constant 24 : index
    %c32_47 = arith.constant 32 : index
    %258 = vector.load %arg14[%c24, %c32_47] : memref<32x64xf32, #tpu.memory_space<vmem>>, vector<4x32xf32>
    tpu.vector_store %arg14[%c24, %c32_47], %257 {strides = array<i32>} : memref<32x64xf32, #tpu.memory_space<vmem>>, vector<4x32xf32>,
    %259 = vector.extract_strided_slice %100 {offsets = [0, 0], sizes = [4, 32], strides = [1, 1]} : vector<4x64xf32> to vector<4x32xf32>
    %c8 = arith.constant 8 : index
    %c0_48 = arith.constant 0 : index
    %260 = vector.load %arg14[%c8, %c0_48] : memref<32x64xf32, #tpu.memory_space<vmem>>, vector<4x32xf32>
    tpu.vector_store %arg14[%c8, %c0_48], %259 {strides = array<i32>} : memref<32x64xf32, #tpu.memory_space<vmem>>, vector<4x32xf32>,
    %261 = vector.extract_strided_slice %100 {offsets = [0, 32], sizes = [4, 32], strides = [1, 1]} : vector<4x64xf32> to vector<4x32xf32>
    %c20 = arith.constant 20 : index
    %c32_49 = arith.constant 32 : index
    %262 = vector.load %arg14[%c20, %c32_49] : memref<32x64xf32, #tpu.memory_space<vmem>>, vector<4x32xf32>
    tpu.vector_store %arg14[%c20, %c32_49], %261 {strides = array<i32>} : memref<32x64xf32, #tpu.memory_space<vmem>>, vector<4x32xf32>,
    %263 = vector.extract_strided_slice %130 {offsets = [0, 0], sizes = [4, 32], strides = [1, 1]} : vector<4x64xf32> to vector<4x32xf32>
    %c12 = arith.constant 12 : index
    %c0_50 = arith.constant 0 : index
    %264 = vector.load %arg14[%c12, %c0_50] : memref<32x64xf32, #tpu.memory_space<vmem>>, vector<4x32xf32>
    tpu.vector_store %arg14[%c12, %c0_50], %263 {strides = array<i32>} : memref<32x64xf32, #tpu.memory_space<vmem>>, vector<4x32xf32>,
    %265 = vector.extract_strided_slice %130 {offsets = [0, 32], sizes = [4, 32], strides = [1, 1]} : vector<4x64xf32> to vector<4x32xf32>
    %c16 = arith.constant 16 : index
    %c32_51 = arith.constant 32 : index
    %266 = vector.load %arg14[%c16, %c32_51] : memref<32x64xf32, #tpu.memory_space<vmem>>, vector<4x32xf32>
    tpu.vector_store %arg14[%c16, %c32_51], %265 {strides = array<i32>} : memref<32x64xf32, #tpu.memory_space<vmem>>, vector<4x32xf32>,
    %267 = vector.extract_strided_slice %160 {offsets = [0, 0], sizes = [4, 32], strides = [1, 1]} : vector<4x64xf32> to vector<4x32xf32>
    %c16_52 = arith.constant 16 : index
    %c0_53 = arith.constant 0 : index
    %268 = vector.load %arg14[%c16_52, %c0_53] : memref<32x64xf32, #tpu.memory_space<vmem>>, vector<4x32xf32>
    tpu.vector_store %arg14[%c16_52, %c0_53], %267 {strides = array<i32>} : memref<32x64xf32, #tpu.memory_space<vmem>>, vector<4x32xf32>,
    %269 = vector.extract_strided_slice %160 {offsets = [0, 32], sizes = [4, 32], strides = [1, 1]} : vector<4x64xf32> to vector<4x32xf32>
    %c12_54 = arith.constant 12 : index
    %c32_55 = arith.constant 32 : index
    %270 = vector.load %arg14[%c12_54, %c32_55] : memref<32x64xf32, #tpu.memory_space<vmem>>, vector<4x32xf32>
    tpu.vector_store %arg14[%c12_54, %c32_55], %269 {strides = array<i32>} : memref<32x64xf32, #tpu.memory_space<vmem>>, vector<4x32xf32>,
    %271 = vector.extract_strided_slice %190 {offsets = [0, 0], sizes = [4, 32], strides = [1, 1]} : vector<4x64xf32> to vector<4x32xf32>
    %c20_56 = arith.constant 20 : index
    %c0_57 = arith.constant 0 : index
    %272 = vector.load %arg14[%c20_56, %c0_57] : memref<32x64xf32, #tpu.memory_space<vmem>>, vector<4x32xf32>
    tpu.vector_store %arg14[%c20_56, %c0_57], %271 {strides = array<i32>} : memref<32x64xf32, #tpu.memory_space<vmem>>, vector<4x32xf32>,
    %273 = vector.extract_strided_slice %190 {offsets = [0, 32], sizes = [4, 32], strides = [1, 1]} : vector<4x64xf32> to vector<4x32xf32>
    %c8_58 = arith.constant 8 : index
    %c32_59 = arith.constant 32 : index
    %274 = vector.load %arg14[%c8_58, %c32_59] : memref<32x64xf32, #tpu.memory_space<vmem>>, vector<4x32xf32>
    tpu.vector_store %arg14[%c8_58, %c32_59], %273 {strides = array<i32>} : memref<32x64xf32, #tpu.memory_space<vmem>>, vector<4x32xf32>,
    %275 = vector.extract_strided_slice %220 {offsets = [0, 0], sizes = [4, 32], strides = [1, 1]} : vector<4x64xf32> to vector<4x32xf32>
    %c24_60 = arith.constant 24 : index
    %c0_61 = arith.constant 0 : index
    %276 = vector.load %arg14[%c24_60, %c0_61] : memref<32x64xf32, #tpu.memory_space<vmem>>, vector<4x32xf32>
    tpu.vector_store %arg14[%c24_60, %c0_61], %275 {strides = array<i32>} : memref<32x64xf32, #tpu.memory_space<vmem>>, vector<4x32xf32>,
    %277 = vector.extract_strided_slice %220 {offsets = [0, 32], sizes = [4, 32], strides = [1, 1]} : vector<4x64xf32> to vector<4x32xf32>
    %c4_62 = arith.constant 4 : index
    %c32_63 = arith.constant 32 : index
    %278 = vector.load %arg14[%c4_62, %c32_63] : memref<32x64xf32, #tpu.memory_space<vmem>>, vector<4x32xf32>
    tpu.vector_store %arg14[%c4_62, %c32_63], %277 {strides = array<i32>} : memref<32x64xf32, #tpu.memory_space<vmem>>, vector<4x32xf32>,
    %279 = vector.extract_strided_slice %250 {offsets = [0, 0], sizes = [4, 32], strides = [1, 1]} : vector<4x64xf32> to vector<4x32xf32>
    %c28_64 = arith.constant 28 : index
    %c0_65 = arith.constant 0 : index
    %280 = vector.load %arg14[%c28_64, %c0_65] : memref<32x64xf32, #tpu.memory_space<vmem>>, vector<4x32xf32>
    tpu.vector_store %arg14[%c28_64, %c0_65], %279 {strides = array<i32>} : memref<32x64xf32, #tpu.memory_space<vmem>>, vector<4x32xf32>,
    %281 = vector.extract_strided_slice %250 {offsets = [0, 32], sizes = [4, 32], strides = [1, 1]} : vector<4x64xf32> to vector<4x32xf32>
    %c0_66 = arith.constant 0 : index
    %c32_67 = arith.constant 32 : index
    %282 = vector.load %arg14[%c0_66, %c32_67] : memref<32x64xf32, #tpu.memory_space<vmem>>, vector<4x32xf32>
    tpu.vector_store %arg14[%c0_66, %c32_67], %281 {strides = array<i32>} : memref<32x64xf32, #tpu.memory_space<vmem>>, vector<4x32xf32>,
    %c0_68 = arith.constant 0 : index
    %c0_69 = arith.constant 0 : index
    %283 = vector.load %arg14[%c0_68, %c0_69] : memref<32x64xf32, #tpu.memory_space<vmem>>, vector<32x64xf32>
    %c0_70 = arith.constant 0 : index
    %c0_71 = arith.constant 0 : index
    %284 = vector.load %arg5[%c0_70, %c0_71] : memref<64x256xf32, #tpu.memory_space<vmem>>, vector<64x256xf32>
    %cst_72 = arith.constant dense<0.000000e+00> : vector<32x256xf32>
    %285 = tpu.matmul %283, %284, %cst_72 {dimension_numbers = #tpu.dot_dimension_numbers<[1], [0], [0], [1], [0, 0, 1, 1], [], []>} : vector<32x64xf32>, vector<64x256xf32>, vector<32x256xf32> -> vector<32x256xf32>
    %c0_73 = arith.constant 0 : index
    %c0_74 = arith.constant 0 : index
    %286 = vector.load %arg7[%c0_73, %c0_74] : memref<1x256xf32, #tpu.memory_space<vmem>>, vector<1x256xf32>
    %287 = vector.broadcast %286 : vector<1x256xf32> to vector<32x256xf32>
    %288 = arith.addf %285, %287 : vector<32x256xf32>
    %c0_75 = arith.constant 0 : index
    %c0_76 = arith.constant 0 : index
    %289 = vector.load %arg6[%c0_75, %c0_76] : memref<64x256xf32, #tpu.memory_space<vmem>>, vector<64x256xf32>
    %cst_77 = arith.constant dense<0.000000e+00> : vector<32x256xf32>
    %290 = tpu.matmul %283, %289, %cst_77 {dimension_numbers = #tpu.dot_dimension_numbers<[1], [0], [0], [1], [0, 0, 1, 1], [], []>} : vector<32x64xf32>, vector<64x256xf32>, vector<32x256xf32> -> vector<32x256xf32>
    %c0_78 = arith.constant 0 : index
    %c0_79 = arith.constant 0 : index
    %291 = vector.load %arg8[%c0_78, %c0_79] : memref<64x256xf32, #tpu.memory_space<vmem>>, vector<64x256xf32>
    %cst_80 = arith.constant 0.000000e+00 : f32
    %292 = vector.broadcast %cst_80 : f32 to vector<4x64xf32>
    %cst_81 = arith.constant 0.000000e+00 : f32
    %293 = vector.broadcast %cst_81 : f32 to vector<4x64xf32>
    %294 = vector.extract_strided_slice %288 {offsets = [0, 0], sizes = [4, 256], strides = [1, 1]} : vector<32x256xf32> to vector<4x256xf32>
    %295 = vector.extract_strided_slice %290 {offsets = [28, 0], sizes = [4, 256], strides = [1, 1]} : vector<32x256xf32> to vector<4x256xf32>
    %296 = arith.addf %294, %295 : vector<4x256xf32>
    %cst_82 = arith.constant dense<0.000000e+00> : vector<4x256xf32>
    %297 = tpu.matmul %292, %291, %cst_82 {dimension_numbers = #tpu.dot_dimension_numbers<[1], [0], [0], [1], [0, 0, 1, 1], [], []>} : vector<4x64xf32>, vector<64x256xf32>, vector<4x256xf32> -> vector<4x256xf32>
    %298 = arith.addf %296, %297 : vector<4x256xf32>
    %299 = vector.extract_strided_slice %298 {offsets = [0, 0], sizes = [4, 64], strides = [1, 1]} : vector<4x256xf32> to vector<4x64xf32>
    %300 = arith.negf %299 : vector<4x64xf32>
    %301 = math.exp %300 : vector<4x64xf32>
    %cst_83 = arith.constant 1.000000e+00 : f32
    %302 = vector.broadcast %cst_83 : f32 to vector<4x64xf32>
    %303 = arith.addf %302, %301 : vector<4x64xf32>
    %304 = arith.divf %302, %303 : vector<4x64xf32>
    %305 = vector.extract_strided_slice %298 {offsets = [0, 64], sizes = [4, 64], strides = [1, 1]} : vector<4x256xf32> to vector<4x64xf32>
    %306 = arith.negf %305 : vector<4x64xf32>
    %307 = math.exp %306 : vector<4x64xf32>
    %cst_84 = arith.constant 1.000000e+00 : f32
    %308 = vector.broadcast %cst_84 : f32 to vector<4x64xf32>
    %309 = arith.addf %308, %307 : vector<4x64xf32>
    %310 = arith.divf %308, %309 : vector<4x64xf32>
    %311 = vector.extract_strided_slice %298 {offsets = [0, 128], sizes = [4, 64], strides = [1, 1]} : vector<4x256xf32> to vector<4x64xf32>
    %312 = math.tanh %311 : vector<4x64xf32>
    %313 = vector.extract_strided_slice %298 {offsets = [0, 192], sizes = [4, 64], strides = [1, 1]} : vector<4x256xf32> to vector<4x64xf32>
    %314 = arith.negf %313 : vector<4x64xf32>
    %315 = math.exp %314 : vector<4x64xf32>
    %cst_85 = arith.constant 1.000000e+00 : f32
    %316 = vector.broadcast %cst_85 : f32 to vector<4x64xf32>
    %317 = arith.addf %316, %315 : vector<4x64xf32>
    %318 = arith.divf %316, %317 : vector<4x64xf32>
    %319 = arith.mulf %310, %293 : vector<4x64xf32>
    %320 = arith.mulf %304, %312 : vector<4x64xf32>
    %321 = arith.addf %319, %320 : vector<4x64xf32>
    %322 = math.tanh %321 : vector<4x64xf32>
    %323 = arith.mulf %318, %322 : vector<4x64xf32>
    %324 = vector.extract_strided_slice %288 {offsets = [4, 0], sizes = [4, 256], strides = [1, 1]} : vector<32x256xf32> to vector<4x256xf32>
    %325 = vector.extract_strided_slice %290 {offsets = [24, 0], sizes = [4, 256], strides = [1, 1]} : vector<32x256xf32> to vector<4x256xf32>
    %326 = arith.addf %324, %325 : vector<4x256xf32>
    %cst_86 = arith.constant dense<0.000000e+00> : vector<4x256xf32>
    %327 = tpu.matmul %323, %291, %cst_86 {dimension_numbers = #tpu.dot_dimension_numbers<[1], [0], [0], [1], [0, 0, 1, 1], [], []>} : vector<4x64xf32>, vector<64x256xf32>, vector<4x256xf32> -> vector<4x256xf32>
    %328 = arith.addf %326, %327 : vector<4x256xf32>
    %329 = vector.extract_strided_slice %328 {offsets = [0, 0], sizes = [4, 64], strides = [1, 1]} : vector<4x256xf32> to vector<4x64xf32>
    %330 = arith.negf %329 : vector<4x64xf32>
    %331 = math.exp %330 : vector<4x64xf32>
    %cst_87 = arith.constant 1.000000e+00 : f32
    %332 = vector.broadcast %cst_87 : f32 to vector<4x64xf32>
    %333 = arith.addf %332, %331 : vector<4x64xf32>
    %334 = arith.divf %332, %333 : vector<4x64xf32>
    %335 = vector.extract_strided_slice %328 {offsets = [0, 64], sizes = [4, 64], strides = [1, 1]} : vector<4x256xf32> to vector<4x64xf32>
    %336 = arith.negf %335 : vector<4x64xf32>
    %337 = math.exp %336 : vector<4x64xf32>
    %cst_88 = arith.constant 1.000000e+00 : f32
    %338 = vector.broadcast %cst_88 : f32 to vector<4x64xf32>
    %339 = arith.addf %338, %337 : vector<4x64xf32>
    %340 = arith.divf %338, %339 : vector<4x64xf32>
    %341 = vector.extract_strided_slice %328 {offsets = [0, 128], sizes = [4, 64], strides = [1, 1]} : vector<4x256xf32> to vector<4x64xf32>
    %342 = math.tanh %341 : vector<4x64xf32>
    %343 = vector.extract_strided_slice %328 {offsets = [0, 192], sizes = [4, 64], strides = [1, 1]} : vector<4x256xf32> to vector<4x64xf32>
    %344 = arith.negf %343 : vector<4x64xf32>
    %345 = math.exp %344 : vector<4x64xf32>
    %cst_89 = arith.constant 1.000000e+00 : f32
    %346 = vector.broadcast %cst_89 : f32 to vector<4x64xf32>
    %347 = arith.addf %346, %345 : vector<4x64xf32>
    %348 = arith.divf %346, %347 : vector<4x64xf32>
    %349 = arith.mulf %340, %321 : vector<4x64xf32>
    %350 = arith.mulf %334, %342 : vector<4x64xf32>
    %351 = arith.addf %349, %350 : vector<4x64xf32>
    %352 = math.tanh %351 : vector<4x64xf32>
    %353 = arith.mulf %348, %352 : vector<4x64xf32>
    %354 = vector.extract_strided_slice %288 {offsets = [8, 0], sizes = [4, 256], strides = [1, 1]} : vector<32x256xf32> to vector<4x256xf32>
    %355 = vector.extract_strided_slice %290 {offsets = [20, 0], sizes = [4, 256], strides = [1, 1]} : vector<32x256xf32> to vector<4x256xf32>
    %356 = arith.addf %354, %355 : vector<4x256xf32>
    %cst_90 = arith.constant dense<0.000000e+00> : vector<4x256xf32>
    %357 = tpu.matmul %353, %291, %cst_90 {dimension_numbers = #tpu.dot_dimension_numbers<[1], [0], [0], [1], [0, 0, 1, 1], [], []>} : vector<4x64xf32>, vector<64x256xf32>, vector<4x256xf32> -> vector<4x256xf32>
    %358 = arith.addf %356, %357 : vector<4x256xf32>
    %359 = vector.extract_strided_slice %358 {offsets = [0, 0], sizes = [4, 64], strides = [1, 1]} : vector<4x256xf32> to vector<4x64xf32>
    %360 = arith.negf %359 : vector<4x64xf32>
    %361 = math.exp %360 : vector<4x64xf32>
    %cst_91 = arith.constant 1.000000e+00 : f32
    %362 = vector.broadcast %cst_91 : f32 to vector<4x64xf32>
    %363 = arith.addf %362, %361 : vector<4x64xf32>
    %364 = arith.divf %362, %363 : vector<4x64xf32>
    %365 = vector.extract_strided_slice %358 {offsets = [0, 64], sizes = [4, 64], strides = [1, 1]} : vector<4x256xf32> to vector<4x64xf32>
    %366 = arith.negf %365 : vector<4x64xf32>
    %367 = math.exp %366 : vector<4x64xf32>
    %cst_92 = arith.constant 1.000000e+00 : f32
    %368 = vector.broadcast %cst_92 : f32 to vector<4x64xf32>
    %369 = arith.addf %368, %367 : vector<4x64xf32>
    %370 = arith.divf %368, %369 : vector<4x64xf32>
    %371 = vector.extract_strided_slice %358 {offsets = [0, 128], sizes = [4, 64], strides = [1, 1]} : vector<4x256xf32> to vector<4x64xf32>
    %372 = math.tanh %371 : vector<4x64xf32>
    %373 = vector.extract_strided_slice %358 {offsets = [0, 192], sizes = [4, 64], strides = [1, 1]} : vector<4x256xf32> to vector<4x64xf32>
    %374 = arith.negf %373 : vector<4x64xf32>
    %375 = math.exp %374 : vector<4x64xf32>
    %cst_93 = arith.constant 1.000000e+00 : f32
    %376 = vector.broadcast %cst_93 : f32 to vector<4x64xf32>
    %377 = arith.addf %376, %375 : vector<4x64xf32>
    %378 = arith.divf %376, %377 : vector<4x64xf32>
    %379 = arith.mulf %370, %351 : vector<4x64xf32>
    %380 = arith.mulf %364, %372 : vector<4x64xf32>
    %381 = arith.addf %379, %380 : vector<4x64xf32>
    %382 = math.tanh %381 : vector<4x64xf32>
    %383 = arith.mulf %378, %382 : vector<4x64xf32>
    %384 = vector.extract_strided_slice %288 {offsets = [12, 0], sizes = [4, 256], strides = [1, 1]} : vector<32x256xf32> to vector<4x256xf32>
    %385 = vector.extract_strided_slice %290 {offsets = [16, 0], sizes = [4, 256], strides = [1, 1]} : vector<32x256xf32> to vector<4x256xf32>
    %386 = arith.addf %384, %385 : vector<4x256xf32>
    %cst_94 = arith.constant dense<0.000000e+00> : vector<4x256xf32>
    %387 = tpu.matmul %383, %291, %cst_94 {dimension_numbers = #tpu.dot_dimension_numbers<[1], [0], [0], [1], [0, 0, 1, 1], [], []>} : vector<4x64xf32>, vector<64x256xf32>, vector<4x256xf32> -> vector<4x256xf32>
    %388 = arith.addf %386, %387 : vector<4x256xf32>
    %389 = vector.extract_strided_slice %388 {offsets = [0, 0], sizes = [4, 64], strides = [1, 1]} : vector<4x256xf32> to vector<4x64xf32>
    %390 = arith.negf %389 : vector<4x64xf32>
    %391 = math.exp %390 : vector<4x64xf32>
    %cst_95 = arith.constant 1.000000e+00 : f32
    %392 = vector.broadcast %cst_95 : f32 to vector<4x64xf32>
    %393 = arith.addf %392, %391 : vector<4x64xf32>
    %394 = arith.divf %392, %393 : vector<4x64xf32>
    %395 = vector.extract_strided_slice %388 {offsets = [0, 64], sizes = [4, 64], strides = [1, 1]} : vector<4x256xf32> to vector<4x64xf32>
    %396 = arith.negf %395 : vector<4x64xf32>
    %397 = math.exp %396 : vector<4x64xf32>
    %cst_96 = arith.constant 1.000000e+00 : f32
    %398 = vector.broadcast %cst_96 : f32 to vector<4x64xf32>
    %399 = arith.addf %398, %397 : vector<4x64xf32>
    %400 = arith.divf %398, %399 : vector<4x64xf32>
    %401 = vector.extract_strided_slice %388 {offsets = [0, 128], sizes = [4, 64], strides = [1, 1]} : vector<4x256xf32> to vector<4x64xf32>
    %402 = math.tanh %401 : vector<4x64xf32>
    %403 = vector.extract_strided_slice %388 {offsets = [0, 192], sizes = [4, 64], strides = [1, 1]} : vector<4x256xf32> to vector<4x64xf32>
    %404 = arith.negf %403 : vector<4x64xf32>
    %405 = math.exp %404 : vector<4x64xf32>
    %cst_97 = arith.constant 1.000000e+00 : f32
    %406 = vector.broadcast %cst_97 : f32 to vector<4x64xf32>
    %407 = arith.addf %406, %405 : vector<4x64xf32>
    %408 = arith.divf %406, %407 : vector<4x64xf32>
    %409 = arith.mulf %400, %381 : vector<4x64xf32>
    %410 = arith.mulf %394, %402 : vector<4x64xf32>
    %411 = arith.addf %409, %410 : vector<4x64xf32>
    %412 = math.tanh %411 : vector<4x64xf32>
    %413 = arith.mulf %408, %412 : vector<4x64xf32>
    %414 = vector.extract_strided_slice %288 {offsets = [16, 0], sizes = [4, 256], strides = [1, 1]} : vector<32x256xf32> to vector<4x256xf32>
    %415 = vector.extract_strided_slice %290 {offsets = [12, 0], sizes = [4, 256], strides = [1, 1]} : vector<32x256xf32> to vector<4x256xf32>
    %416 = arith.addf %414, %415 : vector<4x256xf32>
    %cst_98 = arith.constant dense<0.000000e+00> : vector<4x256xf32>
    %417 = tpu.matmul %413, %291, %cst_98 {dimension_numbers = #tpu.dot_dimension_numbers<[1], [0], [0], [1], [0, 0, 1, 1], [], []>} : vector<4x64xf32>, vector<64x256xf32>, vector<4x256xf32> -> vector<4x256xf32>
    %418 = arith.addf %416, %417 : vector<4x256xf32>
    %419 = vector.extract_strided_slice %418 {offsets = [0, 0], sizes = [4, 64], strides = [1, 1]} : vector<4x256xf32> to vector<4x64xf32>
    %420 = arith.negf %419 : vector<4x64xf32>
    %421 = math.exp %420 : vector<4x64xf32>
    %cst_99 = arith.constant 1.000000e+00 : f32
    %422 = vector.broadcast %cst_99 : f32 to vector<4x64xf32>
    %423 = arith.addf %422, %421 : vector<4x64xf32>
    %424 = arith.divf %422, %423 : vector<4x64xf32>
    %425 = vector.extract_strided_slice %418 {offsets = [0, 64], sizes = [4, 64], strides = [1, 1]} : vector<4x256xf32> to vector<4x64xf32>
    %426 = arith.negf %425 : vector<4x64xf32>
    %427 = math.exp %426 : vector<4x64xf32>
    %cst_100 = arith.constant 1.000000e+00 : f32
    %428 = vector.broadcast %cst_100 : f32 to vector<4x64xf32>
    %429 = arith.addf %428, %427 : vector<4x64xf32>
    %430 = arith.divf %428, %429 : vector<4x64xf32>
    %431 = vector.extract_strided_slice %418 {offsets = [0, 128], sizes = [4, 64], strides = [1, 1]} : vector<4x256xf32> to vector<4x64xf32>
    %432 = math.tanh %431 : vector<4x64xf32>
    %433 = vector.extract_strided_slice %418 {offsets = [0, 192], sizes = [4, 64], strides = [1, 1]} : vector<4x256xf32> to vector<4x64xf32>
    %434 = arith.negf %433 : vector<4x64xf32>
    %435 = math.exp %434 : vector<4x64xf32>
    %cst_101 = arith.constant 1.000000e+00 : f32
    %436 = vector.broadcast %cst_101 : f32 to vector<4x64xf32>
    %437 = arith.addf %436, %435 : vector<4x64xf32>
    %438 = arith.divf %436, %437 : vector<4x64xf32>
    %439 = arith.mulf %430, %411 : vector<4x64xf32>
    %440 = arith.mulf %424, %432 : vector<4x64xf32>
    %441 = arith.addf %439, %440 : vector<4x64xf32>
    %442 = math.tanh %441 : vector<4x64xf32>
    %443 = arith.mulf %438, %442 : vector<4x64xf32>
    %444 = vector.extract_strided_slice %288 {offsets = [20, 0], sizes = [4, 256], strides = [1, 1]} : vector<32x256xf32> to vector<4x256xf32>
    %445 = vector.extract_strided_slice %290 {offsets = [8, 0], sizes = [4, 256], strides = [1, 1]} : vector<32x256xf32> to vector<4x256xf32>
    %446 = arith.addf %444, %445 : vector<4x256xf32>
    %cst_102 = arith.constant dense<0.000000e+00> : vector<4x256xf32>
    %447 = tpu.matmul %443, %291, %cst_102 {dimension_numbers = #tpu.dot_dimension_numbers<[1], [0], [0], [1], [0, 0, 1, 1], [], []>} : vector<4x64xf32>, vector<64x256xf32>, vector<4x256xf32> -> vector<4x256xf32>
    %448 = arith.addf %446, %447 : vector<4x256xf32>
    %449 = vector.extract_strided_slice %448 {offsets = [0, 0], sizes = [4, 64], strides = [1, 1]} : vector<4x256xf32> to vector<4x64xf32>
    %450 = arith.negf %449 : vector<4x64xf32>
    %451 = math.exp %450 : vector<4x64xf32>
    %cst_103 = arith.constant 1.000000e+00 : f32
    %452 = vector.broadcast %cst_103 : f32 to vector<4x64xf32>
    %453 = arith.addf %452, %451 : vector<4x64xf32>
    %454 = arith.divf %452, %453 : vector<4x64xf32>
    %455 = vector.extract_strided_slice %448 {offsets = [0, 64], sizes = [4, 64], strides = [1, 1]} : vector<4x256xf32> to vector<4x64xf32>
    %456 = arith.negf %455 : vector<4x64xf32>
    %457 = math.exp %456 : vector<4x64xf32>
    %cst_104 = arith.constant 1.000000e+00 : f32
    %458 = vector.broadcast %cst_104 : f32 to vector<4x64xf32>
    %459 = arith.addf %458, %457 : vector<4x64xf32>
    %460 = arith.divf %458, %459 : vector<4x64xf32>
    %461 = vector.extract_strided_slice %448 {offsets = [0, 128], sizes = [4, 64], strides = [1, 1]} : vector<4x256xf32> to vector<4x64xf32>
    %462 = math.tanh %461 : vector<4x64xf32>
    %463 = vector.extract_strided_slice %448 {offsets = [0, 192], sizes = [4, 64], strides = [1, 1]} : vector<4x256xf32> to vector<4x64xf32>
    %464 = arith.negf %463 : vector<4x64xf32>
    %465 = math.exp %464 : vector<4x64xf32>
    %cst_105 = arith.constant 1.000000e+00 : f32
    %466 = vector.broadcast %cst_105 : f32 to vector<4x64xf32>
    %467 = arith.addf %466, %465 : vector<4x64xf32>
    %468 = arith.divf %466, %467 : vector<4x64xf32>
    %469 = arith.mulf %460, %441 : vector<4x64xf32>
    %470 = arith.mulf %454, %462 : vector<4x64xf32>
    %471 = arith.addf %469, %470 : vector<4x64xf32>
    %472 = math.tanh %471 : vector<4x64xf32>
    %473 = arith.mulf %468, %472 : vector<4x64xf32>
    %474 = vector.extract_strided_slice %288 {offsets = [24, 0], sizes = [4, 256], strides = [1, 1]} : vector<32x256xf32> to vector<4x256xf32>
    %475 = vector.extract_strided_slice %290 {offsets = [4, 0], sizes = [4, 256], strides = [1, 1]} : vector<32x256xf32> to vector<4x256xf32>
    %476 = arith.addf %474, %475 : vector<4x256xf32>
    %cst_106 = arith.constant dense<0.000000e+00> : vector<4x256xf32>
    %477 = tpu.matmul %473, %291, %cst_106 {dimension_numbers = #tpu.dot_dimension_numbers<[1], [0], [0], [1], [0, 0, 1, 1], [], []>} : vector<4x64xf32>, vector<64x256xf32>, vector<4x256xf32> -> vector<4x256xf32>
    %478 = arith.addf %476, %477 : vector<4x256xf32>
    %479 = vector.extract_strided_slice %478 {offsets = [0, 0], sizes = [4, 64], strides = [1, 1]} : vector<4x256xf32> to vector<4x64xf32>
    %480 = arith.negf %479 : vector<4x64xf32>
    %481 = math.exp %480 : vector<4x64xf32>
    %cst_107 = arith.constant 1.000000e+00 : f32
    %482 = vector.broadcast %cst_107 : f32 to vector<4x64xf32>
    %483 = arith.addf %482, %481 : vector<4x64xf32>
    %484 = arith.divf %482, %483 : vector<4x64xf32>
    %485 = vector.extract_strided_slice %478 {offsets = [0, 64], sizes = [4, 64], strides = [1, 1]} : vector<4x256xf32> to vector<4x64xf32>
    %486 = arith.negf %485 : vector<4x64xf32>
    %487 = math.exp %486 : vector<4x64xf32>
    %cst_108 = arith.constant 1.000000e+00 : f32
    %488 = vector.broadcast %cst_108 : f32 to vector<4x64xf32>
    %489 = arith.addf %488, %487 : vector<4x64xf32>
    %490 = arith.divf %488, %489 : vector<4x64xf32>
    %491 = vector.extract_strided_slice %478 {offsets = [0, 128], sizes = [4, 64], strides = [1, 1]} : vector<4x256xf32> to vector<4x64xf32>
    %492 = math.tanh %491 : vector<4x64xf32>
    %493 = vector.extract_strided_slice %478 {offsets = [0, 192], sizes = [4, 64], strides = [1, 1]} : vector<4x256xf32> to vector<4x64xf32>
    %494 = arith.negf %493 : vector<4x64xf32>
    %495 = math.exp %494 : vector<4x64xf32>
    %cst_109 = arith.constant 1.000000e+00 : f32
    %496 = vector.broadcast %cst_109 : f32 to vector<4x64xf32>
    %497 = arith.addf %496, %495 : vector<4x64xf32>
    %498 = arith.divf %496, %497 : vector<4x64xf32>
    %499 = arith.mulf %490, %471 : vector<4x64xf32>
    %500 = arith.mulf %484, %492 : vector<4x64xf32>
    %501 = arith.addf %499, %500 : vector<4x64xf32>
    %502 = math.tanh %501 : vector<4x64xf32>
    %503 = arith.mulf %498, %502 : vector<4x64xf32>
    %504 = vector.extract_strided_slice %288 {offsets = [28, 0], sizes = [4, 256], strides = [1, 1]} : vector<32x256xf32> to vector<4x256xf32>
    %505 = vector.extract_strided_slice %290 {offsets = [0, 0], sizes = [4, 256], strides = [1, 1]} : vector<32x256xf32> to vector<4x256xf32>
    %506 = arith.addf %504, %505 : vector<4x256xf32>
    %cst_110 = arith.constant dense<0.000000e+00> : vector<4x256xf32>
    %507 = tpu.matmul %503, %291, %cst_110 {dimension_numbers = #tpu.dot_dimension_numbers<[1], [0], [0], [1], [0, 0, 1, 1], [], []>} : vector<4x64xf32>, vector<64x256xf32>, vector<4x256xf32> -> vector<4x256xf32>
    %508 = arith.addf %506, %507 : vector<4x256xf32>
    %509 = vector.extract_strided_slice %508 {offsets = [0, 0], sizes = [4, 64], strides = [1, 1]} : vector<4x256xf32> to vector<4x64xf32>
    %510 = arith.negf %509 : vector<4x64xf32>
    %511 = math.exp %510 : vector<4x64xf32>
    %cst_111 = arith.constant 1.000000e+00 : f32
    %512 = vector.broadcast %cst_111 : f32 to vector<4x64xf32>
    %513 = arith.addf %512, %511 : vector<4x64xf32>
    %514 = arith.divf %512, %513 : vector<4x64xf32>
    %515 = vector.extract_strided_slice %508 {offsets = [0, 64], sizes = [4, 64], strides = [1, 1]} : vector<4x256xf32> to vector<4x64xf32>
    %516 = arith.negf %515 : vector<4x64xf32>
    %517 = math.exp %516 : vector<4x64xf32>
    %cst_112 = arith.constant 1.000000e+00 : f32
    %518 = vector.broadcast %cst_112 : f32 to vector<4x64xf32>
    %519 = arith.addf %518, %517 : vector<4x64xf32>
    %520 = arith.divf %518, %519 : vector<4x64xf32>
    %521 = vector.extract_strided_slice %508 {offsets = [0, 128], sizes = [4, 64], strides = [1, 1]} : vector<4x256xf32> to vector<4x64xf32>
    %522 = math.tanh %521 : vector<4x64xf32>
    %523 = vector.extract_strided_slice %508 {offsets = [0, 192], sizes = [4, 64], strides = [1, 1]} : vector<4x256xf32> to vector<4x64xf32>
    %524 = arith.negf %523 : vector<4x64xf32>
    %525 = math.exp %524 : vector<4x64xf32>
    %cst_113 = arith.constant 1.000000e+00 : f32
    %526 = vector.broadcast %cst_113 : f32 to vector<4x64xf32>
    %527 = arith.addf %526, %525 : vector<4x64xf32>
    %528 = arith.divf %526, %527 : vector<4x64xf32>
    %529 = arith.mulf %520, %501 : vector<4x64xf32>
    %530 = arith.mulf %514, %522 : vector<4x64xf32>
    %531 = arith.addf %529, %530 : vector<4x64xf32>
    %532 = math.tanh %531 : vector<4x64xf32>
    %533 = arith.mulf %528, %532 : vector<4x64xf32>
    %534 = vector.extract_strided_slice %533 {offsets = [0, 0], sizes = [4, 32], strides = [1, 1]} : vector<4x64xf32> to vector<4x32xf32>
    %535 = vector.extract_strided_slice %323 {offsets = [0, 32], sizes = [4, 32], strides = [1, 1]} : vector<4x64xf32> to vector<4x32xf32>
    %536 = tpu.concatenate %534, %535 in 1 : vector<4x32xf32>, vector<4x32xf32> -> vector<4x64xf32>
    %c0_114 = arith.constant 0 : index
    %c0_115 = arith.constant 0 : index
    %537 = vector.load %arg9[%c0_114, %c0_115] : memref<64x32xf32, #tpu.memory_space<vmem>>, vector<64x32xf32>
    %cst_116 = arith.constant dense<0.000000e+00> : vector<4x32xf32>
    %538 = tpu.matmul %536, %537, %cst_116 {dimension_numbers = #tpu.dot_dimension_numbers<[1], [0], [0], [1], [0, 0, 1, 1], [], []>} : vector<4x64xf32>, vector<64x32xf32>, vector<4x32xf32> -> vector<4x32xf32>
    %c0_117 = arith.constant 0 : index
    %c0_118 = arith.constant 0 : index
    %539 = vector.load %arg10[%c0_117, %c0_118] : memref<1x32xf32, #tpu.memory_space<vmem>>, vector<1x32xf32>
    %540 = vector.broadcast %539 : vector<1x32xf32> to vector<4x32xf32>
    %541 = arith.addf %538, %540 : vector<4x32xf32>
    %cst_119 = arith.constant 0.000000e+00 : f32
    %542 = vector.broadcast %cst_119 : f32 to vector<4x32xf32>
    %543 = arith.maximumf %541, %542 : vector<4x32xf32>
    %c0_120 = arith.constant 0 : index
    %c0_121 = arith.constant 0 : index
    %544 = vector.load %arg11[%c0_120, %c0_121] : memref<32x1xf32, #tpu.memory_space<vmem>>, vector<32x1xf32>
    %cst_122 = arith.constant dense<0.000000e+00> : vector<4x1xf32>
    %545 = tpu.matmul %543, %544, %cst_122 {dimension_numbers = #tpu.dot_dimension_numbers<[1], [0], [0], [1], [0, 0, 1, 1], [], []>} : vector<4x32xf32>, vector<32x1xf32>, vector<4x1xf32> -> vector<4x1xf32>
    %c0_123 = arith.constant 0 : index
    %c0_124 = arith.constant 0 : index
    %546 = vector.load %arg12[%c0_123, %c0_124] : memref<1x1xf32, #tpu.memory_space<vmem>>, vector<1x1xf32>
    %547 = vector.broadcast %546 : vector<1x1xf32> to vector<4x1xf32>
    %548 = arith.addf %545, %547 : vector<4x1xf32>
    %c0_125 = arith.constant 0 : index
    %c0_126 = arith.constant 0 : index
    %549 = vector.load %arg13[%c0_125, %c0_126] : memref<4x1xf32, #tpu.memory_space<vmem>>, vector<4x1xf32>
    tpu.vector_store %arg13[%c0_125, %c0_126], %548 {strides = array<i32>} : memref<4x1xf32, #tpu.memory_space<vmem>>, vector<4x1xf32>,
    return
  }
}

</mosaic_0001>

<llo_original>
// kernel: lstm_module_forward_pallas.1
$region0: #{lstm_module_forward_pallas.1}
  #allocation0 [shape = 'u32[]', space=smem, size = 0x4, offset = 0x4, fixed_abs, tag = 'smem constant byte address 0x4 - core index']
  #allocation1 [shape = 'u32[144,128]{1,0:T(1,128)}', space=vmem, size = 0x12000, scoped, tag = 'internal scratch']
  #allocation2 [shape = 'f32[32,64]{1,0:T(8,128)}', space=vmem, size = 0x4000, scoped, tag = 'scratch operand']
  #allocation3 [shape = 'f32[1,1]{1,0:T(1,128)S(1)}', space=vmem, size = 0x200, scoped, tag = 'scoped memory for lstm_module_forward_pallas.1']
  %s0 = inlined_call_operand.hbm [shape: f32[32,8], index: 0, kind: input, shape index: {}]
  %s1 = inlined_call_operand.vmem [shape: f32[8,256], index: 1, kind: input, shape index: {}]
  %s2 = inlined_call_operand.vmem [shape: f32[8,256], index: 2, kind: input, shape index: {}]
  %s3 = inlined_call_operand.vmem [shape: f32[1,256], index: 3, kind: input, shape index: {}]
  %s4 = inlined_call_operand.vmem [shape: f32[64,256], index: 4, kind: input, shape index: {}]
  %s5 = inlined_call_operand.hbm [shape: f32[64,256], index: 5, kind: input, shape index: {}]
  %s6 = inlined_call_operand.hbm [shape: f32[64,256], index: 6, kind: input, shape index: {}]
  %s7 = inlined_call_operand.hbm [shape: f32[1,256], index: 7, kind: input, shape index: {}]
  %s8 = inlined_call_operand.hbm [shape: f32[64,256], index: 8, kind: input, shape index: {}]
  %s9 = inlined_call_operand.vmem [shape: f32[64,32], index: 9, kind: input, shape index: {}]
  %s10 = inlined_call_operand.vmem [shape: f32[1,32], index: 10, kind: input, shape index: {}]
  %s11 = inlined_call_operand.vmem [shape: f32[32,1], index: 11, kind: input, shape index: {}]
  %s12 = inlined_call_operand.<no memory space> [shape: f32[1,1], index: 12, kind: input, shape index: {}]
  %s13 = inlined_call_operand.vmem [shape: f32[4,1], index: 13, kind: output, shape index: {}]
  %s14 = sld [smem:[#allocation0]]
  $region82: #{lstm_module_forward_pallas.1} parent=0
    _
  %s16 = ssub.s32 1, %s14
  %s17 = scalar_select 0, %s16, %s14
  %v18 = vstv %s12
  %19 = vst [vmem:[#allocation3] sm:$0x1] %v18
  $region1: #{lstm_module_forward_pallas.1} parent=0
    #allocation4 [shape = 'u8[16384]{0}', space=vmem, size = 0x4000, scoped, tag = 'input window, operand 0, single buffered']
    #allocation5 [shape = 's32[1]{0}', space=sflag, size = 0x4, scoped, tag = 'scoped memory for lstm_module_forward_pallas.1']
    #allocation6 [shape = 'u8[65536]{0}', space=vmem, size = 0x10000, scoped, tag = 'input window, operand 5, single buffered']
    #allocation7 [shape = 's32[1]{0}', space=sflag, size = 0x4, scoped, tag = 'scoped memory for lstm_module_forward_pallas.1']
    #allocation8 [shape = 'u8[65536]{0}', space=vmem, size = 0x10000, scoped, tag = 'input window, operand 6, single buffered']
    #allocation9 [shape = 'u8[1024]{0}', space=vmem, size = 0x400, scoped, tag = 'input window, operand 7, single buffered']
    #allocation10 [shape = 's32[1]{0}', space=sflag, size = 0x4, scoped, tag = 'scoped memory for lstm_module_forward_pallas.1']
    #allocation11 [shape = 'u8[65536]{0}', space=vmem, size = 0x10000, scoped, tag = 'input window, operand 8, single buffered']
    %20 = vsyncpa [#allocation5], 0
    %21 = vsyncpa [#allocation7], 0
    %22 = vsyncpa [#allocation10], 0
    // Predicated region
    $region2: #{lstm_module_forward_pallas.1} parent=1 // pred_check
      _
    $region3: #{lstm_module_forward_pallas.1} parent=1 // pred_check_branch
      %24 = sbr.rel (0) target = $region5
    $region4: #{lstm_module_forward_pallas.1} parent=1 // pred_region
      %s26 = ssub.s32 512, 512
      %27 = vsyncadd [#allocation5], %s26
      %s28 = sshll.u32 [#allocation4], 4
      %s29 = int_to_ptr.vmem [resolvable:$true] %s28
      %34 = dma.hbm_to_vmem [thread:$0]  %s0, 512, %s29, [#allocation5], 128, 128, 8
    $region5: #{lstm_module_forward_pallas.1} parent=1 // pred_fallthru
      _
    // Predicated region
    $region6: #{lstm_module_forward_pallas.1} parent=1 // pred_check
      _
    $region7: #{lstm_module_forward_pallas.1} parent=1 // pred_check_branch
      %36 = sbr.rel (0) target = $region9
    $region8: #{lstm_module_forward_pallas.1} parent=1 // pred_region
      _
    $region9: #{lstm_module_forward_pallas.1} parent=1 // pred_fallthru
      _
    // Predicated region
    $region10: #{lstm_module_forward_pallas.1} parent=1 // pred_check
      _
    $region11: #{lstm_module_forward_pallas.1} parent=1 // pred_check_branch
      %38 = sbr.rel (0) target = $region13
    $region12: #{lstm_module_forward_pallas.1} parent=1 // pred_region
      _
    $region13: #{lstm_module_forward_pallas.1} parent=1 // pred_fallthru
      _
    // Predicated region
    $region14: #{lstm_module_forward_pallas.1} parent=1 // pred_check
      _
    $region15: #{lstm_module_forward_pallas.1} parent=1 // pred_check_branch
      %40 = sbr.rel (0) target = $region17
    $region16: #{lstm_module_forward_pallas.1} parent=1 // pred_region
      _
    $region17: #{lstm_module_forward_pallas.1} parent=1 // pred_fallthru
      _
    // Predicated region
    $region18: #{lstm_module_forward_pallas.1} parent=1 // pred_check
      _
    $region19: #{lstm_module_forward_pallas.1} parent=1 // pred_check_branch
      %42 = sbr.rel (0) target = $region21
    $region20: #{lstm_module_forward_pallas.1} parent=1 // pred_region
      _
    $region21: #{lstm_module_forward_pallas.1} parent=1 // pred_fallthru
      _
    // Predicated region
    $region22: #{lstm_module_forward_pallas.1} parent=1 // pred_check
      _
    $region23: #{lstm_module_forward_pallas.1} parent=1 // pred_check_branch
      %44 = sbr.rel (0) target = $region25
    $region24: #{lstm_module_forward_pallas.1} parent=1 // pred_region
      %s46 = ssub.s32 2048, 2048
      %47 = vsyncadd [#allocation7], %s46
      %s48 = sshll.u32 [#allocation6], 4
      %s49 = int_to_ptr.vmem [resolvable:$true] %s48
      %54 = dma.hbm_to_vmem [thread:$0]  %s5, 2048, %s49, [#allocation7], 256, 256, 16
    $region25: #{lstm_module_forward_pallas.1} parent=1 // pred_fallthru
      _
    // Predicated region
    $region26: #{lstm_module_forward_pallas.1} parent=1 // pred_check
      _
    $region27: #{lstm_module_forward_pallas.1} parent=1 // pred_check_branch
      %56 = sbr.rel (0) target = $region29
    $region28: #{lstm_module_forward_pallas.1} parent=1 // pred_region
      %s58 = ssub.s32 2048, 2048
      %59 = vsyncadd [#allocation7], %s58
      %s60 = sshll.u32 [#allocation8], 4
      %s61 = int_to_ptr.vmem [resolvable:$true] %s60
      %66 = dma.hbm_to_vmem [thread:$0]  %s6, 2048, %s61, [#allocation7], 256, 256, 16
    $region29: #{lstm_module_forward_pallas.1} parent=1 // pred_fallthru
      _
    // Predicated region
    $region30: #{lstm_module_forward_pallas.1} parent=1 // pred_check
      _
    $region31: #{lstm_module_forward_pallas.1} parent=1 // pred_check_branch
      %68 = sbr.rel (0) target = $region33
    $region32: #{lstm_module_forward_pallas.1} parent=1 // pred_region
      %s70 = ssub.s32 32, 32
      %71 = vsyncadd [#allocation10], %s70
      %s73 = sshll.u32 [#allocation9], 4
      %s74 = int_to_ptr.vmem [resolvable:$true] %s73
      %76 = dma.hbm_to_vmem [thread:$0]  %s7, 32, %s74, [#allocation10]
    $region33: #{lstm_module_forward_pallas.1} parent=1 // pred_fallthru
      _
    // Predicated region
    $region34: #{lstm_module_forward_pallas.1} parent=1 // pred_check
      _
    $region35: #{lstm_module_forward_pallas.1} parent=1 // pred_check_branch
      %78 = sbr.rel (0) target = $region37
    $region36: #{lstm_module_forward_pallas.1} parent=1 // pred_region
      %s80 = ssub.s32 2048, 2048
      %81 = vsyncadd [#allocation10], %s80
      %s82 = sshll.u32 [#allocation11], 4
      %s83 = int_to_ptr.vmem [resolvable:$true] %s82
      %88 = dma.hbm_to_vmem [thread:$0]  %s8, 2048, %s83, [#allocation10], 256, 256, 16
    $region37: #{lstm_module_forward_pallas.1} parent=1 // pred_fallthru
      _
    // Predicated region
    $region38: #{lstm_module_forward_pallas.1} parent=1 // pred_check
      _
    $region39: #{lstm_module_forward_pallas.1} parent=1 // pred_check_branch
      %90 = sbr.rel (0) target = $region41
    $region40: #{lstm_module_forward_pallas.1} parent=1 // pred_region
      _
    $region41: #{lstm_module_forward_pallas.1} parent=1 // pred_fallthru
      _
    // Predicated region
    $region42: #{lstm_module_forward_pallas.1} parent=1 // pred_check
      _
    $region43: #{lstm_module_forward_pallas.1} parent=1 // pred_check_branch
      %92 = sbr.rel (0) target = $region45
    $region44: #{lstm_module_forward_pallas.1} parent=1 // pred_region
      _
    $region45: #{lstm_module_forward_pallas.1} parent=1 // pred_fallthru
      _
    // Predicated region
    $region46: #{lstm_module_forward_pallas.1} parent=1 // pred_check
      _
    $region47: #{lstm_module_forward_pallas.1} parent=1 // pred_check_branch
      %94 = sbr.rel (0) target = $region49
    $region48: #{lstm_module_forward_pallas.1} parent=1 // pred_region
      _
    $region49: #{lstm_module_forward_pallas.1} parent=1 // pred_fallthru
      _
    // Predicated region
    $region50: #{lstm_module_forward_pallas.1} parent=1 // pred_check
      _
    $region51: #{lstm_module_forward_pallas.1} parent=1 // pred_check_branch
      %96 = sbr.rel (0) target = $region53
    $region52: #{lstm_module_forward_pallas.1} parent=1 // pred_region
      _
    $region53: #{lstm_module_forward_pallas.1} parent=1 // pred_fallthru
      _
    // Predicated region
    $region54: #{lstm_module_forward_pallas.1} parent=1 // pred_check
      _
    $region55: #{lstm_module_forward_pallas.1} parent=1 // pred_check_branch
      %98 = sbr.rel (0) target = $region57
    $region56: #{lstm_module_forward_pallas.1} parent=1 // pred_region
      %99 = dma.done [#allocation5], 512
    $region57: #{lstm_module_forward_pallas.1} parent=1 // pred_fallthru
      _
    // Predicated region
    $region58: #{lstm_module_forward_pallas.1} parent=1 // pred_check
      _
    $region59: #{lstm_module_forward_pallas.1} parent=1 // pred_check_branch
      %101 = sbr.rel (0) target = $region61
    $region60: #{lstm_module_forward_pallas.1} parent=1 // pred_region
      %102 = dma.done [#allocation7], 2048
    $region61: #{lstm_module_forward_pallas.1} parent=1 // pred_fallthru
      _
    // Predicated region
    $region62: #{lstm_module_forward_pallas.1} parent=1 // pred_check
      _
    $region63: #{lstm_module_forward_pallas.1} parent=1 // pred_check_branch
      %104 = sbr.rel (0) target = $region65
    $region64: #{lstm_module_forward_pallas.1} parent=1 // pred_region
      %105 = dma.done [#allocation7], 2048
    $region65: #{lstm_module_forward_pallas.1} parent=1 // pred_fallthru
      _
    // Predicated region
    $region66: #{lstm_module_forward_pallas.1} parent=1 // pred_check
      _
    $region67: #{lstm_module_forward_pallas.1} parent=1 // pred_check_branch
      %107 = sbr.rel (0) target = $region69
    $region68: #{lstm_module_forward_pallas.1} parent=1 // pred_region
      %108 = dma.done [#allocation10], 32
    $region69: #{lstm_module_forward_pallas.1} parent=1 // pred_fallthru
      _
    // Predicated region
    $region70: #{lstm_module_forward_pallas.1} parent=1 // pred_check
      _
    $region71: #{lstm_module_forward_pallas.1} parent=1 // pred_check_branch
      %110 = sbr.rel (0) target = $region73
    $region72: #{lstm_module_forward_pallas.1} parent=1 // pred_region
      %111 = dma.done [#allocation10], 2048
    $region73: #{lstm_module_forward_pallas.1} parent=1 // pred_fallthru
      _
    %v112 = vld [vmem:[#allocation4] sm:$0xff]
    %v113 = vld [vmem:[#allocation4 + $0x8] sm:$0xff]
    %v114 = vld [vmem:[#allocation4 + $0x10] sm:$0xff]
    %v115 = vld [vmem:[#allocation4 + $0x18] sm:$0xff]
    %v116 = vld [vmem:[%s1] sm:$0xff]
    %v117 = vld [vmem:[%s1 + $0x8] sm:$0xff]
    %v118 = vld [vmem:[%s3] sm:$0x3]
    %v120 = vlaneseq
    %v121 = vshrl.u32 %v120, 7
    %v122 = vsub.s32 0, %v121
    %v123 = vrot.slane %v118, %v122
    %v124 = vlaneseq
    %v125 = vshrl.u32 %v124, 7
    %v126 = vsub.s32 1, %v125
    %v127 = vrot.slane %v118, %v126
    %vm130 = vcmask 64512
    %v132 = vsel %vm130, %v112, 0
    %v135 = vsel %vm130, %v113, 0
    %v138 = vsel %vm130, %v114, 0
    %v141 = vsel %vm130, %v115, 0
    %143 = vmatprep.subr.mxu0 %v117
    %144 = vmatpush1.msra.mxu0 %v116
    %145 = vmatprep.subr.mxu0 0.0
    %146 = vmatpush1.msra.mxu0 0.0
    %147 = vmatprep.subr.mxu0 0.0
    %148 = vmatpush1.msra.mxu0 0.0
    %149 = vmatprep.subr.mxu0 0.0
    %150 = vmatpush1.msra.mxu0 0.0
    %151 = vmatprep.subr.mxu0 0.0
    %152 = vmatpush1.msra.mxu0 0.0
    %153 = vmatprep.subr.mxu0 0.0
    %154 = vmatpush1.msra.mxu0 0.0
    %155 = vmatprep.subr.mxu0 0.0
    %156 = vmatpush1.msra.mxu0 0.0
    %157 = vmatprep.subr.mxu0 0.0
    %158 = vmatpush1.msra.mxu0 0.0
    %159 = vmatprep.subr.mxu0 0.0
    %160 = vmatpush1.msra.mxu0 0.0
    %161 = vmatprep.subr.mxu0 0.0
    %162 = vmatpush1.msra.mxu0 0.0
    %163 = vmatprep.subr.mxu0 0.0
    %164 = vmatpush1.msra.mxu0 0.0
    %165 = vmatprep.subr.mxu0 0.0
    %166 = vmatpush1.msra.mxu0 0.0
    %167 = vmatprep.subr.mxu0 0.0
    %168 = vmatpush1.msra.mxu0 0.0
    %169 = vmatprep.subr.mxu0 0.0
    %170 = vmatpush1.msra.mxu0 0.0
    %171 = vmatprep.subr.mxu0 0.0
    %172 = vmatpush1.msra.mxu0 0.0
    %173 = vmatprep.subr.mxu0 0.0
    %174 = vmatpush1.msra.mxu0 0.0
    %175 = vmatprep.subr.mxu0 0.0
    %176 = vmatpush1.msra.mxu0 0.0
    %177 = vmatprep.subr.mxu0 0.0
    %178 = vmatpush1.msra.mxu0 0.0
    %179 = vmatprep.subr.mxu0 0.0
    %180 = vmatpush1.msra.mxu0 0.0
    %181 = vmatprep.subr.mxu0 0.0
    %182 = vmatpush1.msra.mxu0 0.0
    %183 = vmatprep.subr.mxu0 0.0
    %184 = vmatpush1.msra.mxu0 0.0
    %185 = vmatprep.subr.mxu0 0.0
    %186 = vmatpush1.msra.mxu0 0.0
    %187 = vmatprep.subr.mxu0 0.0
    %188 = vmatpush1.msra.mxu0 0.0
    %189 = vmatprep.subr.mxu0 0.0
    %190 = vmatpush1.msra.mxu0 0.0
    %191 = vmatprep.subr.mxu0 0.0
    %192 = vmatpush1.msra.mxu0 0.0
    %193 = vmatprep.subr.mxu0 0.0
    %194 = vmatpush1.msra.mxu0 0.0
    %195 = vmatprep.subr.mxu0 0.0
    %196 = vmatpush1.msra.mxu0 0.0
    %197 = vmatprep.subr.mxu0 0.0
    %198 = vmatpush1.msra.mxu0 0.0
    %199 = vmatprep.subr.mxu0 0.0
    %200 = vmatpush1.msra.mxu0 0.0
    %201 = vmatprep.subr.mxu0 0.0
    %202 = vmatpush1.msra.mxu0 0.0
    %203 = vmatprep.subr.mxu0 0.0
    %204 = vmatpush1.msra.mxu0 0.0
    %205 = vmatprep.subr.mxu0 0.0
    %206 = vmatpush1.msra.mxu0 0.0
    %207 = vmatprep.mubr.f32.mxu0 0.0
    %208 = vmatmul.mubr.f32.gmra.mrb[0].mxu0 %v132
    %v209 = vpop.f32.mrb[0].mxu0
    %v210 = vadd.f32 %v123, %v209
    %v211 = vpop.f32.mrb[0].mxu0
    %v212 = vadd.f32 %v127, %v211
    %213 = vmatprep.mubr.f32.mxu0 0.0
    %214 = vmatmul.mubr.f32.gmra.mrb[0].mxu0 %v135
    %v215 = vpop.f32.mrb[0].mxu0
    %v216 = vadd.f32 %v123, %v215
    %v217 = vpop.f32.mrb[0].mxu0
    %v218 = vadd.f32 %v127, %v217
    %219 = vmatprep.mubr.f32.mxu0 0.0
    %220 = vmatmul.mubr.f32.gmra.mrb[0].mxu0 %v138
    %v221 = vpop.f32.mrb[0].mxu0
    %v222 = vadd.f32 %v123, %v221
    %v223 = vpop.f32.mrb[0].mxu0
    %v224 = vadd.f32 %v127, %v223
    %225 = vmatprep.mubr.f32.mxu0 0.0
    %226 = vmatmul.mubr.f32.gmra.mrb[0].mxu0 %v141
    %v227 = vpop.f32.mrb[0].mxu0
    %v228 = vadd.f32 %v123, %v227
    %v229 = vpop.f32.mrb[0].mxu0
    %v230 = vadd.f32 %v127, %v229
    %231 = vdwg.mxu0
    %v232 = vld [vmem:[%s2] sm:$0xff]
    %v233 = vld [vmem:[%s2 + $0x8] sm:$0xff]
    %234 = vmatprep.subr.mxu0 %v233
    %235 = vmatpush1.msra.mxu0 %v232
    %236 = vmatprep.subr.mxu0 0.0
    %237 = vmatpush1.msra.mxu0 0.0
    %238 = vmatprep.subr.mxu0 0.0
    %239 = vmatpush1.msra.mxu0 0.0
    %240 = vmatprep.subr.mxu0 0.0
    %241 = vmatpush1.msra.mxu0 0.0
    %242 = vmatprep.subr.mxu0 0.0
    %243 = vmatpush1.msra.mxu0 0.0
    %244 = vmatprep.subr.mxu0 0.0
    %245 = vmatpush1.msra.mxu0 0.0
    %246 = vmatprep.subr.mxu0 0.0
    %247 = vmatpush1.msra.mxu0 0.0
    %248 = vmatprep.subr.mxu0 0.0
    %249 = vmatpush1.msra.mxu0 0.0
    %250 = vmatprep.subr.mxu0 0.0
    %251 = vmatpush1.msra.mxu0 0.0
    %252 = vmatprep.subr.mxu0 0.0
    %253 = vmatpush1.msra.mxu0 0.0
    %254 = vmatprep.subr.mxu0 0.0
    %255 = vmatpush1.msra.mxu0 0.0
    %256 = vmatprep.subr.mxu0 0.0
    %257 = vmatpush1.msra.mxu0 0.0
    %258 = vmatprep.subr.mxu0 0.0
    %259 = vmatpush1.msra.mxu0 0.0
    %260 = vmatprep.subr.mxu0 0.0
    %261 = vmatpush1.msra.mxu0 0.0
    %262 = vmatprep.subr.mxu0 0.0
    %263 = vmatpush1.msra.mxu0 0.0
    %264 = vmatprep.subr.mxu0 0.0
    %265 = vmatpush1.msra.mxu0 0.0
    %266 = vmatprep.subr.mxu0 0.0
    %267 = vmatpush1.msra.mxu0 0.0
    %268 = vmatprep.subr.mxu0 0.0
    %269 = vmatpush1.msra.mxu0 0.0
    %270 = vmatprep.subr.mxu0 0.0
    %271 = vmatpush1.msra.mxu0 0.0
    %272 = vmatprep.subr.mxu0 0.0
    %273 = vmatpush1.msra.mxu0 0.0
    %274 = vmatprep.subr.mxu0 0.0
    %275 = vmatpush1.msra.mxu0 0.0
    %276 = vmatprep.subr.mxu0 0.0
    %277 = vmatpush1.msra.mxu0 0.0
    %278 = vmatprep.subr.mxu0 0.0
    %279 = vmatpush1.msra.mxu0 0.0
    %280 = vmatprep.subr.mxu0 0.0
    %281 = vmatpush1.msra.mxu0 0.0
    %282 = vmatprep.subr.mxu0 0.0
    %283 = vmatpush1.msra.mxu0 0.0
    %284 = vmatprep.subr.mxu0 0.0
    %285 = vmatpush1.msra.mxu0 0.0
    %286 = vmatprep.subr.mxu0 0.0
    %287 = vmatpush1.msra.mxu0 0.0
    %288 = vmatprep.subr.mxu0 0.0
    %289 = vmatpush1.msra.mxu0 0.0
    %290 = vmatprep.subr.mxu0 0.0
    %291 = vmatpush1.msra.mxu0 0.0
    %292 = vmatprep.subr.mxu0 0.0
    %293 = vmatpush1.msra.mxu0 0.0
    %294 = vmatprep.subr.mxu0 0.0
    %295 = vmatpush1.msra.mxu0 0.0
    %296 = vmatprep.subr.mxu0 0.0
    %297 = vmatpush1.msra.mxu0 0.0
    %298 = vmatprep.mubr.f32.mxu0 0.0
    %299 = vmatmul.mubr.f32.gmra.mrb[0].mxu0 %v132
    %v300 = vpop.f32.mrb[0].mxu0
    %v301 = vadd.f32 0.0, %v300
    %v302 = vpop.f32.mrb[0].mxu0
    %v303 = vadd.f32 0.0, %v302
    %304 = vmatprep.mubr.f32.mxu0 0.0
    %305 = vmatmul.mubr.f32.gmra.mrb[0].mxu0 %v135
    %v306 = vpop.f32.mrb[0].mxu0
    %v307 = vadd.f32 0.0, %v306
    %v308 = vpop.f32.mrb[0].mxu0
    %v309 = vadd.f32 0.0, %v308
    %310 = vmatprep.mubr.f32.mxu0 0.0
    %311 = vmatmul.mubr.f32.gmra.mrb[0].mxu0 %v138
    %v312 = vpop.f32.mrb[0].mxu0
    %v313 = vadd.f32 0.0, %v312
    %v314 = vpop.f32.mrb[0].mxu0
    %v315 = vadd.f32 0.0, %v314
    %316 = vmatprep.mubr.f32.mxu0 0.0
    %317 = vmatmul.mubr.f32.gmra.mrb[0].mxu0 %v141
    %v318 = vpop.f32.mrb[0].mxu0
    %v319 = vadd.f32 0.0, %v318
    %v320 = vpop.f32.mrb[0].mxu0
    %v321 = vadd.f32 0.0, %v320
    %322 = vdwg.mxu0
    %v323 = vld [vmem:[%s4] sm:$0xff]
    %v324 = vld [vmem:[%s4 + $0x8] sm:$0xff]
    %v325 = vld [vmem:[%s4 + $0x10] sm:$0xff]
    %v326 = vld [vmem:[%s4 + $0x18] sm:$0xff]
    %v327 = vld [vmem:[%s4 + $0x20] sm:$0xff]
    %v328 = vld [vmem:[%s4 + $0x28] sm:$0xff]
    %v329 = vld [vmem:[%s4 + $0x30] sm:$0xff]
    %v330 = vld [vmem:[%s4 + $0x38] sm:$0xff]
    %v331 = vld [vmem:[%s4 + $0x40] sm:$0xff]
    %v332 = vld [vmem:[%s4 + $0x48] sm:$0xff]
    %v333 = vld [vmem:[%s4 + $0x50] sm:$0xff]
    %v334 = vld [vmem:[%s4 + $0x58] sm:$0xff]
    %v335 = vld [vmem:[%s4 + $0x60] sm:$0xff]
    %v336 = vld [vmem:[%s4 + $0x68] sm:$0xff]
    %v337 = vld [vmem:[%s4 + $0x70] sm:$0xff]
    %v338 = vld [vmem:[%s4 + $0x78] sm:$0xff]
    %v341 = vrot.slane %v319, 4
    %v342 = vrot.slane %v321, 4
    %v345 = vadd.f32 %v210, %v341
    %v346 = vadd.f32 %v212, %v342
    %vm347 = vcmask 523264
    %v349 = vsel %vm347, 0.0, 0
    %351 = vmatprep.subr.mxu0 %v324
    %352 = vmatpush1.msra.mxu0 %v323
    %353 = vmatprep.subr.mxu0 %v326
    %354 = vmatpush1.msra.mxu0 %v325
    %355 = vmatprep.subr.mxu0 %v328
    %356 = vmatpush1.msra.mxu0 %v327
    %357 = vmatprep.subr.mxu0 %v330
    %358 = vmatpush1.msra.mxu0 %v329
    %359 = vmatprep.subr.mxu0 %v332
    %360 = vmatpush1.msra.mxu0 %v331
    %361 = vmatprep.subr.mxu0 %v334
    %362 = vmatpush1.msra.mxu0 %v333
    %363 = vmatprep.subr.mxu0 %v336
    %364 = vmatpush1.msra.mxu0 %v335
    %365 = vmatprep.subr.mxu0 %v338
    %366 = vmatpush1.msra.mxu0 %v337
    %367 = vmatprep.subr.mxu0 0.0
    %368 = vmatpush1.msra.mxu0 0.0
    %369 = vmatprep.subr.mxu0 0.0
    %370 = vmatpush1.msra.mxu0 0.0
    %371 = vmatprep.subr.mxu0 0.0
    %372 = vmatpush1.msra.mxu0 0.0
    %373 = vmatprep.subr.mxu0 0.0
    %374 = vmatpush1.msra.mxu0 0.0
    %375 = vmatprep.subr.mxu0 0.0
    %376 = vmatpush1.msra.mxu0 0.0
    %377 = vmatprep.subr.mxu0 0.0
    %378 = vmatpush1.msra.mxu0 0.0
    %379 = vmatprep.subr.mxu0 0.0
    %380 = vmatpush1.msra.mxu0 0.0
    %381 = vmatprep.subr.mxu0 0.0
    %382 = vmatpush1.msra.mxu0 0.0
    %383 = vmatprep.subr.mxu0 0.0
    %384 = vmatpush1.msra.mxu0 0.0
    %385 = vmatprep.subr.mxu0 0.0
    %386 = vmatpush1.msra.mxu0 0.0
    %387 = vmatprep.subr.mxu0 0.0
    %388 = vmatpush1.msra.mxu0 0.0
    %389 = vmatprep.subr.mxu0 0.0
    %390 = vmatpush1.msra.mxu0 0.0
    %391 = vmatprep.subr.mxu0 0.0
    %392 = vmatpush1.msra.mxu0 0.0
    %393 = vmatprep.subr.mxu0 0.0
    %394 = vmatpush1.msra.mxu0 0.0
    %395 = vmatprep.subr.mxu0 0.0
    %396 = vmatpush1.msra.mxu0 0.0
    %397 = vmatprep.subr.mxu0 0.0
    %398 = vmatpush1.msra.mxu0 0.0
    %399 = vmatprep.subr.mxu0 0.0
    %400 = vmatpush1.msra.mxu0 0.0
    %401 = vmatprep.subr.mxu0 0.0
    %402 = vmatpush1.msra.mxu0 0.0
    %403 = vmatprep.subr.mxu0 0.0
    %404 = vmatpush1.msra.mxu0 0.0
    %405 = vmatprep.subr.mxu0 0.0
    %406 = vmatpush1.msra.mxu0 0.0
    %407 = vmatprep.subr.mxu0 0.0
    %408 = vmatpush1.msra.mxu0 0.0
    %409 = vmatprep.subr.mxu0 0.0
    %410 = vmatpush1.msra.mxu0 0.0
    %411 = vmatprep.subr.mxu0 0.0
    %412 = vmatpush1.msra.mxu0 0.0
    %413 = vmatprep.subr.mxu0 0.0
    %414 = vmatpush1.msra.mxu0 0.0
    %415 = vmatprep.mubr.f32.mxu0 0.0
    %416 = vmatmul.mubr.f32.gmra.mrb[0].mxu0 %v349
    %v417 = vpop.f32.mrb[0].mxu0
    %v418 = vadd.f32 0.0, %v417
    %v419 = vpop.f32.mrb[0].mxu0
    %v420 = vadd.f32 0.0, %v419
    %421 = vdwg.mxu0
    %v422 = vadd.f32 %v345, %v418
    %v423 = vadd.f32 %v346, %v420
    %v424 = vxor.u32 %v422, 2147483648
    %v425 = vmul.f32 %v424, 1.442695
    %v426 = vpow.pop %v425
    %v427 = vadd.f32 %v426, 1.0
    %v428 = vrcp.pop %v427
    %v429 = vmul.f32 1.0, %v428
    %v430 = vtanh.pop %v423
    %v431 = vxor.u32 %v423, 2147483648
    %v432 = vmul.f32 %v431, 1.442695
    %v433 = vpow.pop %v432
    %v434 = vadd.f32 %v433, 1.0
    %v435 = vrcp.pop %v434
    %v436 = vmul.f32 1.0, %v435
    %v437 = vmul.f32 %v429, 0.0
    %v438 = vmul.f32 %v429, %v430
    %440 = vrot.lane.b32.xlu0 %v438, 64
    %v441 = vpop.permute.xlu0 %440
    %v443 = vadd.f32 %v437, %v441
    %v444 = vtanh.pop %v443
    %v445 = vmul.f32 %v436, %v444
    %447 = vrot.lane.b32.xlu0 %v445, 64
    %v448 = vpop.permute.xlu0 %447
    %v449 = vsel %vm347, %v448, 0
    %451 = vmatprep.subr.mxu0 %v324
    %452 = vmatpush1.msra.mxu0 %v323
    %453 = vmatprep.subr.mxu0 %v326
    %454 = vmatpush1.msra.mxu0 %v325
    %455 = vmatprep.subr.mxu0 %v328
    %456 = vmatpush1.msra.mxu0 %v327
    %457 = vmatprep.subr.mxu0 %v330
    %458 = vmatpush1.msra.mxu0 %v329
    %459 = vmatprep.subr.mxu0 %v332
    %460 = vmatpush1.msra.mxu0 %v331
    %461 = vmatprep.subr.mxu0 %v334
    %462 = vmatpush1.msra.mxu0 %v333
    %463 = vmatprep.subr.mxu0 %v336
    %464 = vmatpush1.msra.mxu0 %v335
    %465 = vmatprep.subr.mxu0 %v338
    %466 = vmatpush1.msra.mxu0 %v337
    %467 = vmatprep.subr.mxu0 0.0
    %468 = vmatpush1.msra.mxu0 0.0
    %469 = vmatprep.subr.mxu0 0.0
    %470 = vmatpush1.msra.mxu0 0.0
    %471 = vmatprep.subr.mxu0 0.0
    %472 = vmatpush1.msra.mxu0 0.0
    %473 = vmatprep.subr.mxu0 0.0
    %474 = vmatpush1.msra.mxu0 0.0
    %475 = vmatprep.subr.mxu0 0.0
    %476 = vmatpush1.msra.mxu0 0.0
    %477 = vmatprep.subr.mxu0 0.0
    %478 = vmatpush1.msra.mxu0 0.0
    %479 = vmatprep.subr.mxu0 0.0
    %480 = vmatpush1.msra.mxu0 0.0
    %481 = vmatprep.subr.mxu0 0.0
    %482 = vmatpush1.msra.mxu0 0.0
    %483 = vmatprep.subr.mxu0 0.0
    %484 = vmatpush1.msra.mxu0 0.0
    %485 = vmatprep.subr.mxu0 0.0
    %486 = vmatpush1.msra.mxu0 0.0
    %487 = vmatprep.subr.mxu0 0.0
    %488 = vmatpush1.msra.mxu0 0.0
    %489 = vmatprep.subr.mxu0 0.0
    %490 = vmatpush1.msra.mxu0 0.0
    %491 = vmatprep.subr.mxu0 0.0
    %492 = vmatpush1.msra.mxu0 0.0
    %493 = vmatprep.subr.mxu0 0.0
    %494 = vmatpush1.msra.mxu0 0.0
    %495 = vmatprep.subr.mxu0 0.0
    %496 = vmatpush1.msra.mxu0 0.0
    %497 = vmatprep.subr.mxu0 0.0
    %498 = vmatpush1.msra.mxu0 0.0
    %499 = vmatprep.subr.mxu0 0.0
    %500 = vmatpush1.msra.mxu0 0.0
    %501 = vmatprep.subr.mxu0 0.0
    %502 = vmatpush1.msra.mxu0 0.0
    %503 = vmatprep.subr.mxu0 0.0
    %504 = vmatpush1.msra.mxu0 0.0
    %505 = vmatprep.subr.mxu0 0.0
    %506 = vmatpush1.msra.mxu0 0.0
    %507 = vmatprep.subr.mxu0 0.0
    %508 = vmatpush1.msra.mxu0 0.0
    %509 = vmatprep.subr.mxu0 0.0
    %510 = vmatpush1.msra.mxu0 0.0
    %511 = vmatprep.subr.mxu0 0.0
    %512 = vmatpush1.msra.mxu0 0.0
    %513 = vmatprep.subr.mxu0 0.0
    %514 = vmatpush1.msra.mxu0 0.0
    %515 = vmatprep.mubr.f32.mxu0 0.0
    %516 = vmatmul.mubr.f32.gmra.mrb[0].mxu0 %v449
    %v517 = vpop.f32.mrb[0].mxu0
    %v518 = vadd.f32 0.0, %v517
    %v519 = vpop.f32.mrb[0].mxu0
    %v520 = vadd.f32 0.0, %v519
    %521 = vdwg.mxu0
    %v524 = vrot.slane %v518, 4
    %v525 = vrot.slane %v520, 4
    %v528 = vadd.f32 %v345, %v524
    %v529 = vadd.f32 %v346, %v525
    %v530 = vxor.u32 %v528, 2147483648
    %v531 = vmul.f32 %v530, 1.442695
    %v532 = vpow.pop %v531
    %v533 = vadd.f32 %v532, 1.0
    %v534 = vrcp.pop %v533
    %v535 = vmul.f32 1.0, %v534
    %v536 = vtanh.pop %v529
    %v537 = vxor.u32 %v529, 2147483648
    %v538 = vmul.f32 %v537, 1.442695
    %v539 = vpow.pop %v538
    %v540 = vadd.f32 %v539, 1.0
    %v541 = vrcp.pop %v540
    %v542 = vmul.f32 1.0, %v541
    %v544 = vrot.slane %v443, 4
    %v546 = vmul.f32 %v535, %v544
    %v547 = vmul.f32 %v535, %v536
    %549 = vrot.lane.b32.xlu0 %v547, 64
    %v550 = vpop.permute.xlu0 %549
    %v552 = vadd.f32 %v546, %v550
    %v553 = vtanh.pop %v552
    %v554 = vmul.f32 %v542, %v553
    %v557 = vrot.slane %v313, 4
    %v558 = vrot.slane %v315, 4
    %v561 = vadd.f32 %v216, %v557
    %v562 = vadd.f32 %v218, %v558
    %v564 = vrot.slane %v554, 4
    %565 = vrot.lane.b32.xlu0 %v564, 64
    %v566 = vpop.permute.xlu0 %565
    %v567 = vsel %vm347, %v566, 0
    %569 = vmatprep.subr.mxu0 %v324
    %570 = vmatpush1.msra.mxu0 %v323
    %571 = vmatprep.subr.mxu0 %v326
    %572 = vmatpush1.msra.mxu0 %v325
    %573 = vmatprep.subr.mxu0 %v328
    %574 = vmatpush1.msra.mxu0 %v327
    %575 = vmatprep.subr.mxu0 %v330
    %576 = vmatpush1.msra.mxu0 %v329
    %577 = vmatprep.subr.mxu0 %v332
    %578 = vmatpush1.msra.mxu0 %v331
    %579 = vmatprep.subr.mxu0 %v334
    %580 = vmatpush1.msra.mxu0 %v333
    %581 = vmatprep.subr.mxu0 %v336
    %582 = vmatpush1.msra.mxu0 %v335
    %583 = vmatprep.subr.mxu0 %v338
    %584 = vmatpush1.msra.mxu0 %v337
    %585 = vmatprep.subr.mxu0 0.0
    %586 = vmatpush1.msra.mxu0 0.0
    %587 = vmatprep.subr.mxu0 0.0
    %588 = vmatpush1.msra.mxu0 0.0
    %589 = vmatprep.subr.mxu0 0.0
    %590 = vmatpush1.msra.mxu0 0.0
    %591 = vmatprep.subr.mxu0 0.0
    %592 = vmatpush1.msra.mxu0 0.0
    %593 = vmatprep.subr.mxu0 0.0
    %594 = vmatpush1.msra.mxu0 0.0
    %595 = vmatprep.subr.mxu0 0.0
    %596 = vmatpush1.msra.mxu0 0.0
    %597 = vmatprep.subr.mxu0 0.0
    %598 = vmatpush1.msra.mxu0 0.0
    %599 = vmatprep.subr.mxu0 0.0
    %600 = vmatpush1.msra.mxu0 0.0
    %601 = vmatprep.subr.mxu0 0.0
    %602 = vmatpush1.msra.mxu0 0.0
    %603 = vmatprep.subr.mxu0 0.0
    %604 = vmatpush1.msra.mxu0 0.0
    %605 = vmatprep.subr.mxu0 0.0
    %606 = vmatpush1.msra.mxu0 0.0
    %607 = vmatprep.subr.mxu0 0.0
    %608 = vmatpush1.msra.mxu0 0.0
    %609 = vmatprep.subr.mxu0 0.0
    %610 = vmatpush1.msra.mxu0 0.0
    %611 = vmatprep.subr.mxu0 0.0
    %612 = vmatpush1.msra.mxu0 0.0
    %613 = vmatprep.subr.mxu0 0.0
    %614 = vmatpush1.msra.mxu0 0.0
    %615 = vmatprep.subr.mxu0 0.0
    %616 = vmatpush1.msra.mxu0 0.0
    %617 = vmatprep.subr.mxu0 0.0
    %618 = vmatpush1.msra.mxu0 0.0
    %619 = vmatprep.subr.mxu0 0.0
    %620 = vmatpush1.msra.mxu0 0.0
    %621 = vmatprep.subr.mxu0 0.0
    %622 = vmatpush1.msra.mxu0 0.0
    %623 = vmatprep.subr.mxu0 0.0
    %624 = vmatpush1.msra.mxu0 0.0
    %625 = vmatprep.subr.mxu0 0.0
    %626 = vmatpush1.msra.mxu0 0.0
    %627 = vmatprep.subr.mxu0 0.0
    %628 = vmatpush1.msra.mxu0 0.0
    %629 = vmatprep.subr.mxu0 0.0
    %630 = vmatpush1.msra.mxu0 0.0
    %631 = vmatprep.subr.mxu0 0.0
    %632 = vmatpush1.msra.mxu0 0.0
    %633 = vmatprep.mubr.f32.mxu0 0.0
    %634 = vmatmul.mubr.f32.gmra.mrb[0].mxu0 %v567
    %v635 = vpop.f32.mrb[0].mxu0
    %v636 = vadd.f32 0.0, %v635
    %v637 = vpop.f32.mrb[0].mxu0
    %v638 = vadd.f32 0.0, %v637
    %639 = vdwg.mxu0
    %v640 = vadd.f32 %v561, %v636
    %v641 = vadd.f32 %v562, %v638
    %v642 = vxor.u32 %v640, 2147483648
    %v643 = vmul.f32 %v642, 1.442695
    %v644 = vpow.pop %v643
    %v645 = vadd.f32 %v644, 1.0
    %v646 = vrcp.pop %v645
    %v647 = vmul.f32 1.0, %v646
    %v648 = vtanh.pop %v641
    %v649 = vxor.u32 %v641, 2147483648
    %v650 = vmul.f32 %v649, 1.442695
    %v651 = vpow.pop %v650
    %v652 = vadd.f32 %v651, 1.0
    %v653 = vrcp.pop %v652
    %v654 = vmul.f32 1.0, %v653
    %v656 = vrot.slane %v552, 4
    %v658 = vmul.f32 %v647, %v656
    %v659 = vmul.f32 %v647, %v648
    %661 = vrot.lane.b32.xlu0 %v659, 64
    %v662 = vpop.permute.xlu0 %661
    %v664 = vadd.f32 %v658, %v662
    %v665 = vtanh.pop %v664
    %v666 = vmul.f32 %v654, %v665
    %668 = vrot.lane.b32.xlu0 %v666, 64
    %v669 = vpop.permute.xlu0 %668
    %v670 = vsel %vm347, %v669, 0
    %672 = vmatprep.subr.mxu0 %v324
    %673 = vmatpush1.msra.mxu0 %v323
    %674 = vmatprep.subr.mxu0 %v326
    %675 = vmatpush1.msra.mxu0 %v325
    %676 = vmatprep.subr.mxu0 %v328
    %677 = vmatpush1.msra.mxu0 %v327
    %678 = vmatprep.subr.mxu0 %v330
    %679 = vmatpush1.msra.mxu0 %v329
    %680 = vmatprep.subr.mxu0 %v332
    %681 = vmatpush1.msra.mxu0 %v331
    %682 = vmatprep.subr.mxu0 %v334
    %683 = vmatpush1.msra.mxu0 %v333
    %684 = vmatprep.subr.mxu0 %v336
    %685 = vmatpush1.msra.mxu0 %v335
    %686 = vmatprep.subr.mxu0 %v338
    %687 = vmatpush1.msra.mxu0 %v337
    %688 = vmatprep.subr.mxu0 0.0
    %689 = vmatpush1.msra.mxu0 0.0
    %690 = vmatprep.subr.mxu0 0.0
    %691 = vmatpush1.msra.mxu0 0.0
    %692 = vmatprep.subr.mxu0 0.0
    %693 = vmatpush1.msra.mxu0 0.0
    %694 = vmatprep.subr.mxu0 0.0
    %695 = vmatpush1.msra.mxu0 0.0
    %696 = vmatprep.subr.mxu0 0.0
    %697 = vmatpush1.msra.mxu0 0.0
    %698 = vmatprep.subr.mxu0 0.0
    %699 = vmatpush1.msra.mxu0 0.0
    %700 = vmatprep.subr.mxu0 0.0
    %701 = vmatpush1.msra.mxu0 0.0
    %702 = vmatprep.subr.mxu0 0.0
    %703 = vmatpush1.msra.mxu0 0.0
    %704 = vmatprep.subr.mxu0 0.0
    %705 = vmatpush1.msra.mxu0 0.0
    %706 = vmatprep.subr.mxu0 0.0
    %707 = vmatpush1.msra.mxu0 0.0
    %708 = vmatprep.subr.mxu0 0.0
    %709 = vmatpush1.msra.mxu0 0.0
    %710 = vmatprep.subr.mxu0 0.0
    %711 = vmatpush1.msra.mxu0 0.0
    %712 = vmatprep.subr.mxu0 0.0
    %713 = vmatpush1.msra.mxu0 0.0
    %714 = vmatprep.subr.mxu0 0.0
    %715 = vmatpush1.msra.mxu0 0.0
    %716 = vmatprep.subr.mxu0 0.0
    %717 = vmatpush1.msra.mxu0 0.0
    %718 = vmatprep.subr.mxu0 0.0
    %719 = vmatpush1.msra.mxu0 0.0
    %720 = vmatprep.subr.mxu0 0.0
    %721 = vmatpush1.msra.mxu0 0.0
    %722 = vmatprep.subr.mxu0 0.0
    %723 = vmatpush1.msra.mxu0 0.0
    %724 = vmatprep.subr.mxu0 0.0
    %725 = vmatpush1.msra.mxu0 0.0
    %726 = vmatprep.subr.mxu0 0.0
    %727 = vmatpush1.msra.mxu0 0.0
    %728 = vmatprep.subr.mxu0 0.0
    %729 = vmatpush1.msra.mxu0 0.0
    %730 = vmatprep.subr.mxu0 0.0
    %731 = vmatpush1.msra.mxu0 0.0
    %732 = vmatprep.subr.mxu0 0.0
    %733 = vmatpush1.msra.mxu0 0.0
    %734 = vmatprep.subr.mxu0 0.0
    %735 = vmatpush1.msra.mxu0 0.0
    %736 = vmatprep.mubr.f32.mxu0 0.0
    %737 = vmatmul.mubr.f32.gmra.mrb[0].mxu0 %v670
    %v738 = vpop.f32.mrb[0].mxu0
    %v739 = vadd.f32 0.0, %v738
    %v740 = vpop.f32.mrb[0].mxu0
    %v741 = vadd.f32 0.0, %v740
    %742 = vdwg.mxu0
    %v745 = vrot.slane %v739, 4
    %v746 = vrot.slane %v741, 4
    %v749 = vadd.f32 %v561, %v745
    %v750 = vadd.f32 %v562, %v746
    %v751 = vxor.u32 %v749, 2147483648
    %v752 = vmul.f32 %v751, 1.442695
    %v753 = vpow.pop %v752
    %v754 = vadd.f32 %v753, 1.0
    %v755 = vrcp.pop %v754
    %v756 = vmul.f32 1.0, %v755
    %v757 = vtanh.pop %v750
    %v758 = vxor.u32 %v750, 2147483648
    %v759 = vmul.f32 %v758, 1.442695
    %v760 = vpow.pop %v759
    %v761 = vadd.f32 %v760, 1.0
    %v762 = vrcp.pop %v761
    %v763 = vmul.f32 1.0, %v762
    %v765 = vrot.slane %v664, 4
    %v767 = vmul.f32 %v756, %v765
    %v768 = vmul.f32 %v756, %v757
    %770 = vrot.lane.b32.xlu0 %v768, 64
    %v771 = vpop.permute.xlu0 %770
    %v773 = vadd.f32 %v767, %v771
    %v774 = vtanh.pop %v773
    %v775 = vmul.f32 %v763, %v774
    %v778 = vrot.slane %v307, 4
    %v779 = vrot.slane %v309, 4
    %v782 = vadd.f32 %v222, %v778
    %v783 = vadd.f32 %v224, %v779
    %v785 = vrot.slane %v775, 4
    %786 = vrot.lane.b32.xlu0 %v785, 64
    %v787 = vpop.permute.xlu0 %786
    %v788 = vsel %vm347, %v787, 0
    %790 = vmatprep.subr.mxu0 %v324
    %791 = vmatpush1.msra.mxu0 %v323
    %792 = vmatprep.subr.mxu0 %v326
    %793 = vmatpush1.msra.mxu0 %v325
    %794 = vmatprep.subr.mxu0 %v328
    %795 = vmatpush1.msra.mxu0 %v327
    %796 = vmatprep.subr.mxu0 %v330
    %797 = vmatpush1.msra.mxu0 %v329
    %798 = vmatprep.subr.mxu0 %v332
    %799 = vmatpush1.msra.mxu0 %v331
    %800 = vmatprep.subr.mxu0 %v334
    %801 = vmatpush1.msra.mxu0 %v333
    %802 = vmatprep.subr.mxu0 %v336
    %803 = vmatpush1.msra.mxu0 %v335
    %804 = vmatprep.subr.mxu0 %v338
    %805 = vmatpush1.msra.mxu0 %v337
    %806 = vmatprep.subr.mxu0 0.0
    %807 = vmatpush1.msra.mxu0 0.0
    %808 = vmatprep.subr.mxu0 0.0
    %809 = vmatpush1.msra.mxu0 0.0
    %810 = vmatprep.subr.mxu0 0.0
    %811 = vmatpush1.msra.mxu0 0.0
    %812 = vmatprep.subr.mxu0 0.0
    %813 = vmatpush1.msra.mxu0 0.0
    %814 = vmatprep.subr.mxu0 0.0
    %815 = vmatpush1.msra.mxu0 0.0
    %816 = vmatprep.subr.mxu0 0.0
    %817 = vmatpush1.msra.mxu0 0.0
    %818 = vmatprep.subr.mxu0 0.0
    %819 = vmatpush1.msra.mxu0 0.0
    %820 = vmatprep.subr.mxu0 0.0
    %821 = vmatpush1.msra.mxu0 0.0
    %822 = vmatprep.subr.mxu0 0.0
    %823 = vmatpush1.msra.mxu0 0.0
    %824 = vmatprep.subr.mxu0 0.0
    %825 = vmatpush1.msra.mxu0 0.0
    %826 = vmatprep.subr.mxu0 0.0
    %827 = vmatpush1.msra.mxu0 0.0
    %828 = vmatprep.subr.mxu0 0.0
    %829 = vmatpush1.msra.mxu0 0.0
    %830 = vmatprep.subr.mxu0 0.0
    %831 = vmatpush1.msra.mxu0 0.0
    %832 = vmatprep.subr.mxu0 0.0
    %833 = vmatpush1.msra.mxu0 0.0
    %834 = vmatprep.subr.mxu0 0.0
    %835 = vmatpush1.msra.mxu0 0.0
    %836 = vmatprep.subr.mxu0 0.0
    %837 = vmatpush1.msra.mxu0 0.0
    %838 = vmatprep.subr.mxu0 0.0
    %839 = vmatpush1.msra.mxu0 0.0
    %840 = vmatprep.subr.mxu0 0.0
    %841 = vmatpush1.msra.mxu0 0.0
    %842 = vmatprep.subr.mxu0 0.0
    %843 = vmatpush1.msra.mxu0 0.0
    %844 = vmatprep.subr.mxu0 0.0
    %845 = vmatpush1.msra.mxu0 0.0
    %846 = vmatprep.subr.mxu0 0.0
    %847 = vmatpush1.msra.mxu0 0.0
    %848 = vmatprep.subr.mxu0 0.0
    %849 = vmatpush1.msra.mxu0 0.0
    %850 = vmatprep.subr.mxu0 0.0
    %851 = vmatpush1.msra.mxu0 0.0
    %852 = vmatprep.subr.mxu0 0.0
    %853 = vmatpush1.msra.mxu0 0.0
    %854 = vmatprep.mubr.f32.mxu0 0.0
    %855 = vmatmul.mubr.f32.gmra.mrb[0].mxu0 %v788
    %v856 = vpop.f32.mrb[0].mxu0
    %v857 = vadd.f32 0.0, %v856
    %v858 = vpop.f32.mrb[0].mxu0
    %v859 = vadd.f32 0.0, %v858
    %860 = vdwg.mxu0
    %v861 = vadd.f32 %v782, %v857
    %v862 = vadd.f32 %v783, %v859
    %v863 = vxor.u32 %v861, 2147483648
    %v864 = vmul.f32 %v863, 1.442695
    %v865 = vpow.pop %v864
    %v866 = vadd.f32 %v865, 1.0
    %v867 = vrcp.pop %v866
    %v868 = vmul.f32 1.0, %v867
    %v869 = vtanh.pop %v862
    %v870 = vxor.u32 %v862, 2147483648
    %v871 = vmul.f32 %v870, 1.442695
    %v872 = vpow.pop %v871
    %v873 = vadd.f32 %v872, 1.0
    %v874 = vrcp.pop %v873
    %v875 = vmul.f32 1.0, %v874
    %v877 = vrot.slane %v773, 4
    %v879 = vmul.f32 %v868, %v877
    %v880 = vmul.f32 %v868, %v869
    %882 = vrot.lane.b32.xlu0 %v880, 64
    %v883 = vpop.permute.xlu0 %882
    %v885 = vadd.f32 %v879, %v883
    %v886 = vtanh.pop %v885
    %v887 = vmul.f32 %v875, %v886
    %889 = vrot.lane.b32.xlu0 %v887, 64
    %v890 = vpop.permute.xlu0 %889
    %v891 = vsel %vm347, %v890, 0
    %893 = vmatprep.subr.mxu0 %v324
    %894 = vmatpush1.msra.mxu0 %v323
    %895 = vmatprep.subr.mxu0 %v326
    %896 = vmatpush1.msra.mxu0 %v325
    %897 = vmatprep.subr.mxu0 %v328
    %898 = vmatpush1.msra.mxu0 %v327
    %899 = vmatprep.subr.mxu0 %v330
    %900 = vmatpush1.msra.mxu0 %v329
    %901 = vmatprep.subr.mxu0 %v332
    %902 = vmatpush1.msra.mxu0 %v331
    %903 = vmatprep.subr.mxu0 %v334
    %904 = vmatpush1.msra.mxu0 %v333
    %905 = vmatprep.subr.mxu0 %v336
    %906 = vmatpush1.msra.mxu0 %v335
    %907 = vmatprep.subr.mxu0 %v338
    %908 = vmatpush1.msra.mxu0 %v337
    %909 = vmatprep.subr.mxu0 0.0
    %910 = vmatpush1.msra.mxu0 0.0
    %911 = vmatprep.subr.mxu0 0.0
    %912 = vmatpush1.msra.mxu0 0.0
    %913 = vmatprep.subr.mxu0 0.0
    %914 = vmatpush1.msra.mxu0 0.0
    %915 = vmatprep.subr.mxu0 0.0
    %916 = vmatpush1.msra.mxu0 0.0
    %917 = vmatprep.subr.mxu0 0.0
    %918 = vmatpush1.msra.mxu0 0.0
    %919 = vmatprep.subr.mxu0 0.0
    %920 = vmatpush1.msra.mxu0 0.0
    %921 = vmatprep.subr.mxu0 0.0
    %922 = vmatpush1.msra.mxu0 0.0
    %923 = vmatprep.subr.mxu0 0.0
    %924 = vmatpush1.msra.mxu0 0.0
    %925 = vmatprep.subr.mxu0 0.0
    %926 = vmatpush1.msra.mxu0 0.0
    %927 = vmatprep.subr.mxu0 0.0
    %928 = vmatpush1.msra.mxu0 0.0
    %929 = vmatprep.subr.mxu0 0.0
    %930 = vmatpush1.msra.mxu0 0.0
    %931 = vmatprep.subr.mxu0 0.0
    %932 = vmatpush1.msra.mxu0 0.0
    %933 = vmatprep.subr.mxu0 0.0
    %934 = vmatpush1.msra.mxu0 0.0
    %935 = vmatprep.subr.mxu0 0.0
    %936 = vmatpush1.msra.mxu0 0.0
    %937 = vmatprep.subr.mxu0 0.0
    %938 = vmatpush1.msra.mxu0 0.0
    %939 = vmatprep.subr.mxu0 0.0
    %940 = vmatpush1.msra.mxu0 0.0
    %941 = vmatprep.subr.mxu0 0.0
    %942 = vmatpush1.msra.mxu0 0.0
    %943 = vmatprep.subr.mxu0 0.0
    %944 = vmatpush1.msra.mxu0 0.0
    %945 = vmatprep.subr.mxu0 0.0
    %946 = vmatpush1.msra.mxu0 0.0
    %947 = vmatprep.subr.mxu0 0.0
    %948 = vmatpush1.msra.mxu0 0.0
    %949 = vmatprep.subr.mxu0 0.0
    %950 = vmatpush1.msra.mxu0 0.0
    %951 = vmatprep.subr.mxu0 0.0
    %952 = vmatpush1.msra.mxu0 0.0
    %953 = vmatprep.subr.mxu0 0.0
    %954 = vmatpush1.msra.mxu0 0.0
    %955 = vmatprep.subr.mxu0 0.0
    %956 = vmatpush1.msra.mxu0 0.0
    %957 = vmatprep.mubr.f32.mxu0 0.0
    %958 = vmatmul.mubr.f32.gmra.mrb[0].mxu0 %v891
    %v959 = vpop.f32.mrb[0].mxu0
    %v960 = vadd.f32 0.0, %v959
    %v961 = vpop.f32.mrb[0].mxu0
    %v962 = vadd.f32 0.0, %v961
    %963 = vdwg.mxu0
    %v966 = vrot.slane %v960, 4
    %v967 = vrot.slane %v962, 4
    %v970 = vadd.f32 %v782, %v966
    %v971 = vadd.f32 %v783, %v967
    %v972 = vxor.u32 %v970, 2147483648
    %v973 = vmul.f32 %v972, 1.442695
    %v974 = vpow.pop %v973
    %v975 = vadd.f32 %v974, 1.0
    %v976 = vrcp.pop %v975
    %v977 = vmul.f32 1.0, %v976
    %v978 = vtanh.pop %v971
    %v979 = vxor.u32 %v971, 2147483648
    %v980 = vmul.f32 %v979, 1.442695
    %v981 = vpow.pop %v980
    %v982 = vadd.f32 %v981, 1.0
    %v983 = vrcp.pop %v982
    %v984 = vmul.f32 1.0, %v983
    %v986 = vrot.slane %v885, 4
    %v988 = vmul.f32 %v977, %v986
    %v989 = vmul.f32 %v977, %v978
    %991 = vrot.lane.b32.xlu0 %v989, 64
    %v992 = vpop.permute.xlu0 %991
    %v994 = vadd.f32 %v988, %v992
    %v995 = vtanh.pop %v994
    %v996 = vmul.f32 %v984, %v995
    %v999 = vrot.slane %v301, 4
    %v1000 = vrot.slane %v303, 4
    %v1003 = vadd.f32 %v228, %v999
    %v1004 = vadd.f32 %v230, %v1000
    %v1006 = vrot.slane %v996, 4
    %1007 = vrot.lane.b32.xlu0 %v1006, 64
    %v1008 = vpop.permute.xlu0 %1007
    %v1009 = vsel %vm347, %v1008, 0
    %1011 = vmatprep.subr.mxu0 %v324
    %1012 = vmatpush1.msra.mxu0 %v323
    %1013 = vmatprep.subr.mxu0 %v326
    %1014 = vmatpush1.msra.mxu0 %v325
    %1015 = vmatprep.subr.mxu0 %v328
    %1016 = vmatpush1.msra.mxu0 %v327
    %1017 = vmatprep.subr.mxu0 %v330
    %1018 = vmatpush1.msra.mxu0 %v329
    %1019 = vmatprep.subr.mxu0 %v332
    %1020 = vmatpush1.msra.mxu0 %v331
    %1021 = vmatprep.subr.mxu0 %v334
    %1022 = vmatpush1.msra.mxu0 %v333
    %1023 = vmatprep.subr.mxu0 %v336
    %1024 = vmatpush1.msra.mxu0 %v335
    %1025 = vmatprep.subr.mxu0 %v338
    %1026 = vmatpush1.msra.mxu0 %v337
    %1027 = vmatprep.subr.mxu0 0.0
    %1028 = vmatpush1.msra.mxu0 0.0
    %1029 = vmatprep.subr.mxu0 0.0
    %1030 = vmatpush1.msra.mxu0 0.0
    %1031 = vmatprep.subr.mxu0 0.0
    %1032 = vmatpush1.msra.mxu0 0.0
    %1033 = vmatprep.subr.mxu0 0.0
    %1034 = vmatpush1.msra.mxu0 0.0
    %1035 = vmatprep.subr.mxu0 0.0
    %1036 = vmatpush1.msra.mxu0 0.0
    %1037 = vmatprep.subr.mxu0 0.0
    %1038 = vmatpush1.msra.mxu0 0.0
    %1039 = vmatprep.subr.mxu0 0.0
    %1040 = vmatpush1.msra.mxu0 0.0
    %1041 = vmatprep.subr.mxu0 0.0
    %1042 = vmatpush1.msra.mxu0 0.0
    %1043 = vmatprep.subr.mxu0 0.0
    %1044 = vmatpush1.msra.mxu0 0.0
    %1045 = vmatprep.subr.mxu0 0.0
    %1046 = vmatpush1.msra.mxu0 0.0
    %1047 = vmatprep.subr.mxu0 0.0
    %1048 = vmatpush1.msra.mxu0 0.0
    %1049 = vmatprep.subr.mxu0 0.0
    %1050 = vmatpush1.msra.mxu0 0.0
    %1051 = vmatprep.subr.mxu0 0.0
    %1052 = vmatpush1.msra.mxu0 0.0
    %1053 = vmatprep.subr.mxu0 0.0
    %1054 = vmatpush1.msra.mxu0 0.0
    %1055 = vmatprep.subr.mxu0 0.0
    %1056 = vmatpush1.msra.mxu0 0.0
    %1057 = vmatprep.subr.mxu0 0.0
    %1058 = vmatpush1.msra.mxu0 0.0
    %1059 = vmatprep.subr.mxu0 0.0
    %1060 = vmatpush1.msra.mxu0 0.0
    %1061 = vmatprep.subr.mxu0 0.0
    %1062 = vmatpush1.msra.mxu0 0.0
    %1063 = vmatprep.subr.mxu0 0.0
    %1064 = vmatpush1.msra.mxu0 0.0
    %1065 = vmatprep.subr.mxu0 0.0
    %1066 = vmatpush1.msra.mxu0 0.0
    %1067 = vmatprep.subr.mxu0 0.0
    %1068 = vmatpush1.msra.mxu0 0.0
    %1069 = vmatprep.subr.mxu0 0.0
    %1070 = vmatpush1.msra.mxu0 0.0
    %1071 = vmatprep.subr.mxu0 0.0
    %1072 = vmatpush1.msra.mxu0 0.0
    %1073 = vmatprep.subr.mxu0 0.0
    %1074 = vmatpush1.msra.mxu0 0.0
    %1075 = vmatprep.mubr.f32.mxu0 0.0
    %1076 = vmatmul.mubr.f32.gmra.mrb[0].mxu0 %v1009
    %v1077 = vpop.f32.mrb[0].mxu0
    %v1078 = vadd.f32 0.0, %v1077
    %v1079 = vpop.f32.mrb[0].mxu0
    %v1080 = vadd.f32 0.0, %v1079
    %1081 = vdwg.mxu0
    %v1082 = vadd.f32 %v1003, %v1078
    %v1083 = vadd.f32 %v1004, %v1080
    %v1084 = vxor.u32 %v1082, 2147483648
    %v1085 = vmul.f32 %v1084, 1.442695
    %v1086 = vpow.pop %v1085
    %v1087 = vadd.f32 %v1086, 1.0
    %v1088 = vrcp.pop %v1087
    %v1089 = vmul.f32 1.0, %v1088
    %v1090 = vtanh.pop %v1083
    %v1091 = vxor.u32 %v1083, 2147483648
    %v1092 = vmul.f32 %v1091, 1.442695
    %v1093 = vpow.pop %v1092
    %v1094 = vadd.f32 %v1093, 1.0
    %v1095 = vrcp.pop %v1094
    %v1096 = vmul.f32 1.0, %v1095
    %v1098 = vrot.slane %v994, 4
    %v1100 = vmul.f32 %v1089, %v1098
    %v1101 = vmul.f32 %v1089, %v1090
    %1103 = vrot.lane.b32.xlu0 %v1101, 64
    %v1104 = vpop.permute.xlu0 %1103
    %v1106 = vadd.f32 %v1100, %v1104
    %v1107 = vtanh.pop %v1106
    %v1108 = vmul.f32 %v1096, %v1107
    %1110 = vrot.lane.b32.xlu0 %v1108, 64
    %v1111 = vpop.permute.xlu0 %1110
    %v1112 = vsel %vm347, %v1111, 0
    %1114 = vmatprep.subr.mxu0 %v324
    %1115 = vmatpush1.msra.mxu0 %v323
    %1116 = vmatprep.subr.mxu0 %v326
    %1117 = vmatpush1.msra.mxu0 %v325
    %1118 = vmatprep.subr.mxu0 %v328
    %1119 = vmatpush1.msra.mxu0 %v327
    %1120 = vmatprep.subr.mxu0 %v330
    %1121 = vmatpush1.msra.mxu0 %v329
    %1122 = vmatprep.subr.mxu0 %v332
    %1123 = vmatpush1.msra.mxu0 %v331
    %1124 = vmatprep.subr.mxu0 %v334
    %1125 = vmatpush1.msra.mxu0 %v333
    %1126 = vmatprep.subr.mxu0 %v336
    %1127 = vmatpush1.msra.mxu0 %v335
    %1128 = vmatprep.subr.mxu0 %v338
    %1129 = vmatpush1.msra.mxu0 %v337
    %1130 = vmatprep.subr.mxu0 0.0
    %1131 = vmatpush1.msra.mxu0 0.0
    %1132 = vmatprep.subr.mxu0 0.0
    %1133 = vmatpush1.msra.mxu0 0.0
    %1134 = vmatprep.subr.mxu0 0.0
    %1135 = vmatpush1.msra.mxu0 0.0
    %1136 = vmatprep.subr.mxu0 0.0
    %1137 = vmatpush1.msra.mxu0 0.0
    %1138 = vmatprep.subr.mxu0 0.0
    %1139 = vmatpush1.msra.mxu0 0.0
    %1140 = vmatprep.subr.mxu0 0.0
    %1141 = vmatpush1.msra.mxu0 0.0
    %1142 = vmatprep.subr.mxu0 0.0
    %1143 = vmatpush1.msra.mxu0 0.0
    %1144 = vmatprep.subr.mxu0 0.0
    %1145 = vmatpush1.msra.mxu0 0.0
    %1146 = vmatprep.subr.mxu0 0.0
    %1147 = vmatpush1.msra.mxu0 0.0
    %1148 = vmatprep.subr.mxu0 0.0
    %1149 = vmatpush1.msra.mxu0 0.0
    %1150 = vmatprep.subr.mxu0 0.0
    %1151 = vmatpush1.msra.mxu0 0.0
    %1152 = vmatprep.subr.mxu0 0.0
    %1153 = vmatpush1.msra.mxu0 0.0
    %1154 = vmatprep.subr.mxu0 0.0
    %1155 = vmatpush1.msra.mxu0 0.0
    %1156 = vmatprep.subr.mxu0 0.0
    %1157 = vmatpush1.msra.mxu0 0.0
    %1158 = vmatprep.subr.mxu0 0.0
    %1159 = vmatpush1.msra.mxu0 0.0
    %1160 = vmatprep.subr.mxu0 0.0
    %1161 = vmatpush1.msra.mxu0 0.0
    %1162 = vmatprep.subr.mxu0 0.0
    %1163 = vmatpush1.msra.mxu0 0.0
    %1164 = vmatprep.subr.mxu0 0.0
    %1165 = vmatpush1.msra.mxu0 0.0
    %1166 = vmatprep.subr.mxu0 0.0
    %1167 = vmatpush1.msra.mxu0 0.0
    %1168 = vmatprep.subr.mxu0 0.0
    %1169 = vmatpush1.msra.mxu0 0.0
    %1170 = vmatprep.subr.mxu0 0.0
    %1171 = vmatpush1.msra.mxu0 0.0
    %1172 = vmatprep.subr.mxu0 0.0
    %1173 = vmatpush1.msra.mxu0 0.0
    %1174 = vmatprep.subr.mxu0 0.0
    %1175 = vmatpush1.msra.mxu0 0.0
    %1176 = vmatprep.subr.mxu0 0.0
    %1177 = vmatpush1.msra.mxu0 0.0
    %1178 = vmatprep.mubr.f32.mxu0 0.0
    %1179 = vmatmul.mubr.f32.gmra.mrb[0].mxu0 %v1112
    %v1180 = vpop.f32.mrb[0].mxu0
    %v1181 = vadd.f32 0.0, %v1180
    %v1182 = vpop.f32.mrb[0].mxu0
    %v1183 = vadd.f32 0.0, %v1182
    %1184 = vdwg.mxu0
    %v1187 = vrot.slane %v1181, 4
    %v1188 = vrot.slane %v1183, 4
    %v1191 = vadd.f32 %v1003, %v1187
    %v1192 = vadd.f32 %v1004, %v1188
    %v1193 = vxor.u32 %v1191, 2147483648
    %v1194 = vmul.f32 %v1193, 1.442695
    %v1195 = vpow.pop %v1194
    %v1196 = vadd.f32 %v1195, 1.0
    %v1197 = vrcp.pop %v1196
    %v1198 = vmul.f32 1.0, %v1197
    %v1199 = vtanh.pop %v1192
    %v1200 = vxor.u32 %v1192, 2147483648
    %v1201 = vmul.f32 %v1200, 1.442695
    %v1202 = vpow.pop %v1201
    %v1203 = vadd.f32 %v1202, 1.0
    %v1204 = vrcp.pop %v1203
    %v1205 = vmul.f32 1.0, %v1204
    %v1207 = vrot.slane %v1106, 4
    %v1209 = vmul.f32 %v1198, %v1207
    %v1210 = vmul.f32 %v1198, %v1199
    %1212 = vrot.lane.b32.xlu0 %v1210, 64
    %v1213 = vpop.permute.xlu0 %1212
    %v1215 = vadd.f32 %v1209, %v1213
    %v1216 = vtanh.pop %v1215
    %v1217 = vmul.f32 %v1205, %v1216
    %vm1219 = vcmask 257024
    %1220 = vst.msk [vmem:[#allocation2] sm:$0xf] %vm1219, %v448
    %vm1221 = vcmask 519424
    %1222 = vst.msk [vmem:[#allocation2 + $0x1c] sm:$0xf] %vm1221, %v448
    %1223 = vrot.lane.b32.xlu0 %v554, 64
    %v1224 = vpop.permute.xlu0 %1223
    %vm1226 = vcmask 261124
    %1227 = vst.msk [vmem:[#allocation2] sm:$0xf0] %vm1226, %v1224
    %vm1228 = vcmask 523524
    %1229 = vst.msk [vmem:[#allocation2 + $0x14] sm:$0xf0] %vm1228, %v1224
    %1231 = vst.msk [vmem:[#allocation2 + $0x8] sm:$0xf] %vm1219, %v669
    %1232 = vst.msk [vmem:[#allocation2 + $0x14] sm:$0xf] %vm1221, %v669
    %1233 = vrot.lane.b32.xlu0 %v775, 64
    %v1234 = vpop.permute.xlu0 %1233
    %1236 = vst.msk [vmem:[#allocation2 + $0x8] sm:$0xf0] %vm1226, %v1234
    %1237 = vst.msk [vmem:[#allocation2 + $0xc] sm:$0xf0] %vm1228, %v1234
    %1239 = vst.msk [vmem:[#allocation2 + $0x10] sm:$0xf] %vm1219, %v890
    %1240 = vst.msk [vmem:[#allocation2 + $0xc] sm:$0xf] %vm1221, %v890
    %1241 = vrot.lane.b32.xlu0 %v996, 64
    %v1242 = vpop.permute.xlu0 %1241
    %1244 = vst.msk [vmem:[#allocation2 + $0x10] sm:$0xf0] %vm1226, %v1242
    %1245 = vst.msk [vmem:[#allocation2 + $0x4] sm:$0xf0] %vm1228, %v1242
    %1247 = vst.msk [vmem:[#allocation2 + $0x18] sm:$0xf] %vm1219, %v1111
    %1248 = vst.msk [vmem:[#allocation2 + $0x4] sm:$0xf] %vm1221, %v1111
    %1250 = vrot.lane.b32.xlu0 %v1217, 64
    %v1251 = vpop.permute.xlu0 %1250
    %1253 = vst.msk [vmem:[#allocation2 + $0x18] sm:$0xf0] %vm1226, %v1251
    %1254 = vst.msk [vmem:[#allocation2 - $0x4] sm:$0xf0] %vm1228, %v1251
    %v1255 = vld [vmem:[#allocation2] sm:$0xff]
    %v1256 = vld [vmem:[#allocation2 + $0x8] sm:$0xff]
    %v1257 = vld [vmem:[#allocation2 + $0x10] sm:$0xff]
    %v1258 = vld [vmem:[#allocation2 + $0x18] sm:$0xff]
    %v1259 = vld [vmem:[#allocation6] sm:$0xff]
    %v1260 = vld [vmem:[#allocation6 + $0x8] sm:$0xff]
    %v1261 = vld [vmem:[#allocation6 + $0x10] sm:$0xff]
    %v1262 = vld [vmem:[#allocation6 + $0x18] sm:$0xff]
    %v1263 = vld [vmem:[#allocation6 + $0x20] sm:$0xff]
    %v1264 = vld [vmem:[#allocation6 + $0x28] sm:$0xff]
    %v1265 = vld [vmem:[#allocation6 + $0x30] sm:$0xff]
    %v1266 = vld [vmem:[#allocation6 + $0x38] sm:$0xff]
    %v1267 = vld [vmem:[#allocation6 + $0x40] sm:$0xff]
    %v1268 = vld [vmem:[#allocation6 + $0x48] sm:$0xff]
    %v1269 = vld [vmem:[#allocation6 + $0x50] sm:$0xff]
    %v1270 = vld [vmem:[#allocation6 + $0x58] sm:$0xff]
    %v1271 = vld [vmem:[#allocation6 + $0x60] sm:$0xff]
    %v1272 = vld [vmem:[#allocation6 + $0x68] sm:$0xff]
    %v1273 = vld [vmem:[#allocation6 + $0x70] sm:$0xff]
    %v1274 = vld [vmem:[#allocation6 + $0x78] sm:$0xff]
    %v1275 = vld [vmem:[#allocation9] sm:$0x3]
    %v1277 = vlaneseq
    %v1278 = vshrl.u32 %v1277, 7
    %v1279 = vsub.s32 0, %v1278
    %v1280 = vrot.slane %v1275, %v1279
    %v1281 = vlaneseq
    %v1282 = vshrl.u32 %v1281, 7
    %v1283 = vsub.s32 1, %v1282
    %v1284 = vrot.slane %v1275, %v1283
    %v1288 = vsel %vm347, %v1255, 0
    %v1291 = vsel %vm347, %v1256, 0
    %v1294 = vsel %vm347, %v1257, 0
    %v1297 = vsel %vm347, %v1258, 0
    %1299 = vmatprep.subr.mxu0 %v1260
    %1300 = vmatpush1.msra.mxu0 %v1259
    %1301 = vmatprep.subr.mxu0 %v1262
    %1302 = vmatpush1.msra.mxu0 %v1261
    %1303 = vmatprep.subr.mxu0 %v1264
    %1304 = vmatpush1.msra.mxu0 %v1263
    %1305 = vmatprep.subr.mxu0 %v1266
    %1306 = vmatpush1.msra.mxu0 %v1265
    %1307 = vmatprep.subr.mxu0 %v1268
    %1308 = vmatpush1.msra.mxu0 %v1267
    %1309 = vmatprep.subr.mxu0 %v1270
    %1310 = vmatpush1.msra.mxu0 %v1269
    %1311 = vmatprep.subr.mxu0 %v1272
    %1312 = vmatpush1.msra.mxu0 %v1271
    %1313 = vmatprep.subr.mxu0 %v1274
    %1314 = vmatpush1.msra.mxu0 %v1273
    %1315 = vmatprep.subr.mxu0 0.0
    %1316 = vmatpush1.msra.mxu0 0.0
    %1317 = vmatprep.subr.mxu0 0.0
    %1318 = vmatpush1.msra.mxu0 0.0
    %1319 = vmatprep.subr.mxu0 0.0
    %1320 = vmatpush1.msra.mxu0 0.0
    %1321 = vmatprep.subr.mxu0 0.0
    %1322 = vmatpush1.msra.mxu0 0.0
    %1323 = vmatprep.subr.mxu0 0.0
    %1324 = vmatpush1.msra.mxu0 0.0
    %1325 = vmatprep.subr.mxu0 0.0
    %1326 = vmatpush1.msra.mxu0 0.0
    %1327 = vmatprep.subr.mxu0 0.0
    %1328 = vmatpush1.msra.mxu0 0.0
    %1329 = vmatprep.subr.mxu0 0.0
    %1330 = vmatpush1.msra.mxu0 0.0
    %1331 = vmatprep.subr.mxu0 0.0
    %1332 = vmatpush1.msra.mxu0 0.0
    %1333 = vmatprep.subr.mxu0 0.0
    %1334 = vmatpush1.msra.mxu0 0.0
    %1335 = vmatprep.subr.mxu0 0.0
    %1336 = vmatpush1.msra.mxu0 0.0
    %1337 = vmatprep.subr.mxu0 0.0
    %1338 = vmatpush1.msra.mxu0 0.0
    %1339 = vmatprep.subr.mxu0 0.0
    %1340 = vmatpush1.msra.mxu0 0.0
    %1341 = vmatprep.subr.mxu0 0.0
    %1342 = vmatpush1.msra.mxu0 0.0
    %1343 = vmatprep.subr.mxu0 0.0
    %1344 = vmatpush1.msra.mxu0 0.0
    %1345 = vmatprep.subr.mxu0 0.0
    %1346 = vmatpush1.msra.mxu0 0.0
    %1347 = vmatprep.subr.mxu0 0.0
    %1348 = vmatpush1.msra.mxu0 0.0
    %1349 = vmatprep.subr.mxu0 0.0
    %1350 = vmatpush1.msra.mxu0 0.0
    %1351 = vmatprep.subr.mxu0 0.0
    %1352 = vmatpush1.msra.mxu0 0.0
    %1353 = vmatprep.subr.mxu0 0.0
    %1354 = vmatpush1.msra.mxu0 0.0
    %1355 = vmatprep.subr.mxu0 0.0
    %1356 = vmatpush1.msra.mxu0 0.0
    %1357 = vmatprep.subr.mxu0 0.0
    %1358 = vmatpush1.msra.mxu0 0.0
    %1359 = vmatprep.subr.mxu0 0.0
    %1360 = vmatpush1.msra.mxu0 0.0
    %1361 = vmatprep.subr.mxu0 0.0
    %1362 = vmatpush1.msra.mxu0 0.0
    %1363 = vmatprep.mubr.f32.mxu0 0.0
    %1364 = vmatmul.mubr.f32.gmra.mrb[0].mxu0 %v1288
    %v1365 = vpop.f32.mrb[0].mxu0
    %v1366 = vadd.f32 %v1280, %v1365
    %v1367 = vpop.f32.mrb[0].mxu0
    %v1368 = vadd.f32 %v1284, %v1367
    %1369 = vmatprep.mubr.f32.mxu0 0.0
    %1370 = vmatmul.mubr.f32.gmra.mrb[0].mxu0 %v1291
    %v1371 = vpop.f32.mrb[0].mxu0
    %v1372 = vadd.f32 %v1280, %v1371
    %v1373 = vpop.f32.mrb[0].mxu0
    %v1374 = vadd.f32 %v1284, %v1373
    %1375 = vmatprep.mubr.f32.mxu0 0.0
    %1376 = vmatmul.mubr.f32.gmra.mrb[0].mxu0 %v1294
    %v1377 = vpop.f32.mrb[0].mxu0
    %v1378 = vadd.f32 %v1280, %v1377
    %v1379 = vpop.f32.mrb[0].mxu0
    %v1380 = vadd.f32 %v1284, %v1379
    %1381 = vmatprep.mubr.f32.mxu0 0.0
    %1382 = vmatmul.mubr.f32.gmra.mrb[0].mxu0 %v1297
    %v1383 = vpop.f32.mrb[0].mxu0
    %v1384 = vadd.f32 %v1280, %v1383
    %v1385 = vpop.f32.mrb[0].mxu0
    %v1386 = vadd.f32 %v1284, %v1385
    %1387 = vdwg.mxu0
    %v1388 = vld [vmem:[#allocation8] sm:$0xff]
    %v1389 = vld [vmem:[#allocation8 + $0x8] sm:$0xff]
    %v1390 = vld [vmem:[#allocation8 + $0x10] sm:$0xff]
    %v1391 = vld [vmem:[#allocation8 + $0x18] sm:$0xff]
    %v1392 = vld [vmem:[#allocation8 + $0x20] sm:$0xff]
    %v1393 = vld [vmem:[#allocation8 + $0x28] sm:$0xff]
    %v1394 = vld [vmem:[#allocation8 + $0x30] sm:$0xff]
    %v1395 = vld [vmem:[#allocation8 + $0x38] sm:$0xff]
    %v1396 = vld [vmem:[#allocation8 + $0x40] sm:$0xff]
    %v1397 = vld [vmem:[#allocation8 + $0x48] sm:$0xff]
    %v1398 = vld [vmem:[#allocation8 + $0x50] sm:$0xff]
    %v1399 = vld [vmem:[#allocation8 + $0x58] sm:$0xff]
    %v1400 = vld [vmem:[#allocation8 + $0x60] sm:$0xff]
    %v1401 = vld [vmem:[#allocation8 + $0x68] sm:$0xff]
    %v1402 = vld [vmem:[#allocation8 + $0x70] sm:$0xff]
    %v1403 = vld [vmem:[#allocation8 + $0x78] sm:$0xff]
    %1404 = vmatprep.subr.mxu0 %v1389
    %1405 = vmatpush1.msra.mxu0 %v1388
    %1406 = vmatprep.subr.mxu0 %v1391
    %1407 = vmatpush1.msra.mxu0 %v1390
    %1408 = vmatprep.subr.mxu0 %v1393
    %1409 = vmatpush1.msra.mxu0 %v1392
    %1410 = vmatprep.subr.mxu0 %v1395
    %1411 = vmatpush1.msra.mxu0 %v1394
    %1412 = vmatprep.subr.mxu0 %v1397
    %1413 = vmatpush1.msra.mxu0 %v1396
    %1414 = vmatprep.subr.mxu0 %v1399
    %1415 = vmatpush1.msra.mxu0 %v1398
    %1416 = vmatprep.subr.mxu0 %v1401
    %1417 = vmatpush1.msra.mxu0 %v1400
    %1418 = vmatprep.subr.mxu0 %v1403
    %1419 = vmatpush1.msra.mxu0 %v1402
    %1420 = vmatprep.subr.mxu0 0.0
    %1421 = vmatpush1.msra.mxu0 0.0
    %1422 = vmatprep.subr.mxu0 0.0
    %1423 = vmatpush1.msra.mxu0 0.0
    %1424 = vmatprep.subr.mxu0 0.0
    %1425 = vmatpush1.msra.mxu0 0.0
    %1426 = vmatprep.subr.mxu0 0.0
    %1427 = vmatpush1.msra.mxu0 0.0
    %1428 = vmatprep.subr.mxu0 0.0
    %1429 = vmatpush1.msra.mxu0 0.0
    %1430 = vmatprep.subr.mxu0 0.0
    %1431 = vmatpush1.msra.mxu0 0.0
    %1432 = vmatprep.subr.mxu0 0.0
    %1433 = vmatpush1.msra.mxu0 0.0
    %1434 = vmatprep.subr.mxu0 0.0
    %1435 = vmatpush1.msra.mxu0 0.0
    %1436 = vmatprep.subr.mxu0 0.0
    %1437 = vmatpush1.msra.mxu0 0.0
    %1438 = vmatprep.subr.mxu0 0.0
    %1439 = vmatpush1.msra.mxu0 0.0
    %1440 = vmatprep.subr.mxu0 0.0
    %1441 = vmatpush1.msra.mxu0 0.0
    %1442 = vmatprep.subr.mxu0 0.0
    %1443 = vmatpush1.msra.mxu0 0.0
    %1444 = vmatprep.subr.mxu0 0.0
    %1445 = vmatpush1.msra.mxu0 0.0
    %1446 = vmatprep.subr.mxu0 0.0
    %1447 = vmatpush1.msra.mxu0 0.0
    %1448 = vmatprep.subr.mxu0 0.0
    %1449 = vmatpush1.msra.mxu0 0.0
    %1450 = vmatprep.subr.mxu0 0.0
    %1451 = vmatpush1.msra.mxu0 0.0
    %1452 = vmatprep.subr.mxu0 0.0
    %1453 = vmatpush1.msra.mxu0 0.0
    %1454 = vmatprep.subr.mxu0 0.0
    %1455 = vmatpush1.msra.mxu0 0.0
    %1456 = vmatprep.subr.mxu0 0.0
    %1457 = vmatpush1.msra.mxu0 0.0
    %1458 = vmatprep.subr.mxu0 0.0
    %1459 = vmatpush1.msra.mxu0 0.0
    %1460 = vmatprep.subr.mxu0 0.0
    %1461 = vmatpush1.msra.mxu0 0.0
    %1462 = vmatprep.subr.mxu0 0.0
    %1463 = vmatpush1.msra.mxu0 0.0
    %1464 = vmatprep.subr.mxu0 0.0
    %1465 = vmatpush1.msra.mxu0 0.0
    %1466 = vmatprep.subr.mxu0 0.0
    %1467 = vmatpush1.msra.mxu0 0.0
    %1468 = vmatprep.mubr.f32.mxu0 0.0
    %1469 = vmatmul.mubr.f32.gmra.mrb[0].mxu0 %v1288
    %v1470 = vpop.f32.mrb[0].mxu0
    %v1471 = vadd.f32 0.0, %v1470
    %v1472 = vpop.f32.mrb[0].mxu0
    %v1473 = vadd.f32 0.0, %v1472
    %1474 = vmatprep.mubr.f32.mxu0 0.0
    %1475 = vmatmul.mubr.f32.gmra.mrb[0].mxu0 %v1291
    %v1476 = vpop.f32.mrb[0].mxu0
    %v1477 = vadd.f32 0.0, %v1476
    %v1478 = vpop.f32.mrb[0].mxu0
    %v1479 = vadd.f32 0.0, %v1478
    %1480 = vmatprep.mubr.f32.mxu0 0.0
    %1481 = vmatmul.mubr.f32.gmra.mrb[0].mxu0 %v1294
    %v1482 = vpop.f32.mrb[0].mxu0
    %v1483 = vadd.f32 0.0, %v1482
    %v1484 = vpop.f32.mrb[0].mxu0
    %v1485 = vadd.f32 0.0, %v1484
    %1486 = vmatprep.mubr.f32.mxu0 0.0
    %1487 = vmatmul.mubr.f32.gmra.mrb[0].mxu0 %v1297
    %v1488 = vpop.f32.mrb[0].mxu0
    %v1489 = vadd.f32 0.0, %v1488
    %v1490 = vpop.f32.mrb[0].mxu0
    %v1491 = vadd.f32 0.0, %v1490
    %1492 = vdwg.mxu0
    %v1493 = vld [vmem:[#allocation11] sm:$0xff]
    %v1494 = vld [vmem:[#allocation11 + $0x8] sm:$0xff]
    %v1495 = vld [vmem:[#allocation11 + $0x10] sm:$0xff]
    %v1496 = vld [vmem:[#allocation11 + $0x18] sm:$0xff]
    %v1497 = vld [vmem:[#allocation11 + $0x20] sm:$0xff]
    %v1498 = vld [vmem:[#allocation11 + $0x28] sm:$0xff]
    %v1499 = vld [vmem:[#allocation11 + $0x30] sm:$0xff]
    %v1500 = vld [vmem:[#allocation11 + $0x38] sm:$0xff]
    %v1501 = vld [vmem:[#allocation11 + $0x40] sm:$0xff]
    %v1502 = vld [vmem:[#allocation11 + $0x48] sm:$0xff]
    %v1503 = vld [vmem:[#allocation11 + $0x50] sm:$0xff]
    %v1504 = vld [vmem:[#allocation11 + $0x58] sm:$0xff]
    %v1505 = vld [vmem:[#allocation11 + $0x60] sm:$0xff]
    %v1506 = vld [vmem:[#allocation11 + $0x68] sm:$0xff]
    %v1507 = vld [vmem:[#allocation11 + $0x70] sm:$0xff]
    %v1508 = vld [vmem:[#allocation11 + $0x78] sm:$0xff]
    %v1511 = vrot.slane %v1489, 4
    %v1512 = vrot.slane %v1491, 4
    %v1515 = vadd.f32 %v1366, %v1511
    %v1516 = vadd.f32 %v1368, %v1512
    %1517 = vmatprep.subr.mxu0 %v1494
    %1518 = vmatpush1.msra.mxu0 %v1493
    %1519 = vmatprep.subr.mxu0 %v1496
    %1520 = vmatpush1.msra.mxu0 %v1495
    %1521 = vmatprep.subr.mxu0 %v1498
    %1522 = vmatpush1.msra.mxu0 %v1497
    %1523 = vmatprep.subr.mxu0 %v1500
    %1524 = vmatpush1.msra.mxu0 %v1499
    %1525 = vmatprep.subr.mxu0 %v1502
    %1526 = vmatpush1.msra.mxu0 %v1501
    %1527 = vmatprep.subr.mxu0 %v1504
    %1528 = vmatpush1.msra.mxu0 %v1503
    %1529 = vmatprep.subr.mxu0 %v1506
    %1530 = vmatpush1.msra.mxu0 %v1505
    %1531 = vmatprep.subr.mxu0 %v1508
    %1532 = vmatpush1.msra.mxu0 %v1507
    %1533 = vmatprep.subr.mxu0 0.0
    %1534 = vmatpush1.msra.mxu0 0.0
    %1535 = vmatprep.subr.mxu0 0.0
    %1536 = vmatpush1.msra.mxu0 0.0
    %1537 = vmatprep.subr.mxu0 0.0
    %1538 = vmatpush1.msra.mxu0 0.0
    %1539 = vmatprep.subr.mxu0 0.0
    %1540 = vmatpush1.msra.mxu0 0.0
    %1541 = vmatprep.subr.mxu0 0.0
    %1542 = vmatpush1.msra.mxu0 0.0
    %1543 = vmatprep.subr.mxu0 0.0
    %1544 = vmatpush1.msra.mxu0 0.0
    %1545 = vmatprep.subr.mxu0 0.0
    %1546 = vmatpush1.msra.mxu0 0.0
    %1547 = vmatprep.subr.mxu0 0.0
    %1548 = vmatpush1.msra.mxu0 0.0
    %1549 = vmatprep.subr.mxu0 0.0
    %1550 = vmatpush1.msra.mxu0 0.0
    %1551 = vmatprep.subr.mxu0 0.0
    %1552 = vmatpush1.msra.mxu0 0.0
    %1553 = vmatprep.subr.mxu0 0.0
    %1554 = vmatpush1.msra.mxu0 0.0
    %1555 = vmatprep.subr.mxu0 0.0
    %1556 = vmatpush1.msra.mxu0 0.0
    %1557 = vmatprep.subr.mxu0 0.0
    %1558 = vmatpush1.msra.mxu0 0.0
    %1559 = vmatprep.subr.mxu0 0.0
    %1560 = vmatpush1.msra.mxu0 0.0
    %1561 = vmatprep.subr.mxu0 0.0
    %1562 = vmatpush1.msra.mxu0 0.0
    %1563 = vmatprep.subr.mxu0 0.0
    %1564 = vmatpush1.msra.mxu0 0.0
    %1565 = vmatprep.subr.mxu0 0.0
    %1566 = vmatpush1.msra.mxu0 0.0
    %1567 = vmatprep.subr.mxu0 0.0
    %1568 = vmatpush1.msra.mxu0 0.0
    %1569 = vmatprep.subr.mxu0 0.0
    %1570 = vmatpush1.msra.mxu0 0.0
    %1571 = vmatprep.subr.mxu0 0.0
    %1572 = vmatpush1.msra.mxu0 0.0
    %1573 = vmatprep.subr.mxu0 0.0
    %1574 = vmatpush1.msra.mxu0 0.0
    %1575 = vmatprep.subr.mxu0 0.0
    %1576 = vmatpush1.msra.mxu0 0.0
    %1577 = vmatprep.subr.mxu0 0.0
    %1578 = vmatpush1.msra.mxu0 0.0
    %1579 = vmatprep.subr.mxu0 0.0
    %1580 = vmatpush1.msra.mxu0 0.0
    %1581 = vmatprep.mubr.f32.mxu0 0.0
    %1582 = vmatmul.mubr.f32.gmra.mrb[0].mxu0 %v349
    %v1583 = vpop.f32.mrb[0].mxu0
    %v1584 = vadd.f32 0.0, %v1583
    %v1585 = vpop.f32.mrb[0].mxu0
    %v1586 = vadd.f32 0.0, %v1585
    %1587 = vdwg.mxu0
    %v1588 = vadd.f32 %v1515, %v1584
    %v1589 = vadd.f32 %v1516, %v1586
    %v1590 = vxor.u32 %v1588, 2147483648
    %v1591 = vmul.f32 %v1590, 1.442695
    %v1592 = vpow.pop %v1591
    %v1593 = vadd.f32 %v1592, 1.0
    %v1594 = vrcp.pop %v1593
    %v1595 = vmul.f32 1.0, %v1594
    %v1596 = vtanh.pop %v1589
    %v1597 = vxor.u32 %v1589, 2147483648
    %v1598 = vmul.f32 %v1597, 1.442695
    %v1599 = vpow.pop %v1598
    %v1600 = vadd.f32 %v1599, 1.0
    %v1601 = vrcp.pop %v1600
    %v1602 = vmul.f32 1.0, %v1601
    %v1603 = vmul.f32 %v1595, 0.0
    %v1604 = vmul.f32 %v1595, %v1596
    %1606 = vrot.lane.b32.xlu0 %v1604, 64
    %v1607 = vpop.permute.xlu0 %1606
    %v1609 = vadd.f32 %v1603, %v1607
    %v1610 = vtanh.pop %v1609
    %v1611 = vmul.f32 %v1602, %v1610
    %1613 = vrot.lane.b32.xlu0 %v1611, 64
    %v1614 = vpop.permute.xlu0 %1613
    %v1615 = vsel %vm347, %v1614, 0
    %1617 = vmatprep.subr.mxu0 %v1494
    %1618 = vmatpush1.msra.mxu0 %v1493
    %1619 = vmatprep.subr.mxu0 %v1496
    %1620 = vmatpush1.msra.mxu0 %v1495
    %1621 = vmatprep.subr.mxu0 %v1498
    %1622 = vmatpush1.msra.mxu0 %v1497
    %1623 = vmatprep.subr.mxu0 %v1500
    %1624 = vmatpush1.msra.mxu0 %v1499
    %1625 = vmatprep.subr.mxu0 %v1502
    %1626 = vmatpush1.msra.mxu0 %v1501
    %1627 = vmatprep.subr.mxu0 %v1504
    %1628 = vmatpush1.msra.mxu0 %v1503
    %1629 = vmatprep.subr.mxu0 %v1506
    %1630 = vmatpush1.msra.mxu0 %v1505
    %1631 = vmatprep.subr.mxu0 %v1508
    %1632 = vmatpush1.msra.mxu0 %v1507
    %1633 = vmatprep.subr.mxu0 0.0
    %1634 = vmatpush1.msra.mxu0 0.0
    %1635 = vmatprep.subr.mxu0 0.0
    %1636 = vmatpush1.msra.mxu0 0.0
    %1637 = vmatprep.subr.mxu0 0.0
    %1638 = vmatpush1.msra.mxu0 0.0
    %1639 = vmatprep.subr.mxu0 0.0
    %1640 = vmatpush1.msra.mxu0 0.0
    %1641 = vmatprep.subr.mxu0 0.0
    %1642 = vmatpush1.msra.mxu0 0.0
    %1643 = vmatprep.subr.mxu0 0.0
    %1644 = vmatpush1.msra.mxu0 0.0
    %1645 = vmatprep.subr.mxu0 0.0
    %1646 = vmatpush1.msra.mxu0 0.0
    %1647 = vmatprep.subr.mxu0 0.0
    %1648 = vmatpush1.msra.mxu0 0.0
    %1649 = vmatprep.subr.mxu0 0.0
    %1650 = vmatpush1.msra.mxu0 0.0
    %1651 = vmatprep.subr.mxu0 0.0
    %1652 = vmatpush1.msra.mxu0 0.0
    %1653 = vmatprep.subr.mxu0 0.0
    %1654 = vmatpush1.msra.mxu0 0.0
    %1655 = vmatprep.subr.mxu0 0.0
    %1656 = vmatpush1.msra.mxu0 0.0
    %1657 = vmatprep.subr.mxu0 0.0
    %1658 = vmatpush1.msra.mxu0 0.0
    %1659 = vmatprep.subr.mxu0 0.0
    %1660 = vmatpush1.msra.mxu0 0.0
    %1661 = vmatprep.subr.mxu0 0.0
    %1662 = vmatpush1.msra.mxu0 0.0
    %1663 = vmatprep.subr.mxu0 0.0
    %1664 = vmatpush1.msra.mxu0 0.0
    %1665 = vmatprep.subr.mxu0 0.0
    %1666 = vmatpush1.msra.mxu0 0.0
    %1667 = vmatprep.subr.mxu0 0.0
    %1668 = vmatpush1.msra.mxu0 0.0
    %1669 = vmatprep.subr.mxu0 0.0
    %1670 = vmatpush1.msra.mxu0 0.0
    %1671 = vmatprep.subr.mxu0 0.0
    %1672 = vmatpush1.msra.mxu0 0.0
    %1673 = vmatprep.subr.mxu0 0.0
    %1674 = vmatpush1.msra.mxu0 0.0
    %1675 = vmatprep.subr.mxu0 0.0
    %1676 = vmatpush1.msra.mxu0 0.0
    %1677 = vmatprep.subr.mxu0 0.0
    %1678 = vmatpush1.msra.mxu0 0.0
    %1679 = vmatprep.subr.mxu0 0.0
    %1680 = vmatpush1.msra.mxu0 0.0
    %1681 = vmatprep.mubr.f32.mxu0 0.0
    %1682 = vmatmul.mubr.f32.gmra.mrb[0].mxu0 %v1615
    %v1683 = vpop.f32.mrb[0].mxu0
    %v1684 = vadd.f32 0.0, %v1683
    %v1685 = vpop.f32.mrb[0].mxu0
    %v1686 = vadd.f32 0.0, %v1685
    %1687 = vdwg.mxu0
    %v1690 = vrot.slane %v1684, 4
    %v1691 = vrot.slane %v1686, 4
    %v1694 = vadd.f32 %v1515, %v1690
    %v1695 = vadd.f32 %v1516, %v1691
    %v1696 = vxor.u32 %v1694, 2147483648
    %v1697 = vmul.f32 %v1696, 1.442695
    %v1698 = vpow.pop %v1697
    %v1699 = vadd.f32 %v1698, 1.0
    %v1700 = vrcp.pop %v1699
    %v1701 = vmul.f32 1.0, %v1700
    %v1702 = vtanh.pop %v1695
    %v1703 = vxor.u32 %v1695, 2147483648
    %v1704 = vmul.f32 %v1703, 1.442695
    %v1705 = vpow.pop %v1704
    %v1706 = vadd.f32 %v1705, 1.0
    %v1707 = vrcp.pop %v1706
    %v1708 = vmul.f32 1.0, %v1707
    %v1710 = vrot.slane %v1609, 4
    %v1712 = vmul.f32 %v1701, %v1710
    %v1713 = vmul.f32 %v1701, %v1702
    %1715 = vrot.lane.b32.xlu0 %v1713, 64
    %v1716 = vpop.permute.xlu0 %1715
    %v1718 = vadd.f32 %v1712, %v1716
    %v1719 = vtanh.pop %v1718
    %v1720 = vmul.f32 %v1708, %v1719
    %v1723 = vrot.slane %v1483, 4
    %v1724 = vrot.slane %v1485, 4
    %v1727 = vadd.f32 %v1372, %v1723
    %v1728 = vadd.f32 %v1374, %v1724
    %v1730 = vrot.slane %v1720, 4
    %1731 = vrot.lane.b32.xlu0 %v1730, 64
    %v1732 = vpop.permute.xlu0 %1731
    %v1733 = vsel %vm347, %v1732, 0
    %1735 = vmatprep.subr.mxu0 %v1494
    %1736 = vmatpush1.msra.mxu0 %v1493
    %1737 = vmatprep.subr.mxu0 %v1496
    %1738 = vmatpush1.msra.mxu0 %v1495
    %1739 = vmatprep.subr.mxu0 %v1498
    %1740 = vmatpush1.msra.mxu0 %v1497
    %1741 = vmatprep.subr.mxu0 %v1500
    %1742 = vmatpush1.msra.mxu0 %v1499
    %1743 = vmatprep.subr.mxu0 %v1502
    %1744 = vmatpush1.msra.mxu0 %v1501
    %1745 = vmatprep.subr.mxu0 %v1504
    %1746 = vmatpush1.msra.mxu0 %v1503
    %1747 = vmatprep.subr.mxu0 %v1506
    %1748 = vmatpush1.msra.mxu0 %v1505
    %1749 = vmatprep.subr.mxu0 %v1508
    %1750 = vmatpush1.msra.mxu0 %v1507
    %1751 = vmatprep.subr.mxu0 0.0
    %1752 = vmatpush1.msra.mxu0 0.0
    %1753 = vmatprep.subr.mxu0 0.0
    %1754 = vmatpush1.msra.mxu0 0.0
    %1755 = vmatprep.subr.mxu0 0.0
    %1756 = vmatpush1.msra.mxu0 0.0
    %1757 = vmatprep.subr.mxu0 0.0
    %1758 = vmatpush1.msra.mxu0 0.0
    %1759 = vmatprep.subr.mxu0 0.0
    %1760 = vmatpush1.msra.mxu0 0.0
    %1761 = vmatprep.subr.mxu0 0.0
    %1762 = vmatpush1.msra.mxu0 0.0
    %1763 = vmatprep.subr.mxu0 0.0
    %1764 = vmatpush1.msra.mxu0 0.0
    %1765 = vmatprep.subr.mxu0 0.0
    %1766 = vmatpush1.msra.mxu0 0.0
    %1767 = vmatprep.subr.mxu0 0.0
    %1768 = vmatpush1.msra.mxu0 0.0
    %1769 = vmatprep.subr.mxu0 0.0
    %1770 = vmatpush1.msra.mxu0 0.0
    %1771 = vmatprep.subr.mxu0 0.0
    %1772 = vmatpush1.msra.mxu0 0.0
    %1773 = vmatprep.subr.mxu0 0.0
    %1774 = vmatpush1.msra.mxu0 0.0
    %1775 = vmatprep.subr.mxu0 0.0
    %1776 = vmatpush1.msra.mxu0 0.0
    %1777 = vmatprep.subr.mxu0 0.0
    %1778 = vmatpush1.msra.mxu0 0.0
    %1779 = vmatprep.subr.mxu0 0.0
    %1780 = vmatpush1.msra.mxu0 0.0
    %1781 = vmatprep.subr.mxu0 0.0
    %1782 = vmatpush1.msra.mxu0 0.0
    %1783 = vmatprep.subr.mxu0 0.0
    %1784 = vmatpush1.msra.mxu0 0.0
    %1785 = vmatprep.subr.mxu0 0.0
    %1786 = vmatpush1.msra.mxu0 0.0
    %1787 = vmatprep.subr.mxu0 0.0
    %1788 = vmatpush1.msra.mxu0 0.0
    %1789 = vmatprep.subr.mxu0 0.0
    %1790 = vmatpush1.msra.mxu0 0.0
    %1791 = vmatprep.subr.mxu0 0.0
    %1792 = vmatpush1.msra.mxu0 0.0
    %1793 = vmatprep.subr.mxu0 0.0
    %1794 = vmatpush1.msra.mxu0 0.0
    %1795 = vmatprep.subr.mxu0 0.0
    %1796 = vmatpush1.msra.mxu0 0.0
    %1797 = vmatprep.subr.mxu0 0.0
    %1798 = vmatpush1.msra.mxu0 0.0
    %1799 = vmatprep.mubr.f32.mxu0 0.0
    %1800 = vmatmul.mubr.f32.gmra.mrb[0].mxu0 %v1733
    %v1801 = vpop.f32.mrb[0].mxu0
    %v1802 = vadd.f32 0.0, %v1801
    %v1803 = vpop.f32.mrb[0].mxu0
    %v1804 = vadd.f32 0.0, %v1803
    %1805 = vdwg.mxu0
    %v1806 = vadd.f32 %v1727, %v1802
    %v1807 = vadd.f32 %v1728, %v1804
    %v1808 = vxor.u32 %v1806, 2147483648
    %v1809 = vmul.f32 %v1808, 1.442695
    %v1810 = vpow.pop %v1809
    %v1811 = vadd.f32 %v1810, 1.0
    %v1812 = vrcp.pop %v1811
    %v1813 = vmul.f32 1.0, %v1812
    %v1814 = vtanh.pop %v1807
    %v1815 = vxor.u32 %v1807, 2147483648
    %v1816 = vmul.f32 %v1815, 1.442695
    %v1817 = vpow.pop %v1816
    %v1818 = vadd.f32 %v1817, 1.0
    %v1819 = vrcp.pop %v1818
    %v1820 = vmul.f32 1.0, %v1819
    %v1822 = vrot.slane %v1718, 4
    %v1824 = vmul.f32 %v1813, %v1822
    %v1825 = vmul.f32 %v1813, %v1814
    %1827 = vrot.lane.b32.xlu0 %v1825, 64
    %v1828 = vpop.permute.xlu0 %1827
    %v1830 = vadd.f32 %v1824, %v1828
    %v1831 = vtanh.pop %v1830
    %v1832 = vmul.f32 %v1820, %v1831
    %1834 = vrot.lane.b32.xlu0 %v1832, 64
    %v1835 = vpop.permute.xlu0 %1834
    %v1836 = vsel %vm347, %v1835, 0
    %1838 = vmatprep.subr.mxu0 %v1494
    %1839 = vmatpush1.msra.mxu0 %v1493
    %1840 = vmatprep.subr.mxu0 %v1496
    %1841 = vmatpush1.msra.mxu0 %v1495
    %1842 = vmatprep.subr.mxu0 %v1498
    %1843 = vmatpush1.msra.mxu0 %v1497
    %1844 = vmatprep.subr.mxu0 %v1500
    %1845 = vmatpush1.msra.mxu0 %v1499
    %1846 = vmatprep.subr.mxu0 %v1502
    %1847 = vmatpush1.msra.mxu0 %v1501
    %1848 = vmatprep.subr.mxu0 %v1504
    %1849 = vmatpush1.msra.mxu0 %v1503
    %1850 = vmatprep.subr.mxu0 %v1506
    %1851 = vmatpush1.msra.mxu0 %v1505
    %1852 = vmatprep.subr.mxu0 %v1508
    %1853 = vmatpush1.msra.mxu0 %v1507
    %1854 = vmatprep.subr.mxu0 0.0
    %1855 = vmatpush1.msra.mxu0 0.0
    %1856 = vmatprep.subr.mxu0 0.0
    %1857 = vmatpush1.msra.mxu0 0.0
    %1858 = vmatprep.subr.mxu0 0.0
    %1859 = vmatpush1.msra.mxu0 0.0
    %1860 = vmatprep.subr.mxu0 0.0
    %1861 = vmatpush1.msra.mxu0 0.0
    %1862 = vmatprep.subr.mxu0 0.0
    %1863 = vmatpush1.msra.mxu0 0.0
    %1864 = vmatprep.subr.mxu0 0.0
    %1865 = vmatpush1.msra.mxu0 0.0
    %1866 = vmatprep.subr.mxu0 0.0
    %1867 = vmatpush1.msra.mxu0 0.0
    %1868 = vmatprep.subr.mxu0 0.0
    %1869 = vmatpush1.msra.mxu0 0.0
    %1870 = vmatprep.subr.mxu0 0.0
    %1871 = vmatpush1.msra.mxu0 0.0
    %1872 = vmatprep.subr.mxu0 0.0
    %1873 = vmatpush1.msra.mxu0 0.0
    %1874 = vmatprep.subr.mxu0 0.0
    %1875 = vmatpush1.msra.mxu0 0.0
    %1876 = vmatprep.subr.mxu0 0.0
    %1877 = vmatpush1.msra.mxu0 0.0
    %1878 = vmatprep.subr.mxu0 0.0
    %1879 = vmatpush1.msra.mxu0 0.0
    %1880 = vmatprep.subr.mxu0 0.0
    %1881 = vmatpush1.msra.mxu0 0.0
    %1882 = vmatprep.subr.mxu0 0.0
    %1883 = vmatpush1.msra.mxu0 0.0
    %1884 = vmatprep.subr.mxu0 0.0
    %1885 = vmatpush1.msra.mxu0 0.0
    %1886 = vmatprep.subr.mxu0 0.0
    %1887 = vmatpush1.msra.mxu0 0.0
    %1888 = vmatprep.subr.mxu0 0.0
    %1889 = vmatpush1.msra.mxu0 0.0
    %1890 = vmatprep.subr.mxu0 0.0
    %1891 = vmatpush1.msra.mxu0 0.0
    %1892 = vmatprep.subr.mxu0 0.0
    %1893 = vmatpush1.msra.mxu0 0.0
    %1894 = vmatprep.subr.mxu0 0.0
    %1895 = vmatpush1.msra.mxu0 0.0
    %1896 = vmatprep.subr.mxu0 0.0
    %1897 = vmatpush1.msra.mxu0 0.0
    %1898 = vmatprep.subr.mxu0 0.0
    %1899 = vmatpush1.msra.mxu0 0.0
    %1900 = vmatprep.subr.mxu0 0.0
    %1901 = vmatpush1.msra.mxu0 0.0
    %1902 = vmatprep.mubr.f32.mxu0 0.0
    %1903 = vmatmul.mubr.f32.gmra.mrb[0].mxu0 %v1836
    %v1904 = vpop.f32.mrb[0].mxu0
    %v1905 = vadd.f32 0.0, %v1904
    %v1906 = vpop.f32.mrb[0].mxu0
    %v1907 = vadd.f32 0.0, %v1906
    %1908 = vdwg.mxu0
    %v1911 = vrot.slane %v1905, 4
    %v1912 = vrot.slane %v1907, 4
    %v1915 = vadd.f32 %v1727, %v1911
    %v1916 = vadd.f32 %v1728, %v1912
    %v1917 = vxor.u32 %v1915, 2147483648
    %v1918 = vmul.f32 %v1917, 1.442695
    %v1919 = vpow.pop %v1918
    %v1920 = vadd.f32 %v1919, 1.0
    %v1921 = vrcp.pop %v1920
    %v1922 = vmul.f32 1.0, %v1921
    %v1923 = vtanh.pop %v1916
    %v1924 = vxor.u32 %v1916, 2147483648
    %v1925 = vmul.f32 %v1924, 1.442695
    %v1926 = vpow.pop %v1925
    %v1927 = vadd.f32 %v1926, 1.0
    %v1928 = vrcp.pop %v1927
    %v1929 = vmul.f32 1.0, %v1928
    %v1931 = vrot.slane %v1830, 4
    %v1933 = vmul.f32 %v1922, %v1931
    %v1934 = vmul.f32 %v1922, %v1923
    %1936 = vrot.lane.b32.xlu0 %v1934, 64
    %v1937 = vpop.permute.xlu0 %1936
    %v1939 = vadd.f32 %v1933, %v1937
    %v1940 = vtanh.pop %v1939
    %v1941 = vmul.f32 %v1929, %v1940
    %v1944 = vrot.slane %v1477, 4
    %v1945 = vrot.slane %v1479, 4
    %v1948 = vadd.f32 %v1378, %v1944
    %v1949 = vadd.f32 %v1380, %v1945
    %v1951 = vrot.slane %v1941, 4
    %1952 = vrot.lane.b32.xlu0 %v1951, 64
    %v1953 = vpop.permute.xlu0 %1952
    %v1954 = vsel %vm347, %v1953, 0
    %1956 = vmatprep.subr.mxu0 %v1494
    %1957 = vmatpush1.msra.mxu0 %v1493
    %1958 = vmatprep.subr.mxu0 %v1496
    %1959 = vmatpush1.msra.mxu0 %v1495
    %1960 = vmatprep.subr.mxu0 %v1498
    %1961 = vmatpush1.msra.mxu0 %v1497
    %1962 = vmatprep.subr.mxu0 %v1500
    %1963 = vmatpush1.msra.mxu0 %v1499
    %1964 = vmatprep.subr.mxu0 %v1502
    %1965 = vmatpush1.msra.mxu0 %v1501
    %1966 = vmatprep.subr.mxu0 %v1504
    %1967 = vmatpush1.msra.mxu0 %v1503
    %1968 = vmatprep.subr.mxu0 %v1506
    %1969 = vmatpush1.msra.mxu0 %v1505
    %1970 = vmatprep.subr.mxu0 %v1508
    %1971 = vmatpush1.msra.mxu0 %v1507
    %1972 = vmatprep.subr.mxu0 0.0
    %1973 = vmatpush1.msra.mxu0 0.0
    %1974 = vmatprep.subr.mxu0 0.0
    %1975 = vmatpush1.msra.mxu0 0.0
    %1976 = vmatprep.subr.mxu0 0.0
    %1977 = vmatpush1.msra.mxu0 0.0
    %1978 = vmatprep.subr.mxu0 0.0
    %1979 = vmatpush1.msra.mxu0 0.0
    %1980 = vmatprep.subr.mxu0 0.0
    %1981 = vmatpush1.msra.mxu0 0.0
    %1982 = vmatprep.subr.mxu0 0.0
    %1983 = vmatpush1.msra.mxu0 0.0
    %1984 = vmatprep.subr.mxu0 0.0
    %1985 = vmatpush1.msra.mxu0 0.0
    %1986 = vmatprep.subr.mxu0 0.0
    %1987 = vmatpush1.msra.mxu0 0.0
    %1988 = vmatprep.subr.mxu0 0.0
    %1989 = vmatpush1.msra.mxu0 0.0
    %1990 = vmatprep.subr.mxu0 0.0
    %1991 = vmatpush1.msra.mxu0 0.0
    %1992 = vmatprep.subr.mxu0 0.0
    %1993 = vmatpush1.msra.mxu0 0.0
    %1994 = vmatprep.subr.mxu0 0.0
    %1995 = vmatpush1.msra.mxu0 0.0
    %1996 = vmatprep.subr.mxu0 0.0
    %1997 = vmatpush1.msra.mxu0 0.0
    %1998 = vmatprep.subr.mxu0 0.0
    %1999 = vmatpush1.msra.mxu0 0.0
    %2000 = vmatprep.subr.mxu0 0.0
    %2001 = vmatpush1.msra.mxu0 0.0
    %2002 = vmatprep.subr.mxu0 0.0
    %2003 = vmatpush1.msra.mxu0 0.0
    %2004 = vmatprep.subr.mxu0 0.0
    %2005 = vmatpush1.msra.mxu0 0.0
    %2006 = vmatprep.subr.mxu0 0.0
    %2007 = vmatpush1.msra.mxu0 0.0
    %2008 = vmatprep.subr.mxu0 0.0
    %2009 = vmatpush1.msra.mxu0 0.0
    %2010 = vmatprep.subr.mxu0 0.0
    %2011 = vmatpush1.msra.mxu0 0.0
    %2012 = vmatprep.subr.mxu0 0.0
    %2013 = vmatpush1.msra.mxu0 0.0
    %2014 = vmatprep.subr.mxu0 0.0
    %2015 = vmatpush1.msra.mxu0 0.0
    %2016 = vmatprep.subr.mxu0 0.0
    %2017 = vmatpush1.msra.mxu0 0.0
    %2018 = vmatprep.subr.mxu0 0.0
    %2019 = vmatpush1.msra.mxu0 0.0
    %2020 = vmatprep.mubr.f32.mxu0 0.0
    %2021 = vmatmul.mubr.f32.gmra.mrb[0].mxu0 %v1954
    %v2022 = vpop.f32.mrb[0].mxu0
    %v2023 = vadd.f32 0.0, %v2022
    %v2024 = vpop.f32.mrb[0].mxu0
    %v2025 = vadd.f32 0.0, %v2024
    %2026 = vdwg.mxu0
    %v2027 = vadd.f32 %v1948, %v2023
    %v2028 = vadd.f32 %v1949, %v2025
    %v2029 = vxor.u32 %v2027, 2147483648
    %v2030 = vmul.f32 %v2029, 1.442695
    %v2031 = vpow.pop %v2030
    %v2032 = vadd.f32 %v2031, 1.0
    %v2033 = vrcp.pop %v2032
    %v2034 = vmul.f32 1.0, %v2033
    %v2035 = vtanh.pop %v2028
    %v2036 = vxor.u32 %v2028, 2147483648
    %v2037 = vmul.f32 %v2036, 1.442695
    %v2038 = vpow.pop %v2037
    %v2039 = vadd.f32 %v2038, 1.0
    %v2040 = vrcp.pop %v2039
    %v2041 = vmul.f32 1.0, %v2040
    %v2043 = vrot.slane %v1939, 4
    %v2045 = vmul.f32 %v2034, %v2043
    %v2046 = vmul.f32 %v2034, %v2035
    %2048 = vrot.lane.b32.xlu0 %v2046, 64
    %v2049 = vpop.permute.xlu0 %2048
    %v2051 = vadd.f32 %v2045, %v2049
    %v2052 = vtanh.pop %v2051
    %v2053 = vmul.f32 %v2041, %v2052
    %2055 = vrot.lane.b32.xlu0 %v2053, 64
    %v2056 = vpop.permute.xlu0 %2055
    %v2057 = vsel %vm347, %v2056, 0
    %2059 = vmatprep.subr.mxu0 %v1494
    %2060 = vmatpush1.msra.mxu0 %v1493
    %2061 = vmatprep.subr.mxu0 %v1496
    %2062 = vmatpush1.msra.mxu0 %v1495
    %2063 = vmatprep.subr.mxu0 %v1498
    %2064 = vmatpush1.msra.mxu0 %v1497
    %2065 = vmatprep.subr.mxu0 %v1500
    %2066 = vmatpush1.msra.mxu0 %v1499
    %2067 = vmatprep.subr.mxu0 %v1502
    %2068 = vmatpush1.msra.mxu0 %v1501
    %2069 = vmatprep.subr.mxu0 %v1504
    %2070 = vmatpush1.msra.mxu0 %v1503
    %2071 = vmatprep.subr.mxu0 %v1506
    %2072 = vmatpush1.msra.mxu0 %v1505
    %2073 = vmatprep.subr.mxu0 %v1508
    %2074 = vmatpush1.msra.mxu0 %v1507
    %2075 = vmatprep.subr.mxu0 0.0
    %2076 = vmatpush1.msra.mxu0 0.0
    %2077 = vmatprep.subr.mxu0 0.0
    %2078 = vmatpush1.msra.mxu0 0.0
    %2079 = vmatprep.subr.mxu0 0.0
    %2080 = vmatpush1.msra.mxu0 0.0
    %2081 = vmatprep.subr.mxu0 0.0
    %2082 = vmatpush1.msra.mxu0 0.0
    %2083 = vmatprep.subr.mxu0 0.0
    %2084 = vmatpush1.msra.mxu0 0.0
    %2085 = vmatprep.subr.mxu0 0.0
    %2086 = vmatpush1.msra.mxu0 0.0
    %2087 = vmatprep.subr.mxu0 0.0
    %2088 = vmatpush1.msra.mxu0 0.0
    %2089 = vmatprep.subr.mxu0 0.0
    %2090 = vmatpush1.msra.mxu0 0.0
    %2091 = vmatprep.subr.mxu0 0.0
    %2092 = vmatpush1.msra.mxu0 0.0
    %2093 = vmatprep.subr.mxu0 0.0
    %2094 = vmatpush1.msra.mxu0 0.0
    %2095 = vmatprep.subr.mxu0 0.0
    %2096 = vmatpush1.msra.mxu0 0.0
    %2097 = vmatprep.subr.mxu0 0.0
    %2098 = vmatpush1.msra.mxu0 0.0
    %2099 = vmatprep.subr.mxu0 0.0
    %2100 = vmatpush1.msra.mxu0 0.0
    %2101 = vmatprep.subr.mxu0 0.0
    %2102 = vmatpush1.msra.mxu0 0.0
    %2103 = vmatprep.subr.mxu0 0.0
    %2104 = vmatpush1.msra.mxu0 0.0
    %2105 = vmatprep.subr.mxu0 0.0
    %2106 = vmatpush1.msra.mxu0 0.0
    %2107 = vmatprep.subr.mxu0 0.0
    %2108 = vmatpush1.msra.mxu0 0.0
    %2109 = vmatprep.subr.mxu0 0.0
    %2110 = vmatpush1.msra.mxu0 0.0
    %2111 = vmatprep.subr.mxu0 0.0
    %2112 = vmatpush1.msra.mxu0 0.0
    %2113 = vmatprep.subr.mxu0 0.0
    %2114 = vmatpush1.msra.mxu0 0.0
    %2115 = vmatprep.subr.mxu0 0.0
    %2116 = vmatpush1.msra.mxu0 0.0
    %2117 = vmatprep.subr.mxu0 0.0
    %2118 = vmatpush1.msra.mxu0 0.0
    %2119 = vmatprep.subr.mxu0 0.0
    %2120 = vmatpush1.msra.mxu0 0.0
    %2121 = vmatprep.subr.mxu0 0.0
    %2122 = vmatpush1.msra.mxu0 0.0
    %2123 = vmatprep.mubr.f32.mxu0 0.0
    %2124 = vmatmul.mubr.f32.gmra.mrb[0].mxu0 %v2057
    %v2125 = vpop.f32.mrb[0].mxu0
    %v2126 = vadd.f32 0.0, %v2125
    %v2127 = vpop.f32.mrb[0].mxu0
    %v2128 = vadd.f32 0.0, %v2127
    %2129 = vdwg.mxu0
    %v2132 = vrot.slane %v2126, 4
    %v2133 = vrot.slane %v2128, 4
    %v2136 = vadd.f32 %v1948, %v2132
    %v2137 = vadd.f32 %v1949, %v2133
    %v2138 = vxor.u32 %v2136, 2147483648
    %v2139 = vmul.f32 %v2138, 1.442695
    %v2140 = vpow.pop %v2139
    %v2141 = vadd.f32 %v2140, 1.0
    %v2142 = vrcp.pop %v2141
    %v2143 = vmul.f32 1.0, %v2142
    %v2144 = vtanh.pop %v2137
    %v2145 = vxor.u32 %v2137, 2147483648
    %v2146 = vmul.f32 %v2145, 1.442695
    %v2147 = vpow.pop %v2146
    %v2148 = vadd.f32 %v2147, 1.0
    %v2149 = vrcp.pop %v2148
    %v2150 = vmul.f32 1.0, %v2149
    %v2152 = vrot.slane %v2051, 4
    %v2154 = vmul.f32 %v2143, %v2152
    %v2155 = vmul.f32 %v2143, %v2144
    %2157 = vrot.lane.b32.xlu0 %v2155, 64
    %v2158 = vpop.permute.xlu0 %2157
    %v2160 = vadd.f32 %v2154, %v2158
    %v2161 = vtanh.pop %v2160
    %v2162 = vmul.f32 %v2150, %v2161
    %v2165 = vrot.slane %v1471, 4
    %v2166 = vrot.slane %v1473, 4
    %v2169 = vadd.f32 %v1384, %v2165
    %v2170 = vadd.f32 %v1386, %v2166
    %v2172 = vrot.slane %v2162, 4
    %2173 = vrot.lane.b32.xlu0 %v2172, 64
    %v2174 = vpop.permute.xlu0 %2173
    %v2175 = vsel %vm347, %v2174, 0
    %2177 = vmatprep.subr.mxu0 %v1494
    %2178 = vmatpush1.msra.mxu0 %v1493
    %2179 = vmatprep.subr.mxu0 %v1496
    %2180 = vmatpush1.msra.mxu0 %v1495
    %2181 = vmatprep.subr.mxu0 %v1498
    %2182 = vmatpush1.msra.mxu0 %v1497
    %2183 = vmatprep.subr.mxu0 %v1500
    %2184 = vmatpush1.msra.mxu0 %v1499
    %2185 = vmatprep.subr.mxu0 %v1502
    %2186 = vmatpush1.msra.mxu0 %v1501
    %2187 = vmatprep.subr.mxu0 %v1504
    %2188 = vmatpush1.msra.mxu0 %v1503
    %2189 = vmatprep.subr.mxu0 %v1506
    %2190 = vmatpush1.msra.mxu0 %v1505
    %2191 = vmatprep.subr.mxu0 %v1508
    %2192 = vmatpush1.msra.mxu0 %v1507
    %2193 = vmatprep.subr.mxu0 0.0
    %2194 = vmatpush1.msra.mxu0 0.0
    %2195 = vmatprep.subr.mxu0 0.0
    %2196 = vmatpush1.msra.mxu0 0.0
    %2197 = vmatprep.subr.mxu0 0.0
    %2198 = vmatpush1.msra.mxu0 0.0
    %2199 = vmatprep.subr.mxu0 0.0
    %2200 = vmatpush1.msra.mxu0 0.0
    %2201 = vmatprep.subr.mxu0 0.0
    %2202 = vmatpush1.msra.mxu0 0.0
    %2203 = vmatprep.subr.mxu0 0.0
    %2204 = vmatpush1.msra.mxu0 0.0
    %2205 = vmatprep.subr.mxu0 0.0
    %2206 = vmatpush1.msra.mxu0 0.0
    %2207 = vmatprep.subr.mxu0 0.0
    %2208 = vmatpush1.msra.mxu0 0.0
    %2209 = vmatprep.subr.mxu0 0.0
    %2210 = vmatpush1.msra.mxu0 0.0
    %2211 = vmatprep.subr.mxu0 0.0
    %2212 = vmatpush1.msra.mxu0 0.0
    %2213 = vmatprep.subr.mxu0 0.0
    %2214 = vmatpush1.msra.mxu0 0.0
    %2215 = vmatprep.subr.mxu0 0.0
    %2216 = vmatpush1.msra.mxu0 0.0
    %2217 = vmatprep.subr.mxu0 0.0
    %2218 = vmatpush1.msra.mxu0 0.0
    %2219 = vmatprep.subr.mxu0 0.0
    %2220 = vmatpush1.msra.mxu0 0.0
    %2221 = vmatprep.subr.mxu0 0.0
    %2222 = vmatpush1.msra.mxu0 0.0
    %2223 = vmatprep.subr.mxu0 0.0
    %2224 = vmatpush1.msra.mxu0 0.0
    %2225 = vmatprep.subr.mxu0 0.0
    %2226 = vmatpush1.msra.mxu0 0.0
    %2227 = vmatprep.subr.mxu0 0.0
    %2228 = vmatpush1.msra.mxu0 0.0
    %2229 = vmatprep.subr.mxu0 0.0
    %2230 = vmatpush1.msra.mxu0 0.0
    %2231 = vmatprep.subr.mxu0 0.0
    %2232 = vmatpush1.msra.mxu0 0.0
    %2233 = vmatprep.subr.mxu0 0.0
    %2234 = vmatpush1.msra.mxu0 0.0
    %2235 = vmatprep.subr.mxu0 0.0
    %2236 = vmatpush1.msra.mxu0 0.0
    %2237 = vmatprep.subr.mxu0 0.0
    %2238 = vmatpush1.msra.mxu0 0.0
    %2239 = vmatprep.subr.mxu0 0.0
    %2240 = vmatpush1.msra.mxu0 0.0
    %2241 = vmatprep.mubr.f32.mxu0 0.0
    %2242 = vmatmul.mubr.f32.gmra.mrb[0].mxu0 %v2175
    %v2243 = vpop.f32.mrb[0].mxu0
    %v2244 = vadd.f32 0.0, %v2243
    %v2245 = vpop.f32.mrb[0].mxu0
    %v2246 = vadd.f32 0.0, %v2245
    %2247 = vdwg.mxu0
    %v2248 = vadd.f32 %v2169, %v2244
    %v2249 = vadd.f32 %v2170, %v2246
    %v2250 = vxor.u32 %v2248, 2147483648
    %v2251 = vmul.f32 %v2250, 1.442695
    %v2252 = vpow.pop %v2251
    %v2253 = vadd.f32 %v2252, 1.0
    %v2254 = vrcp.pop %v2253
    %v2255 = vmul.f32 1.0, %v2254
    %v2256 = vtanh.pop %v2249
    %v2257 = vxor.u32 %v2249, 2147483648
    %v2258 = vmul.f32 %v2257, 1.442695
    %v2259 = vpow.pop %v2258
    %v2260 = vadd.f32 %v2259, 1.0
    %v2261 = vrcp.pop %v2260
    %v2262 = vmul.f32 1.0, %v2261
    %v2264 = vrot.slane %v2160, 4
    %v2266 = vmul.f32 %v2255, %v2264
    %v2267 = vmul.f32 %v2255, %v2256
    %2269 = vrot.lane.b32.xlu0 %v2267, 64
    %v2270 = vpop.permute.xlu0 %2269
    %v2272 = vadd.f32 %v2266, %v2270
    %v2273 = vtanh.pop %v2272
    %v2274 = vmul.f32 %v2262, %v2273
    %2276 = vrot.lane.b32.xlu0 %v2274, 64
    %v2277 = vpop.permute.xlu0 %2276
    %v2278 = vsel %vm347, %v2277, 0
    %2280 = vmatprep.subr.mxu0 %v1494
    %2281 = vmatpush1.msra.mxu0 %v1493
    %2282 = vmatprep.subr.mxu0 %v1496
    %2283 = vmatpush1.msra.mxu0 %v1495
    %2284 = vmatprep.subr.mxu0 %v1498
    %2285 = vmatpush1.msra.mxu0 %v1497
    %2286 = vmatprep.subr.mxu0 %v1500
    %2287 = vmatpush1.msra.mxu0 %v1499
    %2288 = vmatprep.subr.mxu0 %v1502
    %2289 = vmatpush1.msra.mxu0 %v1501
    %2290 = vmatprep.subr.mxu0 %v1504
    %2291 = vmatpush1.msra.mxu0 %v1503
    %2292 = vmatprep.subr.mxu0 %v1506
    %2293 = vmatpush1.msra.mxu0 %v1505
    %2294 = vmatprep.subr.mxu0 %v1508
    %2295 = vmatpush1.msra.mxu0 %v1507
    %2296 = vmatprep.subr.mxu0 0.0
    %2297 = vmatpush1.msra.mxu0 0.0
    %2298 = vmatprep.subr.mxu0 0.0
    %2299 = vmatpush1.msra.mxu0 0.0
    %2300 = vmatprep.subr.mxu0 0.0
    %2301 = vmatpush1.msra.mxu0 0.0
    %2302 = vmatprep.subr.mxu0 0.0
    %2303 = vmatpush1.msra.mxu0 0.0
    %2304 = vmatprep.subr.mxu0 0.0
    %2305 = vmatpush1.msra.mxu0 0.0
    %2306 = vmatprep.subr.mxu0 0.0
    %2307 = vmatpush1.msra.mxu0 0.0
    %2308 = vmatprep.subr.mxu0 0.0
    %2309 = vmatpush1.msra.mxu0 0.0
    %2310 = vmatprep.subr.mxu0 0.0
    %2311 = vmatpush1.msra.mxu0 0.0
    %2312 = vmatprep.subr.mxu0 0.0
    %2313 = vmatpush1.msra.mxu0 0.0
    %2314 = vmatprep.subr.mxu0 0.0
    %2315 = vmatpush1.msra.mxu0 0.0
    %2316 = vmatprep.subr.mxu0 0.0
    %2317 = vmatpush1.msra.mxu0 0.0
    %2318 = vmatprep.subr.mxu0 0.0
    %2319 = vmatpush1.msra.mxu0 0.0
    %2320 = vmatprep.subr.mxu0 0.0
    %2321 = vmatpush1.msra.mxu0 0.0
    %2322 = vmatprep.subr.mxu0 0.0
    %2323 = vmatpush1.msra.mxu0 0.0
    %2324 = vmatprep.subr.mxu0 0.0
    %2325 = vmatpush1.msra.mxu0 0.0
    %2326 = vmatprep.subr.mxu0 0.0
    %2327 = vmatpush1.msra.mxu0 0.0
    %2328 = vmatprep.subr.mxu0 0.0
    %2329 = vmatpush1.msra.mxu0 0.0
    %2330 = vmatprep.subr.mxu0 0.0
    %2331 = vmatpush1.msra.mxu0 0.0
    %2332 = vmatprep.subr.mxu0 0.0
    %2333 = vmatpush1.msra.mxu0 0.0
    %2334 = vmatprep.subr.mxu0 0.0
    %2335 = vmatpush1.msra.mxu0 0.0
    %2336 = vmatprep.subr.mxu0 0.0
    %2337 = vmatpush1.msra.mxu0 0.0
    %2338 = vmatprep.subr.mxu0 0.0
    %2339 = vmatpush1.msra.mxu0 0.0
    %2340 = vmatprep.subr.mxu0 0.0
    %2341 = vmatpush1.msra.mxu0 0.0
    %2342 = vmatprep.subr.mxu0 0.0
    %2343 = vmatpush1.msra.mxu0 0.0
    %2344 = vmatprep.mubr.f32.mxu0 0.0
    %2345 = vmatmul.mubr.f32.gmra.mrb[0].mxu0 %v2278
    %v2346 = vpop.f32.mrb[0].mxu0
    %v2347 = vadd.f32 0.0, %v2346
    %v2348 = vpop.f32.mrb[0].mxu0
    %v2349 = vadd.f32 0.0, %v2348
    %2350 = vdwg.mxu0
    %v2353 = vrot.slane %v2347, 4
    %v2354 = vrot.slane %v2349, 4
    %v2357 = vadd.f32 %v2169, %v2353
    %v2358 = vadd.f32 %v2170, %v2354
    %v2359 = vxor.u32 %v2357, 2147483648
    %v2360 = vmul.f32 %v2359, 1.442695
    %v2361 = vpow.pop %v2360
    %v2362 = vadd.f32 %v2361, 1.0
    %v2363 = vrcp.pop %v2362
    %v2364 = vmul.f32 1.0, %v2363
    %v2365 = vtanh.pop %v2358
    %v2366 = vxor.u32 %v2358, 2147483648
    %v2367 = vmul.f32 %v2366, 1.442695
    %v2368 = vpow.pop %v2367
    %v2369 = vadd.f32 %v2368, 1.0
    %v2370 = vrcp.pop %v2369
    %v2371 = vmul.f32 1.0, %v2370
    %v2373 = vrot.slane %v2272, 4
    %v2375 = vmul.f32 %v2364, %v2373
    %v2376 = vmul.f32 %v2364, %v2365
    %2378 = vrot.lane.b32.xlu0 %v2376, 64
    %v2379 = vpop.permute.xlu0 %2378
    %v2381 = vadd.f32 %v2375, %v2379
    %v2382 = vtanh.pop %v2381
    %v2383 = vmul.f32 %v2371, %v2382
    %2385 = vrot.lane.b32.xlu0 %v2383, 64
    %v2386 = vpop.permute.xlu0 %2385
    %v2388 = vrot.slane %v1611, 4
    %2389 = vrot.lane.b32.xlu0 %v2388, 64
    %v2390 = vpop.permute.xlu0 %2389
    %vm2392 = vcmask 261120
    %v2393 = vsel %vm2392, %v2386, %v2390
    %v2394 = vld [vmem:[%s9] sm:$0xff]
    %v2395 = vld [vmem:[%s9 + $0x8] sm:$0xff]
    %v2396 = vld [vmem:[%s9 + $0x10] sm:$0xff]
    %v2397 = vld [vmem:[%s9 + $0x18] sm:$0xff]
    %v2398 = vld [vmem:[%s9 + $0x20] sm:$0xff]
    %v2399 = vld [vmem:[%s9 + $0x28] sm:$0xff]
    %v2400 = vld [vmem:[%s9 + $0x30] sm:$0xff]
    %v2401 = vld [vmem:[%s9 + $0x38] sm:$0xff]
    %v2402 = vld [vmem:[%s10] sm:$0x1]
    %v2404 = vlaneseq
    %v2405 = vshrl.u32 %v2404, 7
    %v2406 = vsub.s32 0, %v2405
    %v2407 = vrot.slane %v2402, %v2406
    %v2410 = vrot.slane %v2393, 4
    %v2411 = vsel %vm347, %v2410, 0
    %2413 = vmatprep.subr.mxu0 0.0
    %2414 = vmatpush1.msra.mxu0 %v2394
    %2415 = vmatprep.subr.mxu0 0.0
    %2416 = vmatpush1.msra.mxu0 %v2395
    %2417 = vmatprep.subr.mxu0 0.0
    %2418 = vmatpush1.msra.mxu0 %v2396
    %2419 = vmatprep.subr.mxu0 0.0
    %2420 = vmatpush1.msra.mxu0 %v2397
    %2421 = vmatprep.subr.mxu0 0.0
    %2422 = vmatpush1.msra.mxu0 %v2398
    %2423 = vmatprep.subr.mxu0 0.0
    %2424 = vmatpush1.msra.mxu0 %v2399
    %2425 = vmatprep.subr.mxu0 0.0
    %2426 = vmatpush1.msra.mxu0 %v2400
    %2427 = vmatprep.subr.mxu0 0.0
    %2428 = vmatpush1.msra.mxu0 %v2401
    %2429 = vmatprep.subr.mxu0 0.0
    %2430 = vmatpush1.msra.mxu0 0.0
    %2431 = vmatprep.subr.mxu0 0.0
    %2432 = vmatpush1.msra.mxu0 0.0
    %2433 = vmatprep.subr.mxu0 0.0
    %2434 = vmatpush1.msra.mxu0 0.0
    %2435 = vmatprep.subr.mxu0 0.0
    %2436 = vmatpush1.msra.mxu0 0.0
    %2437 = vmatprep.subr.mxu0 0.0
    %2438 = vmatpush1.msra.mxu0 0.0
    %2439 = vmatprep.subr.mxu0 0.0
    %2440 = vmatpush1.msra.mxu0 0.0
    %2441 = vmatprep.subr.mxu0 0.0
    %2442 = vmatpush1.msra.mxu0 0.0
    %2443 = vmatprep.subr.mxu0 0.0
    %2444 = vmatpush1.msra.mxu0 0.0
    %2445 = vmatprep.subr.mxu0 0.0
    %2446 = vmatpush1.msra.mxu0 0.0
    %2447 = vmatprep.subr.mxu0 0.0
    %2448 = vmatpush1.msra.mxu0 0.0
    %2449 = vmatprep.subr.mxu0 0.0
    %2450 = vmatpush1.msra.mxu0 0.0
    %2451 = vmatprep.subr.mxu0 0.0
    %2452 = vmatpush1.msra.mxu0 0.0
    %2453 = vmatprep.subr.mxu0 0.0
    %2454 = vmatpush1.msra.mxu0 0.0
    %2455 = vmatprep.subr.mxu0 0.0
    %2456 = vmatpush1.msra.mxu0 0.0
    %2457 = vmatprep.subr.mxu0 0.0
    %2458 = vmatpush1.msra.mxu0 0.0
    %2459 = vmatprep.subr.mxu0 0.0
    %2460 = vmatpush1.msra.mxu0 0.0
    %2461 = vmatprep.subr.mxu0 0.0
    %2462 = vmatpush1.msra.mxu0 0.0
    %2463 = vmatprep.subr.mxu0 0.0
    %2464 = vmatpush1.msra.mxu0 0.0
    %2465 = vmatprep.subr.mxu0 0.0
    %2466 = vmatpush1.msra.mxu0 0.0
    %2467 = vmatprep.subr.mxu0 0.0
    %2468 = vmatpush1.msra.mxu0 0.0
    %2469 = vmatprep.subr.mxu0 0.0
    %2470 = vmatpush1.msra.mxu0 0.0
    %2471 = vmatprep.subr.mxu0 0.0
    %2472 = vmatpush1.msra.mxu0 0.0
    %2473 = vmatprep.subr.mxu0 0.0
    %2474 = vmatpush1.msra.mxu0 0.0
    %2475 = vmatprep.subr.mxu0 0.0
    %2476 = vmatpush1.msra.mxu0 0.0
    %2477 = vmatprep.mubr.f32.mxu0 0.0
    %2478 = vmatmul.mubr.f32.gmra.mrb[0].mxu0 %v2411
    %v2479 = vpop.f32.mrb[0].mxu0
    %v2480 = vadd.f32 %v2407, %v2479
    %v2481 = vpop.f32.mrb[0].mxu0
    %2482 = vdwg.mxu0
    %v2483 = vmax.f32 %v2480, 0.0
    %v2484 = vld [vmem:[%s11] sm:$0xff]
    %v2485 = vld [vmem:[%s11 + $0x8] sm:$0xff]
    %v2486 = vld [vmem:[%s11 + $0x10] sm:$0xff]
    %v2487 = vld [vmem:[%s11 + $0x18] sm:$0xff]
    %v2488 = vld [vmem:[#allocation3] sm:$0x1]
    %v2490 = vlaneseq
    %v2491 = vshrl.u32 %v2490, 7
    %v2492 = vsub.s32 0, %v2491
    %v2493 = vrot.slane %v2488, %v2492
    %v2496 = vsel %vm2392, %v2483, 0
    %2498 = vmatprep.subr.mxu0 0.0
    %2499 = vmatpush1.msra.mxu0 %v2484
    %2500 = vmatprep.subr.mxu0 0.0
    %2501 = vmatpush1.msra.mxu0 %v2485
    %2502 = vmatprep.subr.mxu0 0.0
    %2503 = vmatpush1.msra.mxu0 %v2486
    %2504 = vmatprep.subr.mxu0 0.0
    %2505 = vmatpush1.msra.mxu0 %v2487
    %2506 = vmatprep.subr.mxu0 0.0
    %2507 = vmatpush1.msra.mxu0 0.0
    %2508 = vmatprep.subr.mxu0 0.0
    %2509 = vmatpush1.msra.mxu0 0.0
    %2510 = vmatprep.subr.mxu0 0.0
    %2511 = vmatpush1.msra.mxu0 0.0
    %2512 = vmatprep.subr.mxu0 0.0
    %2513 = vmatpush1.msra.mxu0 0.0
    %2514 = vmatprep.subr.mxu0 0.0
    %2515 = vmatpush1.msra.mxu0 0.0
    %2516 = vmatprep.subr.mxu0 0.0
    %2517 = vmatpush1.msra.mxu0 0.0
    %2518 = vmatprep.subr.mxu0 0.0
    %2519 = vmatpush1.msra.mxu0 0.0
    %2520 = vmatprep.subr.mxu0 0.0
    %2521 = vmatpush1.msra.mxu0 0.0
    %2522 = vmatprep.subr.mxu0 0.0
    %2523 = vmatpush1.msra.mxu0 0.0
    %2524 = vmatprep.subr.mxu0 0.0
    %2525 = vmatpush1.msra.mxu0 0.0
    %2526 = vmatprep.subr.mxu0 0.0
    %2527 = vmatpush1.msra.mxu0 0.0
    %2528 = vmatprep.subr.mxu0 0.0
    %2529 = vmatpush1.msra.mxu0 0.0
    %2530 = vmatprep.subr.mxu0 0.0
    %2531 = vmatpush1.msra.mxu0 0.0
    %2532 = vmatprep.subr.mxu0 0.0
    %2533 = vmatpush1.msra.mxu0 0.0
    %2534 = vmatprep.subr.mxu0 0.0
    %2535 = vmatpush1.msra.mxu0 0.0
    %2536 = vmatprep.subr.mxu0 0.0
    %2537 = vmatpush1.msra.mxu0 0.0
    %2538 = vmatprep.subr.mxu0 0.0
    %2539 = vmatpush1.msra.mxu0 0.0
    %2540 = vmatprep.subr.mxu0 0.0
    %2541 = vmatpush1.msra.mxu0 0.0
    %2542 = vmatprep.subr.mxu0 0.0
    %2543 = vmatpush1.msra.mxu0 0.0
    %2544 = vmatprep.subr.mxu0 0.0
    %2545 = vmatpush1.msra.mxu0 0.0
    %2546 = vmatprep.subr.mxu0 0.0
    %2547 = vmatpush1.msra.mxu0 0.0
    %2548 = vmatprep.subr.mxu0 0.0
    %2549 = vmatpush1.msra.mxu0 0.0
    %2550 = vmatprep.subr.mxu0 0.0
    %2551 = vmatpush1.msra.mxu0 0.0
    %2552 = vmatprep.subr.mxu0 0.0
    %2553 = vmatpush1.msra.mxu0 0.0
    %2554 = vmatprep.subr.mxu0 0.0
    %2555 = vmatpush1.msra.mxu0 0.0
    %2556 = vmatprep.subr.mxu0 0.0
    %2557 = vmatpush1.msra.mxu0 0.0
    %2558 = vmatprep.subr.mxu0 0.0
    %2559 = vmatpush1.msra.mxu0 0.0
    %2560 = vmatprep.subr.mxu0 0.0
    %2561 = vmatpush1.msra.mxu0 0.0
    %2562 = vmatprep.mubr.f32.mxu0 0.0
    %2563 = vmatmul.mubr.f32.gmra.mrb[0].mxu0 %v2496
    %v2564 = vpop.f32.mrb[0].mxu0
    %v2565 = vadd.f32 %v2493, %v2564
    %v2566 = vpop.f32.mrb[0].mxu0
    %2567 = vdwg.mxu0
    %vm2568 = vcmask 3072
    %2569 = vst.msk [vmem:[%s13] sm:$0xf] %vm2568, %v2565
    // Predicated region
    $region74: #{lstm_module_forward_pallas.1} parent=1 // pred_check
      _
    $region75: #{lstm_module_forward_pallas.1} parent=1 // pred_check_branch
      %2571 = sbr.rel (0) target = $region77
    $region76: #{lstm_module_forward_pallas.1} parent=1 // pred_region
      _
    $region77: #{lstm_module_forward_pallas.1} parent=1 // pred_fallthru
      _
    // Predicated region
    $region78: #{lstm_module_forward_pallas.1} parent=1 // pred_check
      _
    $region79: #{lstm_module_forward_pallas.1} parent=1 // pred_check_branch
      %2573 = sbr.rel (0) target = $region81
    $region80: #{lstm_module_forward_pallas.1} parent=1 // pred_region
      _
    $region81: #{lstm_module_forward_pallas.1} parent=1 // pred_fallthru
      _
    %2574 = vsyncpa [#allocation5], 1
    %2575 = vsyncpa [#allocation7], 1
    %2576 = vsyncpa [#allocation10], 1

</llo_original>
